<compile_context>
chip_gen: v7x
topology: tpu7x:2x2x1
jax: 0.10.0
libtpu: 0.0.40
codegen_flags: <defaults>
</compile_context>

<pallas_src>
import numpy as np
import jax
import jax.numpy as jnp
from jax.experimental import pallas as pl
from jax.experimental.pallas import tpu as pltpu

# ---------------- config (matches the module's config fields) ----------------
X_DIM = 32
LATENT_DIM = 8
QUANTIZE_ALPHABET = 4      # num_centers; truthy -> quantizer path is taken
NOISE_ENCODER = False      # deterministic forward (no uniform noise added)
BATCH = 128                # batch mapped onto a full 128-wide tile axis
BLOCK_B = 128              # rows per grid step (= one BatchNorm minibatch)

BN_EPS = 1e-5
LEAKY_SLOPE = 0.01
N_ENC_LAYERS = 5
N_DEC_LAYERS = 5
N_LAYERS = N_ENC_LAYERS + N_DEC_LAYERS
PARAMS_PER_LAYER = 4       # W, b, gamma, beta (bias is dropped at pack time)
PAD = 128                  # uniform padded feature width
VEC_ROWS = 8               # sublane-aligned rows in the vector slab (gamma, beta, pad...)
Q_STEP = 2.0 / (QUANTIZE_ALPHABET - 1)   # spacing of linspace(-1, 1, C)


# ---------------- layer-dim derivation (mirrors build_ff intent) ----------------
def _encoder_layer_dims(x_dim, latent_dim):
    dims = np.linspace(x_dim, latent_dim, 4, dtype="int64").tolist()
    layer_dims, d = [], x_dim
    for dim in dims:
        layer_dims.append((d, int(dim)))
        d = int(dim)
    layer_dims.append((d, latent_dim))            # final Linear -> latent_dim, Tanh
    return layer_dims


def _decoder_layer_dims(latent_dim, x_dim):
    dims = np.linspace(latent_dim, x_dim, 4, dtype="int64").tolist()
    layer_dims, d = [], latent_dim
    for dim in dims:
        layer_dims.append((d, int(dim)))
        d = int(dim)
    layer_dims.append((d, x_dim))                 # final Linear -> x_dim, Tanh
    return layer_dims


# ---------------- Pallas kernel: whole forward ----------------
def _mlp_block(h, w_ref, v_ref, base, n_layers):
    """Linear -> BatchNorm1d(train) -> LeakyReLU (Tanh on the last layer).

    h: (BLOCK_B, 128) f32. Weights are a (N_LAYERS, 128, 128) zero-padded bf16
    slab; per-layer vectors live in a (N_LAYERS, 8, 128) f32 slab
    (row 0 = gamma, row 1 = beta).  Padded columns have W=0, gamma=0, beta=0,
    so padded features stay exactly 0 through Linear + BN + activation.
    """
    for i in range(n_layers):
        l = base + i
        W = w_ref[l]                     # (128, 128) bf16, zero-padded
        vec = v_ref[l]                   # (8, 128) f32
        g = vec[0:1, :]
        be = vec[1:2, :]
        # Linear (bias omitted: exactly cancelled by the BN mean subtraction).
        h = jnp.dot(h.astype(jnp.bfloat16), W, preferred_element_type=jnp.float32)
        # One-pass BatchNorm1d (training mode, biased variance) with folded affine.
        s1 = jnp.mean(h, axis=0, keepdims=True)
        s2 = jnp.mean(h * h, axis=0, keepdims=True)
        scale = g * jax.lax.rsqrt(s2 - s1 * s1 + BN_EPS)
        shift = be - s1 * scale
        h = h * scale + shift
        if i < n_layers - 1:
            h = jnp.maximum(h, LEAKY_SLOPE * h)                      # LeakyReLU
        else:
            h = jnp.tanh(h)                                          # Tanh
    return h


def _hard_quantize(z):
    """Nearest center of linspace(-1, 1, C) == forward value of
    softout + hard.detach() - soft.detach().  Closed form for uniform centers;
    floor(x + 0.5) == round-to-nearest (ties-up; exact ties are measure-zero)."""
    idx = jnp.floor((z + 1.0) * (1.0 / Q_STEP) + 0.5)
    return idx * Q_STEP - 1.0


def vae_kernel(x_ref, w_ref, v_ref, o_ref):
    h = x_ref[...]                                        # (BLOCK_B, 128) padded input
    z = _mlp_block(h, w_ref, v_ref, 0, N_ENC_LAYERS)      # encoder, z in (-1, 1)
    q = _hard_quantize(z)                                 # Quantizer forward value
    # Padded latent lanes (>= LATENT_DIM) quantize to a nonzero center; zero
    # them explicitly so correctness never depends on zero-padded decoder rows.
    lane = jax.lax.broadcasted_iota(jnp.int32, (1, PAD), 1)
    q = jnp.where(lane < LATENT_DIM, q, 0.0)
    # TODO(synk): config.noise_encoder adds host-sampled uniform noise; disabled
    # here (NOISE_ENCODER=False) to keep the kernel deterministic.
    y = _mlp_block(q, w_ref, v_ref, N_ENC_LAYERS, N_DEC_LAYERS)   # decoder
    o_ref[...] = y.astype(o_ref.dtype)


def vae_forward(x, w_slab, v_slab):
    B = x.shape[0]
    assert B % BLOCK_B == 0, "batch must be a multiple of the 128-row BN minibatch"
    x_pad = jnp.pad(x, ((0, 0), (0, PAD - X_DIM)))        # (B, 128), lane-dense
    out = pl.pallas_call(
        vae_kernel,
        out_shape=jax.ShapeDtypeStruct((B, PAD), jnp.float32),
        grid=(B // BLOCK_B,),
        in_specs=[
            pl.BlockSpec((BLOCK_B, PAD), lambda i: (i, 0)),
            pl.BlockSpec((N_LAYERS, PAD, PAD), lambda i: (0, 0, 0)),      # resident
            pl.BlockSpec((N_LAYERS, VEC_ROWS, PAD), lambda i: (0, 0, 0)),  # resident
        ],
        out_specs=pl.BlockSpec((BLOCK_B, PAD), lambda i: (i, 0)),
        compiler_params=pltpu.CompilerParams(dimension_semantics=("parallel",)),
    )(x_pad, w_slab, v_slab)
    return out[:, :X_DIM]


# ---------------- host-side parameter packing ----------------
def _pack_params(enc_params, dec_params):
    layers = []
    for params in (enc_params, dec_params):
        for i in range(len(params) // PARAMS_PER_LAYER):
            layers.append(tuple(params[PARAMS_PER_LAYER * i: PARAMS_PER_LAYER * (i + 1)]))
    assert len(layers) == N_LAYERS
    w_slab = np.zeros((N_LAYERS, PAD, PAD), np.float32)
    v_slab = np.zeros((N_LAYERS, VEC_ROWS, PAD), np.float32)
    for l, (W, _b, g, be) in enumerate(layers):               # bias dropped (BN-cancelled)
        din, dout = W.shape
        w_slab[l, :din, :dout] = np.asarray(W)
        v_slab[l, 0, :dout] = np.asarray(g).reshape(-1)       # padded gamma stays 0
        v_slab[l, 1, :dout] = np.asarray(be).reshape(-1)      # padded beta stays 0
    return jnp.asarray(w_slab, dtype=jnp.bfloat16), jnp.asarray(v_slab)


# ---------------- plain-JAX reference (sanity check only) ----------------
# Matmuls use the same bf16 operands / f32 accumulation as the kernel (the
# f32->bf16 weight change is the review-approved trade-off), so the comparison
# validates the kernel's BN / activation / quantizer / packing logic rather
# than measuring f32-vs-bf16 drift.
def _mlp_ref(h, params, n_layers):
    for i in range(n_layers):
        W, b, g, be = params[4 * i: 4 * i + 4]
        h = jnp.dot(h.astype(jnp.bfloat16), W.astype(jnp.bfloat16),
                    preferred_element_type=jnp.float32) + b
        mu = jnp.mean(h, axis=0, keepdims=True)
        var = jnp.mean((h - mu) ** 2, axis=0, keepdims=True)   # biased var (train mode)
        h = (h - mu) / jnp.sqrt(var + BN_EPS) * g + be
        h = jnp.where(h > 0, h, LEAKY_SLOPE * h) if i < n_layers - 1 else jnp.tanh(h)
    return h


def vae_ref(x, enc_params, dec_params):
    z = _mlp_ref(x, enc_params, N_ENC_LAYERS)
    c = jnp.linspace(-1.0, 1.0, QUANTIZE_ALPHABET, dtype=jnp.float32).reshape(1, 1, -1)
    dist = (z[:, :, None] - c) ** 2
    phi_soft = jax.nn.softmax(-(2.0 / QUANTIZE_ALPHABET) * dist, axis=-1)
    phi_hard = jax.nn.softmax(-1.0e7 * dist, axis=-1)
    softout = jnp.sum(phi_soft * c, axis=-1)
    hardout = jnp.sum(phi_hard * c, axis=-1)
    q = softout + hardout - softout     # forward value == hardout
    return _mlp_ref(q, dec_params, N_DEC_LAYERS)


# ---------------- deterministic parameter init ----------------
def _init_mlp(key, layer_dims):
    params = []
    for din, dout in layer_dims:
        key, k1, k2 = jax.random.split(key, 3)
        bound = 1.0 / np.sqrt(din)
        W = jax.random.uniform(k1, (din, dout), jnp.float32, -bound, bound)
        b = jax.random.uniform(k2, (1, dout), jnp.float32, -bound, bound)
        g = jnp.ones((1, dout), jnp.float32)     # BatchNorm1d weight init
        be = jnp.zeros((1, dout), jnp.float32)   # BatchNorm1d bias init
        params += [W, b, g, be]
    return key, params


if __name__ == "__main__":
    key = jax.random.PRNGKey(0)
    key, enc_params = _init_mlp(key, _encoder_layer_dims(X_DIM, LATENT_DIM))
    key, dec_params = _init_mlp(key, _decoder_layer_dims(LATENT_DIM, X_DIM))
    w_slab, v_slab = _pack_params(enc_params, dec_params)

    key, kx = jax.random.split(key)
    x = jax.random.normal(kx, (BATCH, X_DIM), dtype=jnp.float32)

    y = vae_forward(x, w_slab, v_slab)
    y = jax.block_until_ready(y)

    y_ref = vae_ref(x, enc_params, dec_params)
    np.testing.assert_allclose(np.asarray(y), np.asarray(y_ref), rtol=1e-2, atol=1e-2)

    print("KERNEL_OK")
</pallas_src>

<mosaic_0001>
module attributes {stable_mosaic.version = 11 : i64} {
  func.func @vae_kernel(%arg0: i32, %arg1: memref<128x128xf32, #tpu.memory_space<vmem>>, %arg2: memref<10x128x128xbf16, #tpu.memory_space<vmem>>, %arg3: memref<10x8x128xf32, #tpu.memory_space<vmem>>, %arg4: memref<128x128xf32, #tpu.memory_space<vmem>>) attributes {dimension_semantics = [#tpu.dimension_semantics<parallel>], iteration_bounds = array<i64: 1>, scalar_prefetch = 0 : i64, scratch_operands = 0 : i64, tpu.core_type = #tpu.core_type<tc>, window_params = [{transform_indices = @transform_0, window_bounds = array<i64: 128, 128>}, {pipeline_mode = #tpu.pipeline_mode<synchronous>, transform_indices = @transform_1, window_bounds = array<i64: 10, 128, 128>}, {pipeline_mode = #tpu.pipeline_mode<synchronous>, transform_indices = @transform_2, window_bounds = array<i64: 10, 8, 128>}, {transform_indices = @transform_3, window_bounds = array<i64: 128, 128>}]} {
    %c0 = arith.constant 0 : index
    %c0_0 = arith.constant 0 : index
    %0 = vector.load %arg1[%c0, %c0_0] : memref<128x128xf32, #tpu.memory_space<vmem>>, vector<128x128xf32>
    %c0_1 = arith.constant 0 : index
    %c0_2 = arith.constant 0 : index
    %c0_3 = arith.constant 0 : index
    %1 = vector.load %arg2[%c0_1, %c0_2, %c0_3] : memref<10x128x128xbf16, #tpu.memory_space<vmem>>, vector<1x128x128xbf16>
    %2 = vector.shape_cast %1 : vector<1x128x128xbf16> to vector<128x128xbf16>
    %c0_4 = arith.constant 0 : index
    %c0_5 = arith.constant 0 : index
    %c0_6 = arith.constant 0 : index
    %3 = vector.load %arg3[%c0_4, %c0_5, %c0_6] : memref<10x8x128xf32, #tpu.memory_space<vmem>>, vector<1x8x128xf32>
    %4 = vector.shape_cast %3 : vector<1x8x128xf32> to vector<8x128xf32>
    %5 = vector.extract_strided_slice %4 {offsets = [0, 0], sizes = [1, 128], strides = [1, 1]} : vector<8x128xf32> to vector<1x128xf32>
    %6 = vector.extract_strided_slice %4 {offsets = [1, 0], sizes = [1, 128], strides = [1, 1]} : vector<8x128xf32> to vector<1x128xf32>
    %7 = arith.truncf %0 : vector<128x128xf32> to vector<128x128xbf16>
    %cst = arith.constant dense<0.000000e+00> : vector<128x128xf32>
    %8 = tpu.matmul %7, %2, %cst {dimension_numbers = #tpu.dot_dimension_numbers<[1], [0], [0], [1], [0, 0, 1, 1], [], []>} : vector<128x128xbf16>, vector<128x128xbf16>, vector<128x128xf32> -> vector<128x128xf32>
    %cst_7 = arith.constant dense<0.000000e+00> : vector<128xf32>
    %9 = vector.multi_reduction <add>, %8, %cst_7 [0] : vector<128x128xf32> to vector<128xf32>
    %10 = vector.shape_cast %9 : vector<128xf32> to vector<1x128xf32>
    %cst_8 = arith.constant 1.280000e+02 : f32
    %11 = vector.broadcast %cst_8 : f32 to vector<1x128xf32>
    %12 = arith.divf %10, %11 : vector<1x128xf32>
    %13 = arith.mulf %8, %8 : vector<128x128xf32>
    %cst_9 = arith.constant dense<0.000000e+00> : vector<128xf32>
    %14 = vector.multi_reduction <add>, %13, %cst_9 [0] : vector<128x128xf32> to vector<128xf32>
    %15 = vector.shape_cast %14 : vector<128xf32> to vector<1x128xf32>
    %cst_10 = arith.constant 1.280000e+02 : f32
    %16 = vector.broadcast %cst_10 : f32 to vector<1x128xf32>
    %17 = arith.divf %15, %16 : vector<1x128xf32>
    %18 = arith.mulf %12, %12 : vector<1x128xf32>
    %19 = arith.subf %17, %18 : vector<1x128xf32>
    %cst_11 = arith.constant 9.99999974E-6 : f32
    %20 = vector.broadcast %cst_11 : f32 to vector<1x128xf32>
    %21 = arith.addf %19, %20 : vector<1x128xf32>
    %22 = math.rsqrt %21 : vector<1x128xf32>
    %23 = arith.mulf %5, %22 : vector<1x128xf32>
    %24 = arith.mulf %12, %23 : vector<1x128xf32>
    %25 = arith.subf %6, %24 : vector<1x128xf32>
    %26 = vector.broadcast %23 : vector<1x128xf32> to vector<128x128xf32>
    %27 = arith.mulf %8, %26 : vector<128x128xf32>
    %28 = vector.broadcast %25 : vector<1x128xf32> to vector<128x128xf32>
    %29 = arith.addf %27, %28 : vector<128x128xf32>
    %cst_12 = arith.constant 0.00999999977 : f32
    %30 = vector.broadcast %cst_12 : f32 to vector<128x128xf32>
    %31 = arith.mulf %30, %29 : vector<128x128xf32>
    %32 = arith.maximumf %29, %31 : vector<128x128xf32>
    %c1 = arith.constant 1 : index
    %c0_13 = arith.constant 0 : index
    %c0_14 = arith.constant 0 : index
    %33 = vector.load %arg2[%c1, %c0_13, %c0_14] : memref<10x128x128xbf16, #tpu.memory_space<vmem>>, vector<1x128x128xbf16>
    %34 = vector.shape_cast %33 : vector<1x128x128xbf16> to vector<128x128xbf16>
    %c1_15 = arith.constant 1 : index
    %c0_16 = arith.constant 0 : index
    %c0_17 = arith.constant 0 : index
    %35 = vector.load %arg3[%c1_15, %c0_16, %c0_17] : memref<10x8x128xf32, #tpu.memory_space<vmem>>, vector<1x8x128xf32>
    %36 = vector.shape_cast %35 : vector<1x8x128xf32> to vector<8x128xf32>
    %37 = vector.extract_strided_slice %36 {offsets = [0, 0], sizes = [1, 128], strides = [1, 1]} : vector<8x128xf32> to vector<1x128xf32>
    %38 = vector.extract_strided_slice %36 {offsets = [1, 0], sizes = [1, 128], strides = [1, 1]} : vector<8x128xf32> to vector<1x128xf32>
    %39 = arith.truncf %32 : vector<128x128xf32> to vector<128x128xbf16>
    %cst_18 = arith.constant dense<0.000000e+00> : vector<128x128xf32>
    %40 = tpu.matmul %39, %34, %cst_18 {dimension_numbers = #tpu.dot_dimension_numbers<[1], [0], [0], [1], [0, 0, 1, 1], [], []>} : vector<128x128xbf16>, vector<128x128xbf16>, vector<128x128xf32> -> vector<128x128xf32>
    %cst_19 = arith.constant dense<0.000000e+00> : vector<128xf32>
    %41 = vector.multi_reduction <add>, %40, %cst_19 [0] : vector<128x128xf32> to vector<128xf32>
    %42 = vector.shape_cast %41 : vector<128xf32> to vector<1x128xf32>
    %cst_20 = arith.constant 1.280000e+02 : f32
    %43 = vector.broadcast %cst_20 : f32 to vector<1x128xf32>
    %44 = arith.divf %42, %43 : vector<1x128xf32>
    %45 = arith.mulf %40, %40 : vector<128x128xf32>
    %cst_21 = arith.constant dense<0.000000e+00> : vector<128xf32>
    %46 = vector.multi_reduction <add>, %45, %cst_21 [0] : vector<128x128xf32> to vector<128xf32>
    %47 = vector.shape_cast %46 : vector<128xf32> to vector<1x128xf32>
    %cst_22 = arith.constant 1.280000e+02 : f32
    %48 = vector.broadcast %cst_22 : f32 to vector<1x128xf32>
    %49 = arith.divf %47, %48 : vector<1x128xf32>
    %50 = arith.mulf %44, %44 : vector<1x128xf32>
    %51 = arith.subf %49, %50 : vector<1x128xf32>
    %cst_23 = arith.constant 9.99999974E-6 : f32
    %52 = vector.broadcast %cst_23 : f32 to vector<1x128xf32>
    %53 = arith.addf %51, %52 : vector<1x128xf32>
    %54 = math.rsqrt %53 : vector<1x128xf32>
    %55 = arith.mulf %37, %54 : vector<1x128xf32>
    %56 = arith.mulf %44, %55 : vector<1x128xf32>
    %57 = arith.subf %38, %56 : vector<1x128xf32>
    %58 = vector.broadcast %55 : vector<1x128xf32> to vector<128x128xf32>
    %59 = arith.mulf %40, %58 : vector<128x128xf32>
    %60 = vector.broadcast %57 : vector<1x128xf32> to vector<128x128xf32>
    %61 = arith.addf %59, %60 : vector<128x128xf32>
    %cst_24 = arith.constant 0.00999999977 : f32
    %62 = vector.broadcast %cst_24 : f32 to vector<128x128xf32>
    %63 = arith.mulf %62, %61 : vector<128x128xf32>
    %64 = arith.maximumf %61, %63 : vector<128x128xf32>
    %c2 = arith.constant 2 : index
    %c0_25 = arith.constant 0 : index
    %c0_26 = arith.constant 0 : index
    %65 = vector.load %arg2[%c2, %c0_25, %c0_26] : memref<10x128x128xbf16, #tpu.memory_space<vmem>>, vector<1x128x128xbf16>
    %66 = vector.shape_cast %65 : vector<1x128x128xbf16> to vector<128x128xbf16>
    %c2_27 = arith.constant 2 : index
    %c0_28 = arith.constant 0 : index
    %c0_29 = arith.constant 0 : index
    %67 = vector.load %arg3[%c2_27, %c0_28, %c0_29] : memref<10x8x128xf32, #tpu.memory_space<vmem>>, vector<1x8x128xf32>
    %68 = vector.shape_cast %67 : vector<1x8x128xf32> to vector<8x128xf32>
    %69 = vector.extract_strided_slice %68 {offsets = [0, 0], sizes = [1, 128], strides = [1, 1]} : vector<8x128xf32> to vector<1x128xf32>
    %70 = vector.extract_strided_slice %68 {offsets = [1, 0], sizes = [1, 128], strides = [1, 1]} : vector<8x128xf32> to vector<1x128xf32>
    %71 = arith.truncf %64 : vector<128x128xf32> to vector<128x128xbf16>
    %cst_30 = arith.constant dense<0.000000e+00> : vector<128x128xf32>
    %72 = tpu.matmul %71, %66, %cst_30 {dimension_numbers = #tpu.dot_dimension_numbers<[1], [0], [0], [1], [0, 0, 1, 1], [], []>} : vector<128x128xbf16>, vector<128x128xbf16>, vector<128x128xf32> -> vector<128x128xf32>
    %cst_31 = arith.constant dense<0.000000e+00> : vector<128xf32>
    %73 = vector.multi_reduction <add>, %72, %cst_31 [0] : vector<128x128xf32> to vector<128xf32>
    %74 = vector.shape_cast %73 : vector<128xf32> to vector<1x128xf32>
    %cst_32 = arith.constant 1.280000e+02 : f32
    %75 = vector.broadcast %cst_32 : f32 to vector<1x128xf32>
    %76 = arith.divf %74, %75 : vector<1x128xf32>
    %77 = arith.mulf %72, %72 : vector<128x128xf32>
    %cst_33 = arith.constant dense<0.000000e+00> : vector<128xf32>
    %78 = vector.multi_reduction <add>, %77, %cst_33 [0] : vector<128x128xf32> to vector<128xf32>
    %79 = vector.shape_cast %78 : vector<128xf32> to vector<1x128xf32>
    %cst_34 = arith.constant 1.280000e+02 : f32
    %80 = vector.broadcast %cst_34 : f32 to vector<1x128xf32>
    %81 = arith.divf %79, %80 : vector<1x128xf32>
    %82 = arith.mulf %76, %76 : vector<1x128xf32>
    %83 = arith.subf %81, %82 : vector<1x128xf32>
    %cst_35 = arith.constant 9.99999974E-6 : f32
    %84 = vector.broadcast %cst_35 : f32 to vector<1x128xf32>
    %85 = arith.addf %83, %84 : vector<1x128xf32>
    %86 = math.rsqrt %85 : vector<1x128xf32>
    %87 = arith.mulf %69, %86 : vector<1x128xf32>
    %88 = arith.mulf %76, %87 : vector<1x128xf32>
    %89 = arith.subf %70, %88 : vector<1x128xf32>
    %90 = vector.broadcast %87 : vector<1x128xf32> to vector<128x128xf32>
    %91 = arith.mulf %72, %90 : vector<128x128xf32>
    %92 = vector.broadcast %89 : vector<1x128xf32> to vector<128x128xf32>
    %93 = arith.addf %91, %92 : vector<128x128xf32>
    %cst_36 = arith.constant 0.00999999977 : f32
    %94 = vector.broadcast %cst_36 : f32 to vector<128x128xf32>
    %95 = arith.mulf %94, %93 : vector<128x128xf32>
    %96 = arith.maximumf %93, %95 : vector<128x128xf32>
    %c3 = arith.constant 3 : index
    %c0_37 = arith.constant 0 : index
    %c0_38 = arith.constant 0 : index
    %97 = vector.load %arg2[%c3, %c0_37, %c0_38] : memref<10x128x128xbf16, #tpu.memory_space<vmem>>, vector<1x128x128xbf16>
    %98 = vector.shape_cast %97 : vector<1x128x128xbf16> to vector<128x128xbf16>
    %c3_39 = arith.constant 3 : index
    %c0_40 = arith.constant 0 : index
    %c0_41 = arith.constant 0 : index
    %99 = vector.load %arg3[%c3_39, %c0_40, %c0_41] : memref<10x8x128xf32, #tpu.memory_space<vmem>>, vector<1x8x128xf32>
    %100 = vector.shape_cast %99 : vector<1x8x128xf32> to vector<8x128xf32>
    %101 = vector.extract_strided_slice %100 {offsets = [0, 0], sizes = [1, 128], strides = [1, 1]} : vector<8x128xf32> to vector<1x128xf32>
    %102 = vector.extract_strided_slice %100 {offsets = [1, 0], sizes = [1, 128], strides = [1, 1]} : vector<8x128xf32> to vector<1x128xf32>
    %103 = arith.truncf %96 : vector<128x128xf32> to vector<128x128xbf16>
    %cst_42 = arith.constant dense<0.000000e+00> : vector<128x128xf32>
    %104 = tpu.matmul %103, %98, %cst_42 {dimension_numbers = #tpu.dot_dimension_numbers<[1], [0], [0], [1], [0, 0, 1, 1], [], []>} : vector<128x128xbf16>, vector<128x128xbf16>, vector<128x128xf32> -> vector<128x128xf32>
    %cst_43 = arith.constant dense<0.000000e+00> : vector<128xf32>
    %105 = vector.multi_reduction <add>, %104, %cst_43 [0] : vector<128x128xf32> to vector<128xf32>
    %106 = vector.shape_cast %105 : vector<128xf32> to vector<1x128xf32>
    %cst_44 = arith.constant 1.280000e+02 : f32
    %107 = vector.broadcast %cst_44 : f32 to vector<1x128xf32>
    %108 = arith.divf %106, %107 : vector<1x128xf32>
    %109 = arith.mulf %104, %104 : vector<128x128xf32>
    %cst_45 = arith.constant dense<0.000000e+00> : vector<128xf32>
    %110 = vector.multi_reduction <add>, %109, %cst_45 [0] : vector<128x128xf32> to vector<128xf32>
    %111 = vector.shape_cast %110 : vector<128xf32> to vector<1x128xf32>
    %cst_46 = arith.constant 1.280000e+02 : f32
    %112 = vector.broadcast %cst_46 : f32 to vector<1x128xf32>
    %113 = arith.divf %111, %112 : vector<1x128xf32>
    %114 = arith.mulf %108, %108 : vector<1x128xf32>
    %115 = arith.subf %113, %114 : vector<1x128xf32>
    %cst_47 = arith.constant 9.99999974E-6 : f32
    %116 = vector.broadcast %cst_47 : f32 to vector<1x128xf32>
    %117 = arith.addf %115, %116 : vector<1x128xf32>
    %118 = math.rsqrt %117 : vector<1x128xf32>
    %119 = arith.mulf %101, %118 : vector<1x128xf32>
    %120 = arith.mulf %108, %119 : vector<1x128xf32>
    %121 = arith.subf %102, %120 : vector<1x128xf32>
    %122 = vector.broadcast %119 : vector<1x128xf32> to vector<128x128xf32>
    %123 = arith.mulf %104, %122 : vector<128x128xf32>
    %124 = vector.broadcast %121 : vector<1x128xf32> to vector<128x128xf32>
    %125 = arith.addf %123, %124 : vector<128x128xf32>
    %cst_48 = arith.constant 0.00999999977 : f32
    %126 = vector.broadcast %cst_48 : f32 to vector<128x128xf32>
    %127 = arith.mulf %126, %125 : vector<128x128xf32>
    %128 = arith.maximumf %125, %127 : vector<128x128xf32>
    %c4 = arith.constant 4 : index
    %c0_49 = arith.constant 0 : index
    %c0_50 = arith.constant 0 : index
    %129 = vector.load %arg2[%c4, %c0_49, %c0_50] : memref<10x128x128xbf16, #tpu.memory_space<vmem>>, vector<1x128x128xbf16>
    %130 = vector.shape_cast %129 : vector<1x128x128xbf16> to vector<128x128xbf16>
    %c4_51 = arith.constant 4 : index
    %c0_52 = arith.constant 0 : index
    %c0_53 = arith.constant 0 : index
    %131 = vector.load %arg3[%c4_51, %c0_52, %c0_53] : memref<10x8x128xf32, #tpu.memory_space<vmem>>, vector<1x8x128xf32>
    %132 = vector.shape_cast %131 : vector<1x8x128xf32> to vector<8x128xf32>
    %133 = vector.extract_strided_slice %132 {offsets = [0, 0], sizes = [1, 128], strides = [1, 1]} : vector<8x128xf32> to vector<1x128xf32>
    %134 = vector.extract_strided_slice %132 {offsets = [1, 0], sizes = [1, 128], strides = [1, 1]} : vector<8x128xf32> to vector<1x128xf32>
    %135 = arith.truncf %128 : vector<128x128xf32> to vector<128x128xbf16>
    %cst_54 = arith.constant dense<0.000000e+00> : vector<128x128xf32>
    %136 = tpu.matmul %135, %130, %cst_54 {dimension_numbers = #tpu.dot_dimension_numbers<[1], [0], [0], [1], [0, 0, 1, 1], [], []>} : vector<128x128xbf16>, vector<128x128xbf16>, vector<128x128xf32> -> vector<128x128xf32>
    %cst_55 = arith.constant dense<0.000000e+00> : vector<128xf32>
    %137 = vector.multi_reduction <add>, %136, %cst_55 [0] : vector<128x128xf32> to vector<128xf32>
    %138 = vector.shape_cast %137 : vector<128xf32> to vector<1x128xf32>
    %cst_56 = arith.constant 1.280000e+02 : f32
    %139 = vector.broadcast %cst_56 : f32 to vector<1x128xf32>
    %140 = arith.divf %138, %139 : vector<1x128xf32>
    %141 = arith.mulf %136, %136 : vector<128x128xf32>
    %cst_57 = arith.constant dense<0.000000e+00> : vector<128xf32>
    %142 = vector.multi_reduction <add>, %141, %cst_57 [0] : vector<128x128xf32> to vector<128xf32>
    %143 = vector.shape_cast %142 : vector<128xf32> to vector<1x128xf32>
    %cst_58 = arith.constant 1.280000e+02 : f32
    %144 = vector.broadcast %cst_58 : f32 to vector<1x128xf32>
    %145 = arith.divf %143, %144 : vector<1x128xf32>
    %146 = arith.mulf %140, %140 : vector<1x128xf32>
    %147 = arith.subf %145, %146 : vector<1x128xf32>
    %cst_59 = arith.constant 9.99999974E-6 : f32
    %148 = vector.broadcast %cst_59 : f32 to vector<1x128xf32>
    %149 = arith.addf %147, %148 : vector<1x128xf32>
    %150 = math.rsqrt %149 : vector<1x128xf32>
    %151 = arith.mulf %133, %150 : vector<1x128xf32>
    %152 = arith.mulf %140, %151 : vector<1x128xf32>
    %153 = arith.subf %134, %152 : vector<1x128xf32>
    %154 = vector.broadcast %151 : vector<1x128xf32> to vector<128x128xf32>
    %155 = arith.mulf %136, %154 : vector<128x128xf32>
    %156 = vector.broadcast %153 : vector<1x128xf32> to vector<128x128xf32>
    %157 = arith.addf %155, %156 : vector<128x128xf32>
    %158 = math.tanh %157 : vector<128x128xf32>
    %cst_60 = arith.constant 1.000000e+00 : f32
    %159 = vector.broadcast %cst_60 : f32 to vector<128x128xf32>
    %160 = arith.addf %158, %159 : vector<128x128xf32>
    %cst_61 = arith.constant 1.500000e+00 : f32
    %161 = vector.broadcast %cst_61 : f32 to vector<128x128xf32>
    %162 = arith.mulf %160, %161 : vector<128x128xf32>
    %cst_62 = arith.constant 5.000000e-01 : f32
    %163 = vector.broadcast %cst_62 : f32 to vector<128x128xf32>
    %164 = arith.addf %162, %163 : vector<128x128xf32>
    %165 = math.floor %164 : vector<128x128xf32>
    %cst_63 = arith.constant 0.666666686 : f32
    %166 = vector.broadcast %cst_63 : f32 to vector<128x128xf32>
    %167 = arith.mulf %165, %166 : vector<128x128xf32>
    %cst_64 = arith.constant 1.000000e+00 : f32
    %168 = vector.broadcast %cst_64 : f32 to vector<128x128xf32>
    %169 = arith.subf %167, %168 : vector<128x128xf32>
    %170 = tpu.iota {dimensions = array<i32: 1>} : vector<1x128xi32>
    %c8_i32 = arith.constant 8 : i32
    %171 = vector.broadcast %c8_i32 : i32 to vector<1x128xi32>
    %172 = arith.cmpi slt, %170, %171 : vector<1x128xi32>
    %cst_65 = arith.constant 0.000000e+00 : f32
    %173 = vector.shape_cast %172 : vector<1x128xi1> to vector<1x128xi1>
    %174 = vector.broadcast %173 : vector<1x128xi1> to vector<128x128xi1>
    %175 = vector.broadcast %cst_65 : f32 to vector<128x128xf32>
    %176 = arith.select %174, %169, %175 : vector<128x128xi1>, vector<128x128xf32>
    %c5 = arith.constant 5 : index
    %c0_66 = arith.constant 0 : index
    %c0_67 = arith.constant 0 : index
    %177 = vector.load %arg2[%c5, %c0_66, %c0_67] : memref<10x128x128xbf16, #tpu.memory_space<vmem>>, vector<1x128x128xbf16>
    %178 = vector.shape_cast %177 : vector<1x128x128xbf16> to vector<128x128xbf16>
    %c5_68 = arith.constant 5 : index
    %c0_69 = arith.constant 0 : index
    %c0_70 = arith.constant 0 : index
    %179 = vector.load %arg3[%c5_68, %c0_69, %c0_70] : memref<10x8x128xf32, #tpu.memory_space<vmem>>, vector<1x8x128xf32>
    %180 = vector.shape_cast %179 : vector<1x8x128xf32> to vector<8x128xf32>
    %181 = vector.extract_strided_slice %180 {offsets = [0, 0], sizes = [1, 128], strides = [1, 1]} : vector<8x128xf32> to vector<1x128xf32>
    %182 = vector.extract_strided_slice %180 {offsets = [1, 0], sizes = [1, 128], strides = [1, 1]} : vector<8x128xf32> to vector<1x128xf32>
    %183 = arith.truncf %176 : vector<128x128xf32> to vector<128x128xbf16>
    %cst_71 = arith.constant dense<0.000000e+00> : vector<128x128xf32>
    %184 = tpu.matmul %183, %178, %cst_71 {dimension_numbers = #tpu.dot_dimension_numbers<[1], [0], [0], [1], [0, 0, 1, 1], [], []>} : vector<128x128xbf16>, vector<128x128xbf16>, vector<128x128xf32> -> vector<128x128xf32>
    %cst_72 = arith.constant dense<0.000000e+00> : vector<128xf32>
    %185 = vector.multi_reduction <add>, %184, %cst_72 [0] : vector<128x128xf32> to vector<128xf32>
    %186 = vector.shape_cast %185 : vector<128xf32> to vector<1x128xf32>
    %cst_73 = arith.constant 1.280000e+02 : f32
    %187 = vector.broadcast %cst_73 : f32 to vector<1x128xf32>
    %188 = arith.divf %186, %187 : vector<1x128xf32>
    %189 = arith.mulf %184, %184 : vector<128x128xf32>
    %cst_74 = arith.constant dense<0.000000e+00> : vector<128xf32>
    %190 = vector.multi_reduction <add>, %189, %cst_74 [0] : vector<128x128xf32> to vector<128xf32>
    %191 = vector.shape_cast %190 : vector<128xf32> to vector<1x128xf32>
    %cst_75 = arith.constant 1.280000e+02 : f32
    %192 = vector.broadcast %cst_75 : f32 to vector<1x128xf32>
    %193 = arith.divf %191, %192 : vector<1x128xf32>
    %194 = arith.mulf %188, %188 : vector<1x128xf32>
    %195 = arith.subf %193, %194 : vector<1x128xf32>
    %cst_76 = arith.constant 9.99999974E-6 : f32
    %196 = vector.broadcast %cst_76 : f32 to vector<1x128xf32>
    %197 = arith.addf %195, %196 : vector<1x128xf32>
    %198 = math.rsqrt %197 : vector<1x128xf32>
    %199 = arith.mulf %181, %198 : vector<1x128xf32>
    %200 = arith.mulf %188, %199 : vector<1x128xf32>
    %201 = arith.subf %182, %200 : vector<1x128xf32>
    %202 = vector.broadcast %199 : vector<1x128xf32> to vector<128x128xf32>
    %203 = arith.mulf %184, %202 : vector<128x128xf32>
    %204 = vector.broadcast %201 : vector<1x128xf32> to vector<128x128xf32>
    %205 = arith.addf %203, %204 : vector<128x128xf32>
    %cst_77 = arith.constant 0.00999999977 : f32
    %206 = vector.broadcast %cst_77 : f32 to vector<128x128xf32>
    %207 = arith.mulf %206, %205 : vector<128x128xf32>
    %208 = arith.maximumf %205, %207 : vector<128x128xf32>
    %c6 = arith.constant 6 : index
    %c0_78 = arith.constant 0 : index
    %c0_79 = arith.constant 0 : index
    %209 = vector.load %arg2[%c6, %c0_78, %c0_79] : memref<10x128x128xbf16, #tpu.memory_space<vmem>>, vector<1x128x128xbf16>
    %210 = vector.shape_cast %209 : vector<1x128x128xbf16> to vector<128x128xbf16>
    %c6_80 = arith.constant 6 : index
    %c0_81 = arith.constant 0 : index
    %c0_82 = arith.constant 0 : index
    %211 = vector.load %arg3[%c6_80, %c0_81, %c0_82] : memref<10x8x128xf32, #tpu.memory_space<vmem>>, vector<1x8x128xf32>
    %212 = vector.shape_cast %211 : vector<1x8x128xf32> to vector<8x128xf32>
    %213 = vector.extract_strided_slice %212 {offsets = [0, 0], sizes = [1, 128], strides = [1, 1]} : vector<8x128xf32> to vector<1x128xf32>
    %214 = vector.extract_strided_slice %212 {offsets = [1, 0], sizes = [1, 128], strides = [1, 1]} : vector<8x128xf32> to vector<1x128xf32>
    %215 = arith.truncf %208 : vector<128x128xf32> to vector<128x128xbf16>
    %cst_83 = arith.constant dense<0.000000e+00> : vector<128x128xf32>
    %216 = tpu.matmul %215, %210, %cst_83 {dimension_numbers = #tpu.dot_dimension_numbers<[1], [0], [0], [1], [0, 0, 1, 1], [], []>} : vector<128x128xbf16>, vector<128x128xbf16>, vector<128x128xf32> -> vector<128x128xf32>
    %cst_84 = arith.constant dense<0.000000e+00> : vector<128xf32>
    %217 = vector.multi_reduction <add>, %216, %cst_84 [0] : vector<128x128xf32> to vector<128xf32>
    %218 = vector.shape_cast %217 : vector<128xf32> to vector<1x128xf32>
    %cst_85 = arith.constant 1.280000e+02 : f32
    %219 = vector.broadcast %cst_85 : f32 to vector<1x128xf32>
    %220 = arith.divf %218, %219 : vector<1x128xf32>
    %221 = arith.mulf %216, %216 : vector<128x128xf32>
    %cst_86 = arith.constant dense<0.000000e+00> : vector<128xf32>
    %222 = vector.multi_reduction <add>, %221, %cst_86 [0] : vector<128x128xf32> to vector<128xf32>
    %223 = vector.shape_cast %222 : vector<128xf32> to vector<1x128xf32>
    %cst_87 = arith.constant 1.280000e+02 : f32
    %224 = vector.broadcast %cst_87 : f32 to vector<1x128xf32>
    %225 = arith.divf %223, %224 : vector<1x128xf32>
    %226 = arith.mulf %220, %220 : vector<1x128xf32>
    %227 = arith.subf %225, %226 : vector<1x128xf32>
    %cst_88 = arith.constant 9.99999974E-6 : f32
    %228 = vector.broadcast %cst_88 : f32 to vector<1x128xf32>
    %229 = arith.addf %227, %228 : vector<1x128xf32>
    %230 = math.rsqrt %229 : vector<1x128xf32>
    %231 = arith.mulf %213, %230 : vector<1x128xf32>
    %232 = arith.mulf %220, %231 : vector<1x128xf32>
    %233 = arith.subf %214, %232 : vector<1x128xf32>
    %234 = vector.broadcast %231 : vector<1x128xf32> to vector<128x128xf32>
    %235 = arith.mulf %216, %234 : vector<128x128xf32>
    %236 = vector.broadcast %233 : vector<1x128xf32> to vector<128x128xf32>
    %237 = arith.addf %235, %236 : vector<128x128xf32>
    %cst_89 = arith.constant 0.00999999977 : f32
    %238 = vector.broadcast %cst_89 : f32 to vector<128x128xf32>
    %239 = arith.mulf %238, %237 : vector<128x128xf32>
    %240 = arith.maximumf %237, %239 : vector<128x128xf32>
    %c7 = arith.constant 7 : index
    %c0_90 = arith.constant 0 : index
    %c0_91 = arith.constant 0 : index
    %241 = vector.load %arg2[%c7, %c0_90, %c0_91] : memref<10x128x128xbf16, #tpu.memory_space<vmem>>, vector<1x128x128xbf16>
    %242 = vector.shape_cast %241 : vector<1x128x128xbf16> to vector<128x128xbf16>
    %c7_92 = arith.constant 7 : index
    %c0_93 = arith.constant 0 : index
    %c0_94 = arith.constant 0 : index
    %243 = vector.load %arg3[%c7_92, %c0_93, %c0_94] : memref<10x8x128xf32, #tpu.memory_space<vmem>>, vector<1x8x128xf32>
    %244 = vector.shape_cast %243 : vector<1x8x128xf32> to vector<8x128xf32>
    %245 = vector.extract_strided_slice %244 {offsets = [0, 0], sizes = [1, 128], strides = [1, 1]} : vector<8x128xf32> to vector<1x128xf32>
    %246 = vector.extract_strided_slice %244 {offsets = [1, 0], sizes = [1, 128], strides = [1, 1]} : vector<8x128xf32> to vector<1x128xf32>
    %247 = arith.truncf %240 : vector<128x128xf32> to vector<128x128xbf16>
    %cst_95 = arith.constant dense<0.000000e+00> : vector<128x128xf32>
    %248 = tpu.matmul %247, %242, %cst_95 {dimension_numbers = #tpu.dot_dimension_numbers<[1], [0], [0], [1], [0, 0, 1, 1], [], []>} : vector<128x128xbf16>, vector<128x128xbf16>, vector<128x128xf32> -> vector<128x128xf32>
    %cst_96 = arith.constant dense<0.000000e+00> : vector<128xf32>
    %249 = vector.multi_reduction <add>, %248, %cst_96 [0] : vector<128x128xf32> to vector<128xf32>
    %250 = vector.shape_cast %249 : vector<128xf32> to vector<1x128xf32>
    %cst_97 = arith.constant 1.280000e+02 : f32
    %251 = vector.broadcast %cst_97 : f32 to vector<1x128xf32>
    %252 = arith.divf %250, %251 : vector<1x128xf32>
    %253 = arith.mulf %248, %248 : vector<128x128xf32>
    %cst_98 = arith.constant dense<0.000000e+00> : vector<128xf32>
    %254 = vector.multi_reduction <add>, %253, %cst_98 [0] : vector<128x128xf32> to vector<128xf32>
    %255 = vector.shape_cast %254 : vector<128xf32> to vector<1x128xf32>
    %cst_99 = arith.constant 1.280000e+02 : f32
    %256 = vector.broadcast %cst_99 : f32 to vector<1x128xf32>
    %257 = arith.divf %255, %256 : vector<1x128xf32>
    %258 = arith.mulf %252, %252 : vector<1x128xf32>
    %259 = arith.subf %257, %258 : vector<1x128xf32>
    %cst_100 = arith.constant 9.99999974E-6 : f32
    %260 = vector.broadcast %cst_100 : f32 to vector<1x128xf32>
    %261 = arith.addf %259, %260 : vector<1x128xf32>
    %262 = math.rsqrt %261 : vector<1x128xf32>
    %263 = arith.mulf %245, %262 : vector<1x128xf32>
    %264 = arith.mulf %252, %263 : vector<1x128xf32>
    %265 = arith.subf %246, %264 : vector<1x128xf32>
    %266 = vector.broadcast %263 : vector<1x128xf32> to vector<128x128xf32>
    %267 = arith.mulf %248, %266 : vector<128x128xf32>
    %268 = vector.broadcast %265 : vector<1x128xf32> to vector<128x128xf32>
    %269 = arith.addf %267, %268 : vector<128x128xf32>
    %cst_101 = arith.constant 0.00999999977 : f32
    %270 = vector.broadcast %cst_101 : f32 to vector<128x128xf32>
    %271 = arith.mulf %270, %269 : vector<128x128xf32>
    %272 = arith.maximumf %269, %271 : vector<128x128xf32>
    %c8 = arith.constant 8 : index
    %c0_102 = arith.constant 0 : index
    %c0_103 = arith.constant 0 : index
    %273 = vector.load %arg2[%c8, %c0_102, %c0_103] : memref<10x128x128xbf16, #tpu.memory_space<vmem>>, vector<1x128x128xbf16>
    %274 = vector.shape_cast %273 : vector<1x128x128xbf16> to vector<128x128xbf16>
    %c8_104 = arith.constant 8 : index
    %c0_105 = arith.constant 0 : index
    %c0_106 = arith.constant 0 : index
    %275 = vector.load %arg3[%c8_104, %c0_105, %c0_106] : memref<10x8x128xf32, #tpu.memory_space<vmem>>, vector<1x8x128xf32>
    %276 = vector.shape_cast %275 : vector<1x8x128xf32> to vector<8x128xf32>
    %277 = vector.extract_strided_slice %276 {offsets = [0, 0], sizes = [1, 128], strides = [1, 1]} : vector<8x128xf32> to vector<1x128xf32>
    %278 = vector.extract_strided_slice %276 {offsets = [1, 0], sizes = [1, 128], strides = [1, 1]} : vector<8x128xf32> to vector<1x128xf32>
    %279 = arith.truncf %272 : vector<128x128xf32> to vector<128x128xbf16>
    %cst_107 = arith.constant dense<0.000000e+00> : vector<128x128xf32>
    %280 = tpu.matmul %279, %274, %cst_107 {dimension_numbers = #tpu.dot_dimension_numbers<[1], [0], [0], [1], [0, 0, 1, 1], [], []>} : vector<128x128xbf16>, vector<128x128xbf16>, vector<128x128xf32> -> vector<128x128xf32>
    %cst_108 = arith.constant dense<0.000000e+00> : vector<128xf32>
    %281 = vector.multi_reduction <add>, %280, %cst_108 [0] : vector<128x128xf32> to vector<128xf32>
    %282 = vector.shape_cast %281 : vector<128xf32> to vector<1x128xf32>
    %cst_109 = arith.constant 1.280000e+02 : f32
    %283 = vector.broadcast %cst_109 : f32 to vector<1x128xf32>
    %284 = arith.divf %282, %283 : vector<1x128xf32>
    %285 = arith.mulf %280, %280 : vector<128x128xf32>
    %cst_110 = arith.constant dense<0.000000e+00> : vector<128xf32>
    %286 = vector.multi_reduction <add>, %285, %cst_110 [0] : vector<128x128xf32> to vector<128xf32>
    %287 = vector.shape_cast %286 : vector<128xf32> to vector<1x128xf32>
    %cst_111 = arith.constant 1.280000e+02 : f32
    %288 = vector.broadcast %cst_111 : f32 to vector<1x128xf32>
    %289 = arith.divf %287, %288 : vector<1x128xf32>
    %290 = arith.mulf %284, %284 : vector<1x128xf32>
    %291 = arith.subf %289, %290 : vector<1x128xf32>
    %cst_112 = arith.constant 9.99999974E-6 : f32
    %292 = vector.broadcast %cst_112 : f32 to vector<1x128xf32>
    %293 = arith.addf %291, %292 : vector<1x128xf32>
    %294 = math.rsqrt %293 : vector<1x128xf32>
    %295 = arith.mulf %277, %294 : vector<1x128xf32>
    %296 = arith.mulf %284, %295 : vector<1x128xf32>
    %297 = arith.subf %278, %296 : vector<1x128xf32>
    %298 = vector.broadcast %295 : vector<1x128xf32> to vector<128x128xf32>
    %299 = arith.mulf %280, %298 : vector<128x128xf32>
    %300 = vector.broadcast %297 : vector<1x128xf32> to vector<128x128xf32>
    %301 = arith.addf %299, %300 : vector<128x128xf32>
    %cst_113 = arith.constant 0.00999999977 : f32
    %302 = vector.broadcast %cst_113 : f32 to vector<128x128xf32>
    %303 = arith.mulf %302, %301 : vector<128x128xf32>
    %304 = arith.maximumf %301, %303 : vector<128x128xf32>
    %c9 = arith.constant 9 : index
    %c0_114 = arith.constant 0 : index
    %c0_115 = arith.constant 0 : index
    %305 = vector.load %arg2[%c9, %c0_114, %c0_115] : memref<10x128x128xbf16, #tpu.memory_space<vmem>>, vector<1x128x128xbf16>
    %306 = vector.shape_cast %305 : vector<1x128x128xbf16> to vector<128x128xbf16>
    %c9_116 = arith.constant 9 : index
    %c0_117 = arith.constant 0 : index
    %c0_118 = arith.constant 0 : index
    %307 = vector.load %arg3[%c9_116, %c0_117, %c0_118] : memref<10x8x128xf32, #tpu.memory_space<vmem>>, vector<1x8x128xf32>
    %308 = vector.shape_cast %307 : vector<1x8x128xf32> to vector<8x128xf32>
    %309 = vector.extract_strided_slice %308 {offsets = [0, 0], sizes = [1, 128], strides = [1, 1]} : vector<8x128xf32> to vector<1x128xf32>
    %310 = vector.extract_strided_slice %308 {offsets = [1, 0], sizes = [1, 128], strides = [1, 1]} : vector<8x128xf32> to vector<1x128xf32>
    %311 = arith.truncf %304 : vector<128x128xf32> to vector<128x128xbf16>
    %cst_119 = arith.constant dense<0.000000e+00> : vector<128x128xf32>
    %312 = tpu.matmul %311, %306, %cst_119 {dimension_numbers = #tpu.dot_dimension_numbers<[1], [0], [0], [1], [0, 0, 1, 1], [], []>} : vector<128x128xbf16>, vector<128x128xbf16>, vector<128x128xf32> -> vector<128x128xf32>
    %cst_120 = arith.constant dense<0.000000e+00> : vector<128xf32>
    %313 = vector.multi_reduction <add>, %312, %cst_120 [0] : vector<128x128xf32> to vector<128xf32>
    %314 = vector.shape_cast %313 : vector<128xf32> to vector<1x128xf32>
    %cst_121 = arith.constant 1.280000e+02 : f32
    %315 = vector.broadcast %cst_121 : f32 to vector<1x128xf32>
    %316 = arith.divf %314, %315 : vector<1x128xf32>
    %317 = arith.mulf %312, %312 : vector<128x128xf32>
    %cst_122 = arith.constant dense<0.000000e+00> : vector<128xf32>
    %318 = vector.multi_reduction <add>, %317, %cst_122 [0] : vector<128x128xf32> to vector<128xf32>
    %319 = vector.shape_cast %318 : vector<128xf32> to vector<1x128xf32>
    %cst_123 = arith.constant 1.280000e+02 : f32
    %320 = vector.broadcast %cst_123 : f32 to vector<1x128xf32>
    %321 = arith.divf %319, %320 : vector<1x128xf32>
    %322 = arith.mulf %316, %316 : vector<1x128xf32>
    %323 = arith.subf %321, %322 : vector<1x128xf32>
    %cst_124 = arith.constant 9.99999974E-6 : f32
    %324 = vector.broadcast %cst_124 : f32 to vector<1x128xf32>
    %325 = arith.addf %323, %324 : vector<1x128xf32>
    %326 = math.rsqrt %325 : vector<1x128xf32>
    %327 = arith.mulf %309, %326 : vector<1x128xf32>
    %328 = arith.mulf %316, %327 : vector<1x128xf32>
    %329 = arith.subf %310, %328 : vector<1x128xf32>
    %330 = vector.broadcast %327 : vector<1x128xf32> to vector<128x128xf32>
    %331 = arith.mulf %312, %330 : vector<128x128xf32>
    %332 = vector.broadcast %329 : vector<1x128xf32> to vector<128x128xf32>
    %333 = arith.addf %331, %332 : vector<128x128xf32>
    %334 = math.tanh %333 : vector<128x128xf32>
    %c0_125 = arith.constant 0 : index
    %c0_126 = arith.constant 0 : index
    %335 = vector.load %arg4[%c0_125, %c0_126] : memref<128x128xf32, #tpu.memory_space<vmem>>, vector<128x128xf32>
    tpu.vector_store %arg4[%c0_125, %c0_126], %334 {strides = array<i32>} : memref<128x128xf32, #tpu.memory_space<vmem>>, vector<128x128xf32>,
    return
  }
  func.func @transform_0(%arg0: i32) -> (i32, i32) {
    %c0_i32 = arith.constant 0 : i32
    %c0_i32_0 = arith.constant 0 : i32
    return %arg0, %c0_i32 : i32, i32
  }
  func.func @transform_1(%arg0: i32) -> (i32, i32, i32) {
    %c0_i32 = arith.constant 0 : i32
    %c0_i32_0 = arith.constant 0 : i32
    %c0_i32_1 = arith.constant 0 : i32
    %c0_i32_2 = arith.constant 0 : i32
    return %c0_i32, %c0_i32_0, %c0_i32_1 : i32, i32, i32
  }
  func.func @transform_2(%arg0: i32) -> (i32, i32, i32) {
    %c0_i32 = arith.constant 0 : i32
    %c0_i32_0 = arith.constant 0 : i32
    %c0_i32_1 = arith.constant 0 : i32
    %c0_i32_2 = arith.constant 0 : i32
    return %c0_i32, %c0_i32_0, %c0_i32_1 : i32, i32, i32
  }
  func.func @transform_3(%arg0: i32) -> (i32, i32) {
    %c0_i32 = arith.constant 0 : i32
    %c0_i32_0 = arith.constant 0 : i32
    return %arg0, %c0_i32 : i32, i32
  }
}

</mosaic_0001>

<llo_original>
// kernel: tpu_custom_call.1
$region0: #{tpu_custom_call.1}
  #allocation0 [shape = 'u32[]', space=smem, size = 0x4, offset = 0x4, fixed_abs, tag = 'smem constant byte address 0x4 - core index']
  #allocation1 [shape = 'u32[144,128]{1,0:T(1,128)}', space=vmem, size = 0x12000, scoped, tag = 'internal scratch']
  %s0 = inlined_call_operand.hbm [shape: f32[128,128], index: 0, kind: input, shape index: {}]
  %s1 = inlined_call_operand.hbm [shape: bf16[10,128,128], index: 1, kind: input, shape index: {}]
  %s2 = inlined_call_operand.hbm [shape: f32[10,8,128], index: 2, kind: input, shape index: {}]
  %s3 = inlined_call_operand.hbm [shape: f32[128,128], index: 3, kind: output, shape index: {}]
  %s4 = sld [smem:[#allocation0]]
  $region34: #{tpu_custom_call.1} parent=0
    _
  %s6 = ssub.s32 1, %s4
  %s7 = scalar_select 0, %s6, %s4
  $region1: #{tpu_custom_call.1} parent=0
    #allocation2 [shape = 'u8[65536]{0}', space=vmem, size = 0x10000, scoped, tag = 'input window, operand 0, single buffered']
    #allocation3 [shape = 's32[1]{0}', space=sflag, size = 0x4, scoped, tag = 'scoped memory for tpu_custom_call.1']
    #allocation4 [shape = 's32[1]{0}', space=sflag, size = 0x4, scoped, tag = 'scoped memory for tpu_custom_call.1']
    #allocation5 [shape = 'u8[327680]{0}', space=vmem, size = 0x50000, scoped, tag = 'input window, operand 1, single buffered']
    #allocation6 [shape = 's32[1]{0}', space=sflag, size = 0x4, scoped, tag = 'scoped memory for tpu_custom_call.1']
    #allocation7 [shape = 'u8[40960]{0}', space=vmem, size = 0xa000, scoped, tag = 'input window, operand 2, single buffered']
    #allocation8 [shape = 'u8[65536]{0}', space=vmem, size = 0x10000, scoped, tag = 'output window, operand 0, single buffered']
    %8 = vsyncpa [#allocation3], 0
    %9 = vsyncpa [#allocation6], 0
    %10 = vsyncpa [#allocation4], 0
    // Predicated region
    $region2: #{tpu_custom_call.1} parent=1 // pred_check
      _
    $region3: #{tpu_custom_call.1} parent=1 // pred_check_branch
      %12 = sbr.rel (0) target = $region5
    $region4: #{tpu_custom_call.1} parent=1 // pred_region
      %s14 = ssub.s32 2048, 2048
      %15 = vsyncadd [#allocation3], %s14
      %s16 = sshll.u32 [#allocation2], 4
      %s17 = int_to_ptr.vmem [resolvable:$true] %s16
      %22 = dma.hbm_to_vmem [thread:$0]  %s0, 2048, %s17, [#allocation3], 128, 128, 8
    $region5: #{tpu_custom_call.1} parent=1 // pred_fallthru
      _
    // Predicated region
    $region6: #{tpu_custom_call.1} parent=1 // pred_check
      _
    $region7: #{tpu_custom_call.1} parent=1 // pred_check_branch
      %24 = sbr.rel (0) target = $region9
    $region8: #{tpu_custom_call.1} parent=1 // pred_region
      %s26 = ssub.s32 10240, 10240
      %27 = vsyncadd [#allocation6], %s26
      %s28 = sshll.u32 [#allocation5], 4
      %s29 = int_to_ptr.vmem [resolvable:$true] %s28
      %34 = dma.hbm_to_vmem [thread:$0]  %s1, 10240, %s29, [#allocation6], 64, 64, 4
    $region9: #{tpu_custom_call.1} parent=1 // pred_fallthru
      _
    // Predicated region
    $region10: #{tpu_custom_call.1} parent=1 // pred_check
      _
    $region11: #{tpu_custom_call.1} parent=1 // pred_check_branch
      %36 = sbr.rel (0) target = $region13
    $region12: #{tpu_custom_call.1} parent=1 // pred_region
      %s38 = ssub.s32 1280, 1280
      %39 = vsyncadd [#allocation6], %s38
      %s40 = sshll.u32 [#allocation7], 4
      %s41 = int_to_ptr.vmem [resolvable:$true] %s40
      %46 = dma.hbm_to_vmem [thread:$0]  %s2, 1280, %s41, [#allocation6], 128, 128, 8
    $region13: #{tpu_custom_call.1} parent=1 // pred_fallthru
      _
    // Predicated region
    $region14: #{tpu_custom_call.1} parent=1 // pred_check
      _
    $region15: #{tpu_custom_call.1} parent=1 // pred_check_branch
      %48 = sbr.rel (0) target = $region17
    $region16: #{tpu_custom_call.1} parent=1 // pred_region
      %49 = dma.done [#allocation3], 2048
    $region17: #{tpu_custom_call.1} parent=1 // pred_fallthru
      _
    // Predicated region
    $region18: #{tpu_custom_call.1} parent=1 // pred_check
      _
    $region19: #{tpu_custom_call.1} parent=1 // pred_check_branch
      %51 = sbr.rel (0) target = $region21
    $region20: #{tpu_custom_call.1} parent=1 // pred_region
      %52 = dma.done [#allocation6], 10240
    $region21: #{tpu_custom_call.1} parent=1 // pred_fallthru
      _
    // Predicated region
    $region22: #{tpu_custom_call.1} parent=1 // pred_check
      _
    $region23: #{tpu_custom_call.1} parent=1 // pred_check_branch
      %54 = sbr.rel (0) target = $region25
    $region24: #{tpu_custom_call.1} parent=1 // pred_region
      %55 = dma.done [#allocation6], 1280
    $region25: #{tpu_custom_call.1} parent=1 // pred_fallthru
      _
    %v57 = vld [vmem:[#allocation2] sm:$0xff]
    %v58 = vld [vmem:[#allocation2 + $0x8] sm:$0xff]
    %v59 = vld [vmem:[#allocation2 + $0x10] sm:$0xff]
    %v60 = vld [vmem:[#allocation2 + $0x18] sm:$0xff]
    %v61 = vld [vmem:[#allocation2 + $0x20] sm:$0xff]
    %v62 = vld [vmem:[#allocation2 + $0x28] sm:$0xff]
    %v63 = vld [vmem:[#allocation2 + $0x30] sm:$0xff]
    %v64 = vld [vmem:[#allocation2 + $0x38] sm:$0xff]
    %v65 = vld [vmem:[#allocation2 + $0x40] sm:$0xff]
    %v66 = vld [vmem:[#allocation2 + $0x48] sm:$0xff]
    %v67 = vld [vmem:[#allocation2 + $0x50] sm:$0xff]
    %v68 = vld [vmem:[#allocation2 + $0x58] sm:$0xff]
    %v69 = vld [vmem:[#allocation2 + $0x60] sm:$0xff]
    %v70 = vld [vmem:[#allocation2 + $0x68] sm:$0xff]
    %v71 = vld [vmem:[#allocation2 + $0x70] sm:$0xff]
    %v72 = vld [vmem:[#allocation2 + $0x78] sm:$0xff]
    %v73 = vld [vmem:[#allocation5] sm:$0xf]
    %v74 = vld [vmem:[#allocation5 + $0x4] sm:$0xf]
    %v75 = vld [vmem:[#allocation5 + $0x8] sm:$0xf]
    %v76 = vld [vmem:[#allocation5 + $0xc] sm:$0xf]
    %v77 = vld [vmem:[#allocation5 + $0x10] sm:$0xf]
    %v78 = vld [vmem:[#allocation5 + $0x14] sm:$0xf]
    %v79 = vld [vmem:[#allocation5 + $0x18] sm:$0xf]
    %v80 = vld [vmem:[#allocation5 + $0x1c] sm:$0xf]
    %v81 = vld [vmem:[#allocation5 + $0x20] sm:$0xf]
    %v82 = vld [vmem:[#allocation5 + $0x24] sm:$0xf]
    %v83 = vld [vmem:[#allocation5 + $0x28] sm:$0xf]
    %v84 = vld [vmem:[#allocation5 + $0x2c] sm:$0xf]
    %v85 = vld [vmem:[#allocation5 + $0x30] sm:$0xf]
    %v86 = vld [vmem:[#allocation5 + $0x34] sm:$0xf]
    %v87 = vld [vmem:[#allocation5 + $0x38] sm:$0xf]
    %v88 = vld [vmem:[#allocation5 + $0x3c] sm:$0xf]
    %v89 = vld [vmem:[#allocation7] sm:$0xff]
    %v90 = vpack.c.bf16 %v58, %v57
    %v91 = vpack.c.bf16 %v60, %v59
    %v92 = vpack.c.bf16 %v62, %v61
    %v93 = vpack.c.bf16 %v64, %v63
    %v94 = vpack.c.bf16 %v66, %v65
    %v95 = vpack.c.bf16 %v68, %v67
    %v96 = vpack.c.bf16 %v70, %v69
    %v97 = vpack.c.bf16 %v72, %v71
    %v114 = vunpack.c.l.b16 %v73
    %v115 = vunpack.c.l.b16 %v74
    %v116 = vunpack.c.l.b16 %v75
    %v117 = vunpack.c.l.b16 %v76
    %v118 = vunpack.c.l.b16 %v77
    %v119 = vunpack.c.l.b16 %v78
    %v120 = vunpack.c.l.b16 %v79
    %v121 = vunpack.c.l.b16 %v80
    %v122 = vunpack.c.l.b16 %v81
    %v123 = vunpack.c.l.b16 %v82
    %v124 = vunpack.c.l.b16 %v83
    %v125 = vunpack.c.l.b16 %v84
    %v126 = vunpack.c.l.b16 %v85
    %v127 = vunpack.c.l.b16 %v86
    %v128 = vunpack.c.l.b16 %v87
    %v129 = vunpack.c.l.b16 %v88
    %v130 = vpack.c.b16 %v115, %v114
    %v131 = vpack.c.b16 %v117, %v116
    %v132 = vpack.c.b16 %v119, %v118
    %v133 = vpack.c.b16 %v121, %v120
    %v134 = vpack.c.b16 %v123, %v122
    %v135 = vpack.c.b16 %v125, %v124
    %v136 = vpack.c.b16 %v127, %v126
    %v137 = vpack.c.b16 %v129, %v128
    %146 = vmatprep.subr.bf16.mxu0 0
    %147 = vmatpush1.bf16.msra.mxu0 %v130
    %148 = vmatprep.subr.bf16.mxu0 0
    %149 = vmatpush1.bf16.msra.mxu0 %v131
    %150 = vmatprep.subr.bf16.mxu0 0
    %151 = vmatpush1.bf16.msra.mxu0 %v132
    %152 = vmatprep.subr.bf16.mxu0 0
    %153 = vmatpush1.bf16.msra.mxu0 %v133
    %154 = vmatprep.subr.bf16.mxu0 0
    %155 = vmatpush1.bf16.msra.mxu0 %v134
    %156 = vmatprep.subr.bf16.mxu0 0
    %157 = vmatpush1.bf16.msra.mxu0 %v135
    %158 = vmatprep.subr.bf16.mxu0 0
    %159 = vmatpush1.bf16.msra.mxu0 %v136
    %160 = vmatprep.subr.bf16.mxu0 0
    %161 = vmatpush1.bf16.msra.mxu0 %v137
    %162 = vmatprep.subr.bf16.mxu0 0
    %163 = vmatpush1.bf16.msra.mxu0 0
    %164 = vmatprep.subr.bf16.mxu0 0
    %165 = vmatpush1.bf16.msra.mxu0 0
    %166 = vmatprep.subr.bf16.mxu0 0
    %167 = vmatpush1.bf16.msra.mxu0 0
    %168 = vmatprep.subr.bf16.mxu0 0
    %169 = vmatpush1.bf16.msra.mxu0 0
    %170 = vmatprep.subr.bf16.mxu0 0
    %171 = vmatpush1.bf16.msra.mxu0 0
    %172 = vmatprep.subr.bf16.mxu0 0
    %173 = vmatpush1.bf16.msra.mxu0 0
    %174 = vmatprep.subr.bf16.mxu0 0
    %175 = vmatpush1.bf16.msra.mxu0 0
    %176 = vmatprep.subr.bf16.mxu0 0
    %177 = vmatpush1.bf16.msra.mxu0 0
    %178 = vmatprep.mubr.bf16.mxu0 0
    %179 = vmatmul.mubr.bf16.gmra.mrb[0].mxu0 %v90
    %v180 = vpop.f32.mrb[0].mxu0
    %v181 = vadd.f32 0.0, %v180
    %v182 = vpop.f32.mrb[0].mxu0
    %v183 = vpop.f32.mrb[0].mxu0
    %v184 = vadd.f32 0.0, %v183
    %v185 = vpop.f32.mrb[0].mxu0
    %186 = vmatprep.mubr.bf16.mxu0 0
    %187 = vmatmul.mubr.bf16.gmra.mrb[0].mxu0 %v91
    %v188 = vpop.f32.mrb[0].mxu0
    %v189 = vadd.f32 0.0, %v188
    %v190 = vpop.f32.mrb[0].mxu0
    %v191 = vpop.f32.mrb[0].mxu0
    %v192 = vadd.f32 0.0, %v191
    %v193 = vpop.f32.mrb[0].mxu0
    %194 = vmatprep.mubr.bf16.mxu0 0
    %195 = vmatmul.mubr.bf16.gmra.mrb[0].mxu0 %v92
    %v196 = vpop.f32.mrb[0].mxu0
    %v197 = vadd.f32 0.0, %v196
    %v198 = vpop.f32.mrb[0].mxu0
    %v199 = vpop.f32.mrb[0].mxu0
    %v200 = vadd.f32 0.0, %v199
    %v201 = vpop.f32.mrb[0].mxu0
    %202 = vmatprep.mubr.bf16.mxu0 0
    %203 = vmatmul.mubr.bf16.gmra.mrb[0].mxu0 %v93
    %v204 = vpop.f32.mrb[0].mxu0
    %v205 = vadd.f32 0.0, %v204
    %v206 = vpop.f32.mrb[0].mxu0
    %v207 = vpop.f32.mrb[0].mxu0
    %v208 = vadd.f32 0.0, %v207
    %v209 = vpop.f32.mrb[0].mxu0
    %210 = vmatprep.mubr.bf16.mxu0 0
    %211 = vmatmul.mubr.bf16.gmra.mrb[0].mxu0 %v94
    %v212 = vpop.f32.mrb[0].mxu0
    %v213 = vadd.f32 0.0, %v212
    %v214 = vpop.f32.mrb[0].mxu0
    %v215 = vpop.f32.mrb[0].mxu0
    %v216 = vadd.f32 0.0, %v215
    %v217 = vpop.f32.mrb[0].mxu0
    %218 = vmatprep.mubr.bf16.mxu0 0
    %219 = vmatmul.mubr.bf16.gmra.mrb[0].mxu0 %v95
    %v220 = vpop.f32.mrb[0].mxu0
    %v221 = vadd.f32 0.0, %v220
    %v222 = vpop.f32.mrb[0].mxu0
    %v223 = vpop.f32.mrb[0].mxu0
    %v224 = vadd.f32 0.0, %v223
    %v225 = vpop.f32.mrb[0].mxu0
    %226 = vmatprep.mubr.bf16.mxu0 0
    %227 = vmatmul.mubr.bf16.gmra.mrb[0].mxu0 %v96
    %v228 = vpop.f32.mrb[0].mxu0
    %v229 = vadd.f32 0.0, %v228
    %v230 = vpop.f32.mrb[0].mxu0
    %v231 = vpop.f32.mrb[0].mxu0
    %v232 = vadd.f32 0.0, %v231
    %v233 = vpop.f32.mrb[0].mxu0
    %234 = vmatprep.mubr.bf16.mxu0 0
    %235 = vmatmul.mubr.bf16.gmra.mrb[0].mxu0 %v97
    %v236 = vpop.f32.mrb[0].mxu0
    %v237 = vadd.f32 0.0, %v236
    %v238 = vpop.f32.mrb[0].mxu0
    %v239 = vpop.f32.mrb[0].mxu0
    %v240 = vadd.f32 0.0, %v239
    %v241 = vpop.f32.mrb[0].mxu0
    %242 = vdwg.mxu0
    %v243 = vadd.f32 %v181, %v184
    %v244 = vadd.f32 %v243, %v189
    %v245 = vadd.f32 %v244, %v192
    %v246 = vadd.f32 %v245, %v197
    %v247 = vadd.f32 %v246, %v200
    %v248 = vadd.f32 %v247, %v205
    %v249 = vadd.f32 %v248, %v208
    %v250 = vadd.f32 %v249, %v213
    %v251 = vadd.f32 %v250, %v216
    %v252 = vadd.f32 %v251, %v221
    %v253 = vadd.f32 %v252, %v224
    %v254 = vadd.f32 %v253, %v229
    %v255 = vadd.f32 %v254, %v232
    %v256 = vadd.f32 %v255, %v237
    %v257 = vadd.f32 %v256, %v240
    %v258 = vrot.slane %v257, 4
    %v259 = vadd.f32 %v257, %v258
    %v260 = vrot.slane %v259, 2
    %v261 = vadd.f32 %v259, %v260
    %v262 = vrot.slane %v261, 1
    %v263 = vadd.f32 %v261, %v262
    %v264 = vrcp.pop 128.0
    %v265 = vmul.f32 %v263, %v264
    %v266 = vmul.f32 %v181, %v181
    %v267 = vmul.f32 %v184, %v184
    %v268 = vmul.f32 %v189, %v189
    %v269 = vmul.f32 %v192, %v192
    %v270 = vmul.f32 %v197, %v197
    %v271 = vmul.f32 %v200, %v200
    %v272 = vmul.f32 %v205, %v205
    %v273 = vmul.f32 %v208, %v208
    %v274 = vmul.f32 %v213, %v213
    %v275 = vmul.f32 %v216, %v216
    %v276 = vmul.f32 %v221, %v221
    %v277 = vmul.f32 %v224, %v224
    %v278 = vmul.f32 %v229, %v229
    %v279 = vmul.f32 %v232, %v232
    %v280 = vmul.f32 %v237, %v237
    %v281 = vmul.f32 %v240, %v240
    %v282 = vadd.f32 %v266, %v267
    %v283 = vadd.f32 %v282, %v268
    %v284 = vadd.f32 %v283, %v269
    %v285 = vadd.f32 %v284, %v270
    %v286 = vadd.f32 %v285, %v271
    %v287 = vadd.f32 %v286, %v272
    %v288 = vadd.f32 %v287, %v273
    %v289 = vadd.f32 %v288, %v274
    %v290 = vadd.f32 %v289, %v275
    %v291 = vadd.f32 %v290, %v276
    %v292 = vadd.f32 %v291, %v277
    %v293 = vadd.f32 %v292, %v278
    %v294 = vadd.f32 %v293, %v279
    %v295 = vadd.f32 %v294, %v280
    %v296 = vadd.f32 %v295, %v281
    %v297 = vrot.slane %v296, 4
    %v298 = vadd.f32 %v296, %v297
    %v299 = vrot.slane %v298, 2
    %v300 = vadd.f32 %v298, %v299
    %v301 = vrot.slane %v300, 1
    %v302 = vadd.f32 %v300, %v301
    %v303 = vmul.f32 %v302, %v264
    %v304 = vmul.f32 %v265, %v265
    %v305 = vsub.f32 %v303, %v304
    %v306 = vadd.f32 %v305, 1e-05
    %v307 = vrsqrt.pop %v306
    %v308 = vmul.f32 %v89, %v307
    %v309 = vmul.f32 %v265, %v308
    %v311 = vrot.slane %v309, 7
    %v313 = vsub.f32 %v89, %v311
    %v314 = vlaneseq
    %v315 = vshrl.u32 %v314, 7
    %v316 = vsub.s32 0, %v315
    %v317 = vrot.slane %v308, %v316
    %v318 = vmul.f32 %v181, %v317
    %v319 = vmul.f32 %v184, %v317
    %v320 = vmul.f32 %v189, %v317
    %v321 = vmul.f32 %v192, %v317
    %v322 = vmul.f32 %v197, %v317
    %v323 = vmul.f32 %v200, %v317
    %v324 = vmul.f32 %v205, %v317
    %v325 = vmul.f32 %v208, %v317
    %v326 = vmul.f32 %v213, %v317
    %v327 = vmul.f32 %v216, %v317
    %v328 = vmul.f32 %v221, %v317
    %v329 = vmul.f32 %v224, %v317
    %v330 = vmul.f32 %v229, %v317
    %v331 = vmul.f32 %v232, %v317
    %v332 = vmul.f32 %v237, %v317
    %v333 = vmul.f32 %v240, %v317
    %v334 = vlaneseq
    %v335 = vshrl.u32 %v334, 7
    %v336 = vsub.s32 1, %v335
    %v337 = vrot.slane %v313, %v336
    %v338 = vadd.f32 %v318, %v337
    %v339 = vadd.f32 %v319, %v337
    %v340 = vadd.f32 %v320, %v337
    %v341 = vadd.f32 %v321, %v337
    %v342 = vadd.f32 %v322, %v337
    %v343 = vadd.f32 %v323, %v337
    %v344 = vadd.f32 %v324, %v337
    %v345 = vadd.f32 %v325, %v337
    %v346 = vadd.f32 %v326, %v337
    %v347 = vadd.f32 %v327, %v337
    %v348 = vadd.f32 %v328, %v337
    %v349 = vadd.f32 %v329, %v337
    %v350 = vadd.f32 %v330, %v337
    %v351 = vadd.f32 %v331, %v337
    %v352 = vadd.f32 %v332, %v337
    %v353 = vadd.f32 %v333, %v337
    %v354 = vmul.f32 %v338, 0.01
    %v355 = vmul.f32 %v339, 0.01
    %v356 = vmul.f32 %v340, 0.01
    %v357 = vmul.f32 %v341, 0.01
    %v358 = vmul.f32 %v342, 0.01
    %v359 = vmul.f32 %v343, 0.01
    %v360 = vmul.f32 %v344, 0.01
    %v361 = vmul.f32 %v345, 0.01
    %v362 = vmul.f32 %v346, 0.01
    %v363 = vmul.f32 %v347, 0.01
    %v364 = vmul.f32 %v348, 0.01
    %v365 = vmul.f32 %v349, 0.01
    %v366 = vmul.f32 %v350, 0.01
    %v367 = vmul.f32 %v351, 0.01
    %v368 = vmul.f32 %v352, 0.01
    %v369 = vmul.f32 %v353, 0.01
    %v370 = vmax.f32 %v338, %v354
    %v371 = vmax.f32 %v339, %v355
    %v372 = vmax.f32 %v340, %v356
    %v373 = vmax.f32 %v341, %v357
    %v374 = vmax.f32 %v342, %v358
    %v375 = vmax.f32 %v343, %v359
    %v376 = vmax.f32 %v344, %v360
    %v377 = vmax.f32 %v345, %v361
    %v378 = vmax.f32 %v346, %v362
    %v379 = vmax.f32 %v347, %v363
    %v380 = vmax.f32 %v348, %v364
    %v381 = vmax.f32 %v349, %v365
    %v382 = vmax.f32 %v350, %v366
    %v383 = vmax.f32 %v351, %v367
    %v384 = vmax.f32 %v352, %v368
    %v385 = vmax.f32 %v353, %v369
    %s386 = scalar_lea.vmem [#allocation5], 64
    %v387 = vld [vmem:[%s386] sm:$0xf]
    %v388 = vld [vmem:[%s386 + $0x4] sm:$0xf]
    %v389 = vld [vmem:[%s386 + $0x8] sm:$0xf]
    %v390 = vld [vmem:[%s386 + $0xc] sm:$0xf]
    %v391 = vld [vmem:[%s386 + $0x10] sm:$0xf]
    %v392 = vld [vmem:[%s386 + $0x14] sm:$0xf]
    %v393 = vld [vmem:[%s386 + $0x18] sm:$0xf]
    %v394 = vld [vmem:[%s386 + $0x1c] sm:$0xf]
    %v395 = vld [vmem:[%s386 + $0x20] sm:$0xf]
    %v396 = vld [vmem:[%s386 + $0x24] sm:$0xf]
    %v397 = vld [vmem:[%s386 + $0x28] sm:$0xf]
    %v398 = vld [vmem:[%s386 + $0x2c] sm:$0xf]
    %v399 = vld [vmem:[%s386 + $0x30] sm:$0xf]
    %v400 = vld [vmem:[%s386 + $0x34] sm:$0xf]
    %v401 = vld [vmem:[%s386 + $0x38] sm:$0xf]
    %v402 = vld [vmem:[%s386 + $0x3c] sm:$0xf]
    %s403 = scalar_lea.vmem [#allocation7], 8
    %v404 = vld [vmem:[%s403] sm:$0xff]
    %v405 = vpack.c.bf16 %v371, %v370
    %v406 = vpack.c.bf16 %v373, %v372
    %v407 = vpack.c.bf16 %v375, %v374
    %v408 = vpack.c.bf16 %v377, %v376
    %v409 = vpack.c.bf16 %v379, %v378
    %v410 = vpack.c.bf16 %v381, %v380
    %v411 = vpack.c.bf16 %v383, %v382
    %v412 = vpack.c.bf16 %v385, %v384
    %v429 = vunpack.c.l.b16 %v387
    %v430 = vunpack.c.l.b16 %v388
    %v431 = vunpack.c.l.b16 %v389
    %v432 = vunpack.c.l.b16 %v390
    %v433 = vunpack.c.l.b16 %v391
    %v434 = vunpack.c.l.b16 %v392
    %v435 = vunpack.c.l.b16 %v393
    %v436 = vunpack.c.l.b16 %v394
    %v437 = vunpack.c.l.b16 %v395
    %v438 = vunpack.c.l.b16 %v396
    %v439 = vunpack.c.l.b16 %v397
    %v440 = vunpack.c.l.b16 %v398
    %v441 = vunpack.c.l.b16 %v399
    %v442 = vunpack.c.l.b16 %v400
    %v443 = vunpack.c.l.b16 %v401
    %v444 = vunpack.c.l.b16 %v402
    %v445 = vpack.c.b16 %v430, %v429
    %v446 = vpack.c.b16 %v432, %v431
    %v447 = vpack.c.b16 %v434, %v433
    %v448 = vpack.c.b16 %v436, %v435
    %v449 = vpack.c.b16 %v438, %v437
    %v450 = vpack.c.b16 %v440, %v439
    %v451 = vpack.c.b16 %v442, %v441
    %v452 = vpack.c.b16 %v444, %v443
    %461 = vmatprep.subr.bf16.mxu0 0
    %462 = vmatpush1.bf16.msra.mxu0 %v445
    %463 = vmatprep.subr.bf16.mxu0 0
    %464 = vmatpush1.bf16.msra.mxu0 %v446
    %465 = vmatprep.subr.bf16.mxu0 0
    %466 = vmatpush1.bf16.msra.mxu0 %v447
    %467 = vmatprep.subr.bf16.mxu0 0
    %468 = vmatpush1.bf16.msra.mxu0 %v448
    %469 = vmatprep.subr.bf16.mxu0 0
    %470 = vmatpush1.bf16.msra.mxu0 %v449
    %471 = vmatprep.subr.bf16.mxu0 0
    %472 = vmatpush1.bf16.msra.mxu0 %v450
    %473 = vmatprep.subr.bf16.mxu0 0
    %474 = vmatpush1.bf16.msra.mxu0 %v451
    %475 = vmatprep.subr.bf16.mxu0 0
    %476 = vmatpush1.bf16.msra.mxu0 %v452
    %477 = vmatprep.subr.bf16.mxu0 0
    %478 = vmatpush1.bf16.msra.mxu0 0
    %479 = vmatprep.subr.bf16.mxu0 0
    %480 = vmatpush1.bf16.msra.mxu0 0
    %481 = vmatprep.subr.bf16.mxu0 0
    %482 = vmatpush1.bf16.msra.mxu0 0
    %483 = vmatprep.subr.bf16.mxu0 0
    %484 = vmatpush1.bf16.msra.mxu0 0
    %485 = vmatprep.subr.bf16.mxu0 0
    %486 = vmatpush1.bf16.msra.mxu0 0
    %487 = vmatprep.subr.bf16.mxu0 0
    %488 = vmatpush1.bf16.msra.mxu0 0
    %489 = vmatprep.subr.bf16.mxu0 0
    %490 = vmatpush1.bf16.msra.mxu0 0
    %491 = vmatprep.subr.bf16.mxu0 0
    %492 = vmatpush1.bf16.msra.mxu0 0
    %493 = vmatprep.mubr.bf16.mxu0 0
    %494 = vmatmul.mubr.bf16.gmra.mrb[0].mxu0 %v405
    %v495 = vpop.f32.mrb[0].mxu0
    %v496 = vadd.f32 0.0, %v495
    %v497 = vpop.f32.mrb[0].mxu0
    %v498 = vpop.f32.mrb[0].mxu0
    %v499 = vadd.f32 0.0, %v498
    %v500 = vpop.f32.mrb[0].mxu0
    %501 = vmatprep.mubr.bf16.mxu0 0
    %502 = vmatmul.mubr.bf16.gmra.mrb[0].mxu0 %v406
    %v503 = vpop.f32.mrb[0].mxu0
    %v504 = vadd.f32 0.0, %v503
    %v505 = vpop.f32.mrb[0].mxu0
    %v506 = vpop.f32.mrb[0].mxu0
    %v507 = vadd.f32 0.0, %v506
    %v508 = vpop.f32.mrb[0].mxu0
    %509 = vmatprep.mubr.bf16.mxu0 0
    %510 = vmatmul.mubr.bf16.gmra.mrb[0].mxu0 %v407
    %v511 = vpop.f32.mrb[0].mxu0
    %v512 = vadd.f32 0.0, %v511
    %v513 = vpop.f32.mrb[0].mxu0
    %v514 = vpop.f32.mrb[0].mxu0
    %v515 = vadd.f32 0.0, %v514
    %v516 = vpop.f32.mrb[0].mxu0
    %517 = vmatprep.mubr.bf16.mxu0 0
    %518 = vmatmul.mubr.bf16.gmra.mrb[0].mxu0 %v408
    %v519 = vpop.f32.mrb[0].mxu0
    %v520 = vadd.f32 0.0, %v519
    %v521 = vpop.f32.mrb[0].mxu0
    %v522 = vpop.f32.mrb[0].mxu0
    %v523 = vadd.f32 0.0, %v522
    %v524 = vpop.f32.mrb[0].mxu0
    %525 = vmatprep.mubr.bf16.mxu0 0
    %526 = vmatmul.mubr.bf16.gmra.mrb[0].mxu0 %v409
    %v527 = vpop.f32.mrb[0].mxu0
    %v528 = vadd.f32 0.0, %v527
    %v529 = vpop.f32.mrb[0].mxu0
    %v530 = vpop.f32.mrb[0].mxu0
    %v531 = vadd.f32 0.0, %v530
    %v532 = vpop.f32.mrb[0].mxu0
    %533 = vmatprep.mubr.bf16.mxu0 0
    %534 = vmatmul.mubr.bf16.gmra.mrb[0].mxu0 %v410
    %v535 = vpop.f32.mrb[0].mxu0
    %v536 = vadd.f32 0.0, %v535
    %v537 = vpop.f32.mrb[0].mxu0
    %v538 = vpop.f32.mrb[0].mxu0
    %v539 = vadd.f32 0.0, %v538
    %v540 = vpop.f32.mrb[0].mxu0
    %541 = vmatprep.mubr.bf16.mxu0 0
    %542 = vmatmul.mubr.bf16.gmra.mrb[0].mxu0 %v411
    %v543 = vpop.f32.mrb[0].mxu0
    %v544 = vadd.f32 0.0, %v543
    %v545 = vpop.f32.mrb[0].mxu0
    %v546 = vpop.f32.mrb[0].mxu0
    %v547 = vadd.f32 0.0, %v546
    %v548 = vpop.f32.mrb[0].mxu0
    %549 = vmatprep.mubr.bf16.mxu0 0
    %550 = vmatmul.mubr.bf16.gmra.mrb[0].mxu0 %v412
    %v551 = vpop.f32.mrb[0].mxu0
    %v552 = vadd.f32 0.0, %v551
    %v553 = vpop.f32.mrb[0].mxu0
    %v554 = vpop.f32.mrb[0].mxu0
    %v555 = vadd.f32 0.0, %v554
    %v556 = vpop.f32.mrb[0].mxu0
    %557 = vdwg.mxu0
    %v558 = vadd.f32 %v496, %v499
    %v559 = vadd.f32 %v558, %v504
    %v560 = vadd.f32 %v559, %v507
    %v561 = vadd.f32 %v560, %v512
    %v562 = vadd.f32 %v561, %v515
    %v563 = vadd.f32 %v562, %v520
    %v564 = vadd.f32 %v563, %v523
    %v565 = vadd.f32 %v564, %v528
    %v566 = vadd.f32 %v565, %v531
    %v567 = vadd.f32 %v566, %v536
    %v568 = vadd.f32 %v567, %v539
    %v569 = vadd.f32 %v568, %v544
    %v570 = vadd.f32 %v569, %v547
    %v571 = vadd.f32 %v570, %v552
    %v572 = vadd.f32 %v571, %v555
    %v573 = vrot.slane %v572, 4
    %v574 = vadd.f32 %v572, %v573
    %v575 = vrot.slane %v574, 2
    %v576 = vadd.f32 %v574, %v575
    %v577 = vrot.slane %v576, 1
    %v578 = vadd.f32 %v576, %v577
    %v579 = vmul.f32 %v578, %v264
    %v580 = vmul.f32 %v496, %v496
    %v581 = vmul.f32 %v499, %v499
    %v582 = vmul.f32 %v504, %v504
    %v583 = vmul.f32 %v507, %v507
    %v584 = vmul.f32 %v512, %v512
    %v585 = vmul.f32 %v515, %v515
    %v586 = vmul.f32 %v520, %v520
    %v587 = vmul.f32 %v523, %v523
    %v588 = vmul.f32 %v528, %v528
    %v589 = vmul.f32 %v531, %v531
    %v590 = vmul.f32 %v536, %v536
    %v591 = vmul.f32 %v539, %v539
    %v592 = vmul.f32 %v544, %v544
    %v593 = vmul.f32 %v547, %v547
    %v594 = vmul.f32 %v552, %v552
    %v595 = vmul.f32 %v555, %v555
    %v596 = vadd.f32 %v580, %v581
    %v597 = vadd.f32 %v596, %v582
    %v598 = vadd.f32 %v597, %v583
    %v599 = vadd.f32 %v598, %v584
    %v600 = vadd.f32 %v599, %v585
    %v601 = vadd.f32 %v600, %v586
    %v602 = vadd.f32 %v601, %v587
    %v603 = vadd.f32 %v602, %v588
    %v604 = vadd.f32 %v603, %v589
    %v605 = vadd.f32 %v604, %v590
    %v606 = vadd.f32 %v605, %v591
    %v607 = vadd.f32 %v606, %v592
    %v608 = vadd.f32 %v607, %v593
    %v609 = vadd.f32 %v608, %v594
    %v610 = vadd.f32 %v609, %v595
    %v611 = vrot.slane %v610, 4
    %v612 = vadd.f32 %v610, %v611
    %v613 = vrot.slane %v612, 2
    %v614 = vadd.f32 %v612, %v613
    %v615 = vrot.slane %v614, 1
    %v616 = vadd.f32 %v614, %v615
    %v617 = vmul.f32 %v616, %v264
    %v618 = vmul.f32 %v579, %v579
    %v619 = vsub.f32 %v617, %v618
    %v620 = vadd.f32 %v619, 1e-05
    %v621 = vrsqrt.pop %v620
    %v622 = vmul.f32 %v404, %v621
    %v623 = vmul.f32 %v579, %v622
    %v625 = vrot.slane %v623, 7
    %v627 = vsub.f32 %v404, %v625
    %v628 = vlaneseq
    %v629 = vshrl.u32 %v628, 7
    %v630 = vsub.s32 0, %v629
    %v631 = vrot.slane %v622, %v630
    %v632 = vmul.f32 %v496, %v631
    %v633 = vmul.f32 %v499, %v631
    %v634 = vmul.f32 %v504, %v631
    %v635 = vmul.f32 %v507, %v631
    %v636 = vmul.f32 %v512, %v631
    %v637 = vmul.f32 %v515, %v631
    %v638 = vmul.f32 %v520, %v631
    %v639 = vmul.f32 %v523, %v631
    %v640 = vmul.f32 %v528, %v631
    %v641 = vmul.f32 %v531, %v631
    %v642 = vmul.f32 %v536, %v631
    %v643 = vmul.f32 %v539, %v631
    %v644 = vmul.f32 %v544, %v631
    %v645 = vmul.f32 %v547, %v631
    %v646 = vmul.f32 %v552, %v631
    %v647 = vmul.f32 %v555, %v631
    %v648 = vlaneseq
    %v649 = vshrl.u32 %v648, 7
    %v650 = vsub.s32 1, %v649
    %v651 = vrot.slane %v627, %v650
    %v652 = vadd.f32 %v632, %v651
    %v653 = vadd.f32 %v633, %v651
    %v654 = vadd.f32 %v634, %v651
    %v655 = vadd.f32 %v635, %v651
    %v656 = vadd.f32 %v636, %v651
    %v657 = vadd.f32 %v637, %v651
    %v658 = vadd.f32 %v638, %v651
    %v659 = vadd.f32 %v639, %v651
    %v660 = vadd.f32 %v640, %v651
    %v661 = vadd.f32 %v641, %v651
    %v662 = vadd.f32 %v642, %v651
    %v663 = vadd.f32 %v643, %v651
    %v664 = vadd.f32 %v644, %v651
    %v665 = vadd.f32 %v645, %v651
    %v666 = vadd.f32 %v646, %v651
    %v667 = vadd.f32 %v647, %v651
    %v668 = vmul.f32 %v652, 0.01
    %v669 = vmul.f32 %v653, 0.01
    %v670 = vmul.f32 %v654, 0.01
    %v671 = vmul.f32 %v655, 0.01
    %v672 = vmul.f32 %v656, 0.01
    %v673 = vmul.f32 %v657, 0.01
    %v674 = vmul.f32 %v658, 0.01
    %v675 = vmul.f32 %v659, 0.01
    %v676 = vmul.f32 %v660, 0.01
    %v677 = vmul.f32 %v661, 0.01
    %v678 = vmul.f32 %v662, 0.01
    %v679 = vmul.f32 %v663, 0.01
    %v680 = vmul.f32 %v664, 0.01
    %v681 = vmul.f32 %v665, 0.01
    %v682 = vmul.f32 %v666, 0.01
    %v683 = vmul.f32 %v667, 0.01
    %v684 = vmax.f32 %v652, %v668
    %v685 = vmax.f32 %v653, %v669
    %v686 = vmax.f32 %v654, %v670
    %v687 = vmax.f32 %v655, %v671
    %v688 = vmax.f32 %v656, %v672
    %v689 = vmax.f32 %v657, %v673
    %v690 = vmax.f32 %v658, %v674
    %v691 = vmax.f32 %v659, %v675
    %v692 = vmax.f32 %v660, %v676
    %v693 = vmax.f32 %v661, %v677
    %v694 = vmax.f32 %v662, %v678
    %v695 = vmax.f32 %v663, %v679
    %v696 = vmax.f32 %v664, %v680
    %v697 = vmax.f32 %v665, %v681
    %v698 = vmax.f32 %v666, %v682
    %v699 = vmax.f32 %v667, %v683
    %s700 = scalar_lea.vmem [#allocation5], 128
    %v701 = vld [vmem:[%s700] sm:$0xf]
    %v702 = vld [vmem:[%s700 + $0x4] sm:$0xf]
    %v703 = vld [vmem:[%s700 + $0x8] sm:$0xf]
    %v704 = vld [vmem:[%s700 + $0xc] sm:$0xf]
    %v705 = vld [vmem:[%s700 + $0x10] sm:$0xf]
    %v706 = vld [vmem:[%s700 + $0x14] sm:$0xf]
    %v707 = vld [vmem:[%s700 + $0x18] sm:$0xf]
    %v708 = vld [vmem:[%s700 + $0x1c] sm:$0xf]
    %v709 = vld [vmem:[%s700 + $0x20] sm:$0xf]
    %v710 = vld [vmem:[%s700 + $0x24] sm:$0xf]
    %v711 = vld [vmem:[%s700 + $0x28] sm:$0xf]
    %v712 = vld [vmem:[%s700 + $0x2c] sm:$0xf]
    %v713 = vld [vmem:[%s700 + $0x30] sm:$0xf]
    %v714 = vld [vmem:[%s700 + $0x34] sm:$0xf]
    %v715 = vld [vmem:[%s700 + $0x38] sm:$0xf]
    %v716 = vld [vmem:[%s700 + $0x3c] sm:$0xf]
    %s717 = scalar_lea.vmem [#allocation7], 16
    %v718 = vld [vmem:[%s717] sm:$0xff]
    %v719 = vpack.c.bf16 %v685, %v684
    %v720 = vpack.c.bf16 %v687, %v686
    %v721 = vpack.c.bf16 %v689, %v688
    %v722 = vpack.c.bf16 %v691, %v690
    %v723 = vpack.c.bf16 %v693, %v692
    %v724 = vpack.c.bf16 %v695, %v694
    %v725 = vpack.c.bf16 %v697, %v696
    %v726 = vpack.c.bf16 %v699, %v698
    %v743 = vunpack.c.l.b16 %v701
    %v744 = vunpack.c.l.b16 %v702
    %v745 = vunpack.c.l.b16 %v703
    %v746 = vunpack.c.l.b16 %v704
    %v747 = vunpack.c.l.b16 %v705
    %v748 = vunpack.c.l.b16 %v706
    %v749 = vunpack.c.l.b16 %v707
    %v750 = vunpack.c.l.b16 %v708
    %v751 = vunpack.c.l.b16 %v709
    %v752 = vunpack.c.l.b16 %v710
    %v753 = vunpack.c.l.b16 %v711
    %v754 = vunpack.c.l.b16 %v712
    %v755 = vunpack.c.l.b16 %v713
    %v756 = vunpack.c.l.b16 %v714
    %v757 = vunpack.c.l.b16 %v715
    %v758 = vunpack.c.l.b16 %v716
    %v759 = vpack.c.b16 %v744, %v743
    %v760 = vpack.c.b16 %v746, %v745
    %v761 = vpack.c.b16 %v748, %v747
    %v762 = vpack.c.b16 %v750, %v749
    %v763 = vpack.c.b16 %v752, %v751
    %v764 = vpack.c.b16 %v754, %v753
    %v765 = vpack.c.b16 %v756, %v755
    %v766 = vpack.c.b16 %v758, %v757
    %775 = vmatprep.subr.bf16.mxu0 0
    %776 = vmatpush1.bf16.msra.mxu0 %v759
    %777 = vmatprep.subr.bf16.mxu0 0
    %778 = vmatpush1.bf16.msra.mxu0 %v760
    %779 = vmatprep.subr.bf16.mxu0 0
    %780 = vmatpush1.bf16.msra.mxu0 %v761
    %781 = vmatprep.subr.bf16.mxu0 0
    %782 = vmatpush1.bf16.msra.mxu0 %v762
    %783 = vmatprep.subr.bf16.mxu0 0
    %784 = vmatpush1.bf16.msra.mxu0 %v763
    %785 = vmatprep.subr.bf16.mxu0 0
    %786 = vmatpush1.bf16.msra.mxu0 %v764
    %787 = vmatprep.subr.bf16.mxu0 0
    %788 = vmatpush1.bf16.msra.mxu0 %v765
    %789 = vmatprep.subr.bf16.mxu0 0
    %790 = vmatpush1.bf16.msra.mxu0 %v766
    %791 = vmatprep.subr.bf16.mxu0 0
    %792 = vmatpush1.bf16.msra.mxu0 0
    %793 = vmatprep.subr.bf16.mxu0 0
    %794 = vmatpush1.bf16.msra.mxu0 0
    %795 = vmatprep.subr.bf16.mxu0 0
    %796 = vmatpush1.bf16.msra.mxu0 0
    %797 = vmatprep.subr.bf16.mxu0 0
    %798 = vmatpush1.bf16.msra.mxu0 0
    %799 = vmatprep.subr.bf16.mxu0 0
    %800 = vmatpush1.bf16.msra.mxu0 0
    %801 = vmatprep.subr.bf16.mxu0 0
    %802 = vmatpush1.bf16.msra.mxu0 0
    %803 = vmatprep.subr.bf16.mxu0 0
    %804 = vmatpush1.bf16.msra.mxu0 0
    %805 = vmatprep.subr.bf16.mxu0 0
    %806 = vmatpush1.bf16.msra.mxu0 0
    %807 = vmatprep.mubr.bf16.mxu0 0
    %808 = vmatmul.mubr.bf16.gmra.mrb[0].mxu0 %v719
    %v809 = vpop.f32.mrb[0].mxu0
    %v810 = vadd.f32 0.0, %v809
    %v811 = vpop.f32.mrb[0].mxu0
    %v812 = vpop.f32.mrb[0].mxu0
    %v813 = vadd.f32 0.0, %v812
    %v814 = vpop.f32.mrb[0].mxu0
    %815 = vmatprep.mubr.bf16.mxu0 0
    %816 = vmatmul.mubr.bf16.gmra.mrb[0].mxu0 %v720
    %v817 = vpop.f32.mrb[0].mxu0
    %v818 = vadd.f32 0.0, %v817
    %v819 = vpop.f32.mrb[0].mxu0
    %v820 = vpop.f32.mrb[0].mxu0
    %v821 = vadd.f32 0.0, %v820
    %v822 = vpop.f32.mrb[0].mxu0
    %823 = vmatprep.mubr.bf16.mxu0 0
    %824 = vmatmul.mubr.bf16.gmra.mrb[0].mxu0 %v721
    %v825 = vpop.f32.mrb[0].mxu0
    %v826 = vadd.f32 0.0, %v825
    %v827 = vpop.f32.mrb[0].mxu0
    %v828 = vpop.f32.mrb[0].mxu0
    %v829 = vadd.f32 0.0, %v828
    %v830 = vpop.f32.mrb[0].mxu0
    %831 = vmatprep.mubr.bf16.mxu0 0
    %832 = vmatmul.mubr.bf16.gmra.mrb[0].mxu0 %v722
    %v833 = vpop.f32.mrb[0].mxu0
    %v834 = vadd.f32 0.0, %v833
    %v835 = vpop.f32.mrb[0].mxu0
    %v836 = vpop.f32.mrb[0].mxu0
    %v837 = vadd.f32 0.0, %v836
    %v838 = vpop.f32.mrb[0].mxu0
    %839 = vmatprep.mubr.bf16.mxu0 0
    %840 = vmatmul.mubr.bf16.gmra.mrb[0].mxu0 %v723
    %v841 = vpop.f32.mrb[0].mxu0
    %v842 = vadd.f32 0.0, %v841
    %v843 = vpop.f32.mrb[0].mxu0
    %v844 = vpop.f32.mrb[0].mxu0
    %v845 = vadd.f32 0.0, %v844
    %v846 = vpop.f32.mrb[0].mxu0
    %847 = vmatprep.mubr.bf16.mxu0 0
    %848 = vmatmul.mubr.bf16.gmra.mrb[0].mxu0 %v724
    %v849 = vpop.f32.mrb[0].mxu0
    %v850 = vadd.f32 0.0, %v849
    %v851 = vpop.f32.mrb[0].mxu0
    %v852 = vpop.f32.mrb[0].mxu0
    %v853 = vadd.f32 0.0, %v852
    %v854 = vpop.f32.mrb[0].mxu0
    %855 = vmatprep.mubr.bf16.mxu0 0
    %856 = vmatmul.mubr.bf16.gmra.mrb[0].mxu0 %v725
    %v857 = vpop.f32.mrb[0].mxu0
    %v858 = vadd.f32 0.0, %v857
    %v859 = vpop.f32.mrb[0].mxu0
    %v860 = vpop.f32.mrb[0].mxu0
    %v861 = vadd.f32 0.0, %v860
    %v862 = vpop.f32.mrb[0].mxu0
    %863 = vmatprep.mubr.bf16.mxu0 0
    %864 = vmatmul.mubr.bf16.gmra.mrb[0].mxu0 %v726
    %v865 = vpop.f32.mrb[0].mxu0
    %v866 = vadd.f32 0.0, %v865
    %v867 = vpop.f32.mrb[0].mxu0
    %v868 = vpop.f32.mrb[0].mxu0
    %v869 = vadd.f32 0.0, %v868
    %v870 = vpop.f32.mrb[0].mxu0
    %871 = vdwg.mxu0
    %v872 = vadd.f32 %v810, %v813
    %v873 = vadd.f32 %v872, %v818
    %v874 = vadd.f32 %v873, %v821
    %v875 = vadd.f32 %v874, %v826
    %v876 = vadd.f32 %v875, %v829
    %v877 = vadd.f32 %v876, %v834
    %v878 = vadd.f32 %v877, %v837
    %v879 = vadd.f32 %v878, %v842
    %v880 = vadd.f32 %v879, %v845
    %v881 = vadd.f32 %v880, %v850
    %v882 = vadd.f32 %v881, %v853
    %v883 = vadd.f32 %v882, %v858
    %v884 = vadd.f32 %v883, %v861
    %v885 = vadd.f32 %v884, %v866
    %v886 = vadd.f32 %v885, %v869
    %v887 = vrot.slane %v886, 4
    %v888 = vadd.f32 %v886, %v887
    %v889 = vrot.slane %v888, 2
    %v890 = vadd.f32 %v888, %v889
    %v891 = vrot.slane %v890, 1
    %v892 = vadd.f32 %v890, %v891
    %v893 = vmul.f32 %v892, %v264
    %v894 = vmul.f32 %v810, %v810
    %v895 = vmul.f32 %v813, %v813
    %v896 = vmul.f32 %v818, %v818
    %v897 = vmul.f32 %v821, %v821
    %v898 = vmul.f32 %v826, %v826
    %v899 = vmul.f32 %v829, %v829
    %v900 = vmul.f32 %v834, %v834
    %v901 = vmul.f32 %v837, %v837
    %v902 = vmul.f32 %v842, %v842
    %v903 = vmul.f32 %v845, %v845
    %v904 = vmul.f32 %v850, %v850
    %v905 = vmul.f32 %v853, %v853
    %v906 = vmul.f32 %v858, %v858
    %v907 = vmul.f32 %v861, %v861
    %v908 = vmul.f32 %v866, %v866
    %v909 = vmul.f32 %v869, %v869
    %v910 = vadd.f32 %v894, %v895
    %v911 = vadd.f32 %v910, %v896
    %v912 = vadd.f32 %v911, %v897
    %v913 = vadd.f32 %v912, %v898
    %v914 = vadd.f32 %v913, %v899
    %v915 = vadd.f32 %v914, %v900
    %v916 = vadd.f32 %v915, %v901
    %v917 = vadd.f32 %v916, %v902
    %v918 = vadd.f32 %v917, %v903
    %v919 = vadd.f32 %v918, %v904
    %v920 = vadd.f32 %v919, %v905
    %v921 = vadd.f32 %v920, %v906
    %v922 = vadd.f32 %v921, %v907
    %v923 = vadd.f32 %v922, %v908
    %v924 = vadd.f32 %v923, %v909
    %v925 = vrot.slane %v924, 4
    %v926 = vadd.f32 %v924, %v925
    %v927 = vrot.slane %v926, 2
    %v928 = vadd.f32 %v926, %v927
    %v929 = vrot.slane %v928, 1
    %v930 = vadd.f32 %v928, %v929
    %v931 = vmul.f32 %v930, %v264
    %v932 = vmul.f32 %v893, %v893
    %v933 = vsub.f32 %v931, %v932
    %v934 = vadd.f32 %v933, 1e-05
    %v935 = vrsqrt.pop %v934
    %v936 = vmul.f32 %v718, %v935
    %v937 = vmul.f32 %v893, %v936
    %v939 = vrot.slane %v937, 7
    %v941 = vsub.f32 %v718, %v939
    %v942 = vlaneseq
    %v943 = vshrl.u32 %v942, 7
    %v944 = vsub.s32 0, %v943
    %v945 = vrot.slane %v936, %v944
    %v946 = vmul.f32 %v810, %v945
    %v947 = vmul.f32 %v813, %v945
    %v948 = vmul.f32 %v818, %v945
    %v949 = vmul.f32 %v821, %v945
    %v950 = vmul.f32 %v826, %v945
    %v951 = vmul.f32 %v829, %v945
    %v952 = vmul.f32 %v834, %v945
    %v953 = vmul.f32 %v837, %v945
    %v954 = vmul.f32 %v842, %v945
    %v955 = vmul.f32 %v845, %v945
    %v956 = vmul.f32 %v850, %v945
    %v957 = vmul.f32 %v853, %v945
    %v958 = vmul.f32 %v858, %v945
    %v959 = vmul.f32 %v861, %v945
    %v960 = vmul.f32 %v866, %v945
    %v961 = vmul.f32 %v869, %v945
    %v962 = vlaneseq
    %v963 = vshrl.u32 %v962, 7
    %v964 = vsub.s32 1, %v963
    %v965 = vrot.slane %v941, %v964
    %v966 = vadd.f32 %v946, %v965
    %v967 = vadd.f32 %v947, %v965
    %v968 = vadd.f32 %v948, %v965
    %v969 = vadd.f32 %v949, %v965
    %v970 = vadd.f32 %v950, %v965
    %v971 = vadd.f32 %v951, %v965
    %v972 = vadd.f32 %v952, %v965
    %v973 = vadd.f32 %v953, %v965
    %v974 = vadd.f32 %v954, %v965
    %v975 = vadd.f32 %v955, %v965
    %v976 = vadd.f32 %v956, %v965
    %v977 = vadd.f32 %v957, %v965
    %v978 = vadd.f32 %v958, %v965
    %v979 = vadd.f32 %v959, %v965
    %v980 = vadd.f32 %v960, %v965
    %v981 = vadd.f32 %v961, %v965
    %v982 = vmul.f32 %v966, 0.01
    %v983 = vmul.f32 %v967, 0.01
    %v984 = vmul.f32 %v968, 0.01
    %v985 = vmul.f32 %v969, 0.01
    %v986 = vmul.f32 %v970, 0.01
    %v987 = vmul.f32 %v971, 0.01
    %v988 = vmul.f32 %v972, 0.01
    %v989 = vmul.f32 %v973, 0.01
    %v990 = vmul.f32 %v974, 0.01
    %v991 = vmul.f32 %v975, 0.01
    %v992 = vmul.f32 %v976, 0.01
    %v993 = vmul.f32 %v977, 0.01
    %v994 = vmul.f32 %v978, 0.01
    %v995 = vmul.f32 %v979, 0.01
    %v996 = vmul.f32 %v980, 0.01
    %v997 = vmul.f32 %v981, 0.01
    %v998 = vmax.f32 %v966, %v982
    %v999 = vmax.f32 %v967, %v983
    %v1000 = vmax.f32 %v968, %v984
    %v1001 = vmax.f32 %v969, %v985
    %v1002 = vmax.f32 %v970, %v986
    %v1003 = vmax.f32 %v971, %v987
    %v1004 = vmax.f32 %v972, %v988
    %v1005 = vmax.f32 %v973, %v989
    %v1006 = vmax.f32 %v974, %v990
    %v1007 = vmax.f32 %v975, %v991
    %v1008 = vmax.f32 %v976, %v992
    %v1009 = vmax.f32 %v977, %v993
    %v1010 = vmax.f32 %v978, %v994
    %v1011 = vmax.f32 %v979, %v995
    %v1012 = vmax.f32 %v980, %v996
    %v1013 = vmax.f32 %v981, %v997
    %s1014 = scalar_lea.vmem [#allocation5], 192
    %v1015 = vld [vmem:[%s1014] sm:$0xf]
    %v1016 = vld [vmem:[%s1014 + $0x4] sm:$0xf]
    %v1017 = vld [vmem:[%s1014 + $0x8] sm:$0xf]
    %v1018 = vld [vmem:[%s1014 + $0xc] sm:$0xf]
    %v1019 = vld [vmem:[%s1014 + $0x10] sm:$0xf]
    %v1020 = vld [vmem:[%s1014 + $0x14] sm:$0xf]
    %v1021 = vld [vmem:[%s1014 + $0x18] sm:$0xf]
    %v1022 = vld [vmem:[%s1014 + $0x1c] sm:$0xf]
    %v1023 = vld [vmem:[%s1014 + $0x20] sm:$0xf]
    %v1024 = vld [vmem:[%s1014 + $0x24] sm:$0xf]
    %v1025 = vld [vmem:[%s1014 + $0x28] sm:$0xf]
    %v1026 = vld [vmem:[%s1014 + $0x2c] sm:$0xf]
    %v1027 = vld [vmem:[%s1014 + $0x30] sm:$0xf]
    %v1028 = vld [vmem:[%s1014 + $0x34] sm:$0xf]
    %v1029 = vld [vmem:[%s1014 + $0x38] sm:$0xf]
    %v1030 = vld [vmem:[%s1014 + $0x3c] sm:$0xf]
    %s1031 = scalar_lea.vmem [#allocation7], 24
    %v1032 = vld [vmem:[%s1031] sm:$0xff]
    %v1033 = vpack.c.bf16 %v999, %v998
    %v1034 = vpack.c.bf16 %v1001, %v1000
    %v1035 = vpack.c.bf16 %v1003, %v1002
    %v1036 = vpack.c.bf16 %v1005, %v1004
    %v1037 = vpack.c.bf16 %v1007, %v1006
    %v1038 = vpack.c.bf16 %v1009, %v1008
    %v1039 = vpack.c.bf16 %v1011, %v1010
    %v1040 = vpack.c.bf16 %v1013, %v1012
    %v1057 = vunpack.c.l.b16 %v1015
    %v1058 = vunpack.c.l.b16 %v1016
    %v1059 = vunpack.c.l.b16 %v1017
    %v1060 = vunpack.c.l.b16 %v1018
    %v1061 = vunpack.c.l.b16 %v1019
    %v1062 = vunpack.c.l.b16 %v1020
    %v1063 = vunpack.c.l.b16 %v1021
    %v1064 = vunpack.c.l.b16 %v1022
    %v1065 = vunpack.c.l.b16 %v1023
    %v1066 = vunpack.c.l.b16 %v1024
    %v1067 = vunpack.c.l.b16 %v1025
    %v1068 = vunpack.c.l.b16 %v1026
    %v1069 = vunpack.c.l.b16 %v1027
    %v1070 = vunpack.c.l.b16 %v1028
    %v1071 = vunpack.c.l.b16 %v1029
    %v1072 = vunpack.c.l.b16 %v1030
    %v1073 = vpack.c.b16 %v1058, %v1057
    %v1074 = vpack.c.b16 %v1060, %v1059
    %v1075 = vpack.c.b16 %v1062, %v1061
    %v1076 = vpack.c.b16 %v1064, %v1063
    %v1077 = vpack.c.b16 %v1066, %v1065
    %v1078 = vpack.c.b16 %v1068, %v1067
    %v1079 = vpack.c.b16 %v1070, %v1069
    %v1080 = vpack.c.b16 %v1072, %v1071
    %1089 = vmatprep.subr.bf16.mxu0 0
    %1090 = vmatpush1.bf16.msra.mxu0 %v1073
    %1091 = vmatprep.subr.bf16.mxu0 0
    %1092 = vmatpush1.bf16.msra.mxu0 %v1074
    %1093 = vmatprep.subr.bf16.mxu0 0
    %1094 = vmatpush1.bf16.msra.mxu0 %v1075
    %1095 = vmatprep.subr.bf16.mxu0 0
    %1096 = vmatpush1.bf16.msra.mxu0 %v1076
    %1097 = vmatprep.subr.bf16.mxu0 0
    %1098 = vmatpush1.bf16.msra.mxu0 %v1077
    %1099 = vmatprep.subr.bf16.mxu0 0
    %1100 = vmatpush1.bf16.msra.mxu0 %v1078
    %1101 = vmatprep.subr.bf16.mxu0 0
    %1102 = vmatpush1.bf16.msra.mxu0 %v1079
    %1103 = vmatprep.subr.bf16.mxu0 0
    %1104 = vmatpush1.bf16.msra.mxu0 %v1080
    %1105 = vmatprep.subr.bf16.mxu0 0
    %1106 = vmatpush1.bf16.msra.mxu0 0
    %1107 = vmatprep.subr.bf16.mxu0 0
    %1108 = vmatpush1.bf16.msra.mxu0 0
    %1109 = vmatprep.subr.bf16.mxu0 0
    %1110 = vmatpush1.bf16.msra.mxu0 0
    %1111 = vmatprep.subr.bf16.mxu0 0
    %1112 = vmatpush1.bf16.msra.mxu0 0
    %1113 = vmatprep.subr.bf16.mxu0 0
    %1114 = vmatpush1.bf16.msra.mxu0 0
    %1115 = vmatprep.subr.bf16.mxu0 0
    %1116 = vmatpush1.bf16.msra.mxu0 0
    %1117 = vmatprep.subr.bf16.mxu0 0
    %1118 = vmatpush1.bf16.msra.mxu0 0
    %1119 = vmatprep.subr.bf16.mxu0 0
    %1120 = vmatpush1.bf16.msra.mxu0 0
    %1121 = vmatprep.mubr.bf16.mxu0 0
    %1122 = vmatmul.mubr.bf16.gmra.mrb[0].mxu0 %v1033
    %v1123 = vpop.f32.mrb[0].mxu0
    %v1124 = vadd.f32 0.0, %v1123
    %v1125 = vpop.f32.mrb[0].mxu0
    %v1126 = vpop.f32.mrb[0].mxu0
    %v1127 = vadd.f32 0.0, %v1126
    %v1128 = vpop.f32.mrb[0].mxu0
    %1129 = vmatprep.mubr.bf16.mxu0 0
    %1130 = vmatmul.mubr.bf16.gmra.mrb[0].mxu0 %v1034
    %v1131 = vpop.f32.mrb[0].mxu0
    %v1132 = vadd.f32 0.0, %v1131
    %v1133 = vpop.f32.mrb[0].mxu0
    %v1134 = vpop.f32.mrb[0].mxu0
    %v1135 = vadd.f32 0.0, %v1134
    %v1136 = vpop.f32.mrb[0].mxu0
    %1137 = vmatprep.mubr.bf16.mxu0 0
    %1138 = vmatmul.mubr.bf16.gmra.mrb[0].mxu0 %v1035
    %v1139 = vpop.f32.mrb[0].mxu0
    %v1140 = vadd.f32 0.0, %v1139
    %v1141 = vpop.f32.mrb[0].mxu0
    %v1142 = vpop.f32.mrb[0].mxu0
    %v1143 = vadd.f32 0.0, %v1142
    %v1144 = vpop.f32.mrb[0].mxu0
    %1145 = vmatprep.mubr.bf16.mxu0 0
    %1146 = vmatmul.mubr.bf16.gmra.mrb[0].mxu0 %v1036
    %v1147 = vpop.f32.mrb[0].mxu0
    %v1148 = vadd.f32 0.0, %v1147
    %v1149 = vpop.f32.mrb[0].mxu0
    %v1150 = vpop.f32.mrb[0].mxu0
    %v1151 = vadd.f32 0.0, %v1150
    %v1152 = vpop.f32.mrb[0].mxu0
    %1153 = vmatprep.mubr.bf16.mxu0 0
    %1154 = vmatmul.mubr.bf16.gmra.mrb[0].mxu0 %v1037
    %v1155 = vpop.f32.mrb[0].mxu0
    %v1156 = vadd.f32 0.0, %v1155
    %v1157 = vpop.f32.mrb[0].mxu0
    %v1158 = vpop.f32.mrb[0].mxu0
    %v1159 = vadd.f32 0.0, %v1158
    %v1160 = vpop.f32.mrb[0].mxu0
    %1161 = vmatprep.mubr.bf16.mxu0 0
    %1162 = vmatmul.mubr.bf16.gmra.mrb[0].mxu0 %v1038
    %v1163 = vpop.f32.mrb[0].mxu0
    %v1164 = vadd.f32 0.0, %v1163
    %v1165 = vpop.f32.mrb[0].mxu0
    %v1166 = vpop.f32.mrb[0].mxu0
    %v1167 = vadd.f32 0.0, %v1166
    %v1168 = vpop.f32.mrb[0].mxu0
    %1169 = vmatprep.mubr.bf16.mxu0 0
    %1170 = vmatmul.mubr.bf16.gmra.mrb[0].mxu0 %v1039
    %v1171 = vpop.f32.mrb[0].mxu0
    %v1172 = vadd.f32 0.0, %v1171
    %v1173 = vpop.f32.mrb[0].mxu0
    %v1174 = vpop.f32.mrb[0].mxu0
    %v1175 = vadd.f32 0.0, %v1174
    %v1176 = vpop.f32.mrb[0].mxu0
    %1177 = vmatprep.mubr.bf16.mxu0 0
    %1178 = vmatmul.mubr.bf16.gmra.mrb[0].mxu0 %v1040
    %v1179 = vpop.f32.mrb[0].mxu0
    %v1180 = vadd.f32 0.0, %v1179
    %v1181 = vpop.f32.mrb[0].mxu0
    %v1182 = vpop.f32.mrb[0].mxu0
    %v1183 = vadd.f32 0.0, %v1182
    %v1184 = vpop.f32.mrb[0].mxu0
    %1185 = vdwg.mxu0
    %v1186 = vadd.f32 %v1124, %v1127
    %v1187 = vadd.f32 %v1186, %v1132
    %v1188 = vadd.f32 %v1187, %v1135
    %v1189 = vadd.f32 %v1188, %v1140
    %v1190 = vadd.f32 %v1189, %v1143
    %v1191 = vadd.f32 %v1190, %v1148
    %v1192 = vadd.f32 %v1191, %v1151
    %v1193 = vadd.f32 %v1192, %v1156
    %v1194 = vadd.f32 %v1193, %v1159
    %v1195 = vadd.f32 %v1194, %v1164
    %v1196 = vadd.f32 %v1195, %v1167
    %v1197 = vadd.f32 %v1196, %v1172
    %v1198 = vadd.f32 %v1197, %v1175
    %v1199 = vadd.f32 %v1198, %v1180
    %v1200 = vadd.f32 %v1199, %v1183
    %v1201 = vrot.slane %v1200, 4
    %v1202 = vadd.f32 %v1200, %v1201
    %v1203 = vrot.slane %v1202, 2
    %v1204 = vadd.f32 %v1202, %v1203
    %v1205 = vrot.slane %v1204, 1
    %v1206 = vadd.f32 %v1204, %v1205
    %v1207 = vmul.f32 %v1206, %v264
    %v1208 = vmul.f32 %v1124, %v1124
    %v1209 = vmul.f32 %v1127, %v1127
    %v1210 = vmul.f32 %v1132, %v1132
    %v1211 = vmul.f32 %v1135, %v1135
    %v1212 = vmul.f32 %v1140, %v1140
    %v1213 = vmul.f32 %v1143, %v1143
    %v1214 = vmul.f32 %v1148, %v1148
    %v1215 = vmul.f32 %v1151, %v1151
    %v1216 = vmul.f32 %v1156, %v1156
    %v1217 = vmul.f32 %v1159, %v1159
    %v1218 = vmul.f32 %v1164, %v1164
    %v1219 = vmul.f32 %v1167, %v1167
    %v1220 = vmul.f32 %v1172, %v1172
    %v1221 = vmul.f32 %v1175, %v1175
    %v1222 = vmul.f32 %v1180, %v1180
    %v1223 = vmul.f32 %v1183, %v1183
    %v1224 = vadd.f32 %v1208, %v1209
    %v1225 = vadd.f32 %v1224, %v1210
    %v1226 = vadd.f32 %v1225, %v1211
    %v1227 = vadd.f32 %v1226, %v1212
    %v1228 = vadd.f32 %v1227, %v1213
    %v1229 = vadd.f32 %v1228, %v1214
    %v1230 = vadd.f32 %v1229, %v1215
    %v1231 = vadd.f32 %v1230, %v1216
    %v1232 = vadd.f32 %v1231, %v1217
    %v1233 = vadd.f32 %v1232, %v1218
    %v1234 = vadd.f32 %v1233, %v1219
    %v1235 = vadd.f32 %v1234, %v1220
    %v1236 = vadd.f32 %v1235, %v1221
    %v1237 = vadd.f32 %v1236, %v1222
    %v1238 = vadd.f32 %v1237, %v1223
    %v1239 = vrot.slane %v1238, 4
    %v1240 = vadd.f32 %v1238, %v1239
    %v1241 = vrot.slane %v1240, 2
    %v1242 = vadd.f32 %v1240, %v1241
    %v1243 = vrot.slane %v1242, 1
    %v1244 = vadd.f32 %v1242, %v1243
    %v1245 = vmul.f32 %v1244, %v264
    %v1246 = vmul.f32 %v1207, %v1207
    %v1247 = vsub.f32 %v1245, %v1246
    %v1248 = vadd.f32 %v1247, 1e-05
    %v1249 = vrsqrt.pop %v1248
    %v1250 = vmul.f32 %v1032, %v1249
    %v1251 = vmul.f32 %v1207, %v1250
    %v1253 = vrot.slane %v1251, 7
    %v1255 = vsub.f32 %v1032, %v1253
    %v1256 = vlaneseq
    %v1257 = vshrl.u32 %v1256, 7
    %v1258 = vsub.s32 0, %v1257
    %v1259 = vrot.slane %v1250, %v1258
    %v1260 = vmul.f32 %v1124, %v1259
    %v1261 = vmul.f32 %v1127, %v1259
    %v1262 = vmul.f32 %v1132, %v1259
    %v1263 = vmul.f32 %v1135, %v1259
    %v1264 = vmul.f32 %v1140, %v1259
    %v1265 = vmul.f32 %v1143, %v1259
    %v1266 = vmul.f32 %v1148, %v1259
    %v1267 = vmul.f32 %v1151, %v1259
    %v1268 = vmul.f32 %v1156, %v1259
    %v1269 = vmul.f32 %v1159, %v1259
    %v1270 = vmul.f32 %v1164, %v1259
    %v1271 = vmul.f32 %v1167, %v1259
    %v1272 = vmul.f32 %v1172, %v1259
    %v1273 = vmul.f32 %v1175, %v1259
    %v1274 = vmul.f32 %v1180, %v1259
    %v1275 = vmul.f32 %v1183, %v1259
    %v1276 = vlaneseq
    %v1277 = vshrl.u32 %v1276, 7
    %v1278 = vsub.s32 1, %v1277
    %v1279 = vrot.slane %v1255, %v1278
    %v1280 = vadd.f32 %v1260, %v1279
    %v1281 = vadd.f32 %v1261, %v1279
    %v1282 = vadd.f32 %v1262, %v1279
    %v1283 = vadd.f32 %v1263, %v1279
    %v1284 = vadd.f32 %v1264, %v1279
    %v1285 = vadd.f32 %v1265, %v1279
    %v1286 = vadd.f32 %v1266, %v1279
    %v1287 = vadd.f32 %v1267, %v1279
    %v1288 = vadd.f32 %v1268, %v1279
    %v1289 = vadd.f32 %v1269, %v1279
    %v1290 = vadd.f32 %v1270, %v1279
    %v1291 = vadd.f32 %v1271, %v1279
    %v1292 = vadd.f32 %v1272, %v1279
    %v1293 = vadd.f32 %v1273, %v1279
    %v1294 = vadd.f32 %v1274, %v1279
    %v1295 = vadd.f32 %v1275, %v1279
    %v1296 = vmul.f32 %v1280, 0.01
    %v1297 = vmul.f32 %v1281, 0.01
    %v1298 = vmul.f32 %v1282, 0.01
    %v1299 = vmul.f32 %v1283, 0.01
    %v1300 = vmul.f32 %v1284, 0.01
    %v1301 = vmul.f32 %v1285, 0.01
    %v1302 = vmul.f32 %v1286, 0.01
    %v1303 = vmul.f32 %v1287, 0.01
    %v1304 = vmul.f32 %v1288, 0.01
    %v1305 = vmul.f32 %v1289, 0.01
    %v1306 = vmul.f32 %v1290, 0.01
    %v1307 = vmul.f32 %v1291, 0.01
    %v1308 = vmul.f32 %v1292, 0.01
    %v1309 = vmul.f32 %v1293, 0.01
    %v1310 = vmul.f32 %v1294, 0.01
    %v1311 = vmul.f32 %v1295, 0.01
    %v1312 = vmax.f32 %v1280, %v1296
    %v1313 = vmax.f32 %v1281, %v1297
    %v1314 = vmax.f32 %v1282, %v1298
    %v1315 = vmax.f32 %v1283, %v1299
    %v1316 = vmax.f32 %v1284, %v1300
    %v1317 = vmax.f32 %v1285, %v1301
    %v1318 = vmax.f32 %v1286, %v1302
    %v1319 = vmax.f32 %v1287, %v1303
    %v1320 = vmax.f32 %v1288, %v1304
    %v1321 = vmax.f32 %v1289, %v1305
    %v1322 = vmax.f32 %v1290, %v1306
    %v1323 = vmax.f32 %v1291, %v1307
    %v1324 = vmax.f32 %v1292, %v1308
    %v1325 = vmax.f32 %v1293, %v1309
    %v1326 = vmax.f32 %v1294, %v1310
    %v1327 = vmax.f32 %v1295, %v1311
    %s1328 = scalar_lea.vmem [#allocation5], 256
    %v1329 = vld [vmem:[%s1328] sm:$0xf]
    %v1330 = vld [vmem:[%s1328 + $0x4] sm:$0xf]
    %v1331 = vld [vmem:[%s1328 + $0x8] sm:$0xf]
    %v1332 = vld [vmem:[%s1328 + $0xc] sm:$0xf]
    %v1333 = vld [vmem:[%s1328 + $0x10] sm:$0xf]
    %v1334 = vld [vmem:[%s1328 + $0x14] sm:$0xf]
    %v1335 = vld [vmem:[%s1328 + $0x18] sm:$0xf]
    %v1336 = vld [vmem:[%s1328 + $0x1c] sm:$0xf]
    %v1337 = vld [vmem:[%s1328 + $0x20] sm:$0xf]
    %v1338 = vld [vmem:[%s1328 + $0x24] sm:$0xf]
    %v1339 = vld [vmem:[%s1328 + $0x28] sm:$0xf]
    %v1340 = vld [vmem:[%s1328 + $0x2c] sm:$0xf]
    %v1341 = vld [vmem:[%s1328 + $0x30] sm:$0xf]
    %v1342 = vld [vmem:[%s1328 + $0x34] sm:$0xf]
    %v1343 = vld [vmem:[%s1328 + $0x38] sm:$0xf]
    %v1344 = vld [vmem:[%s1328 + $0x3c] sm:$0xf]
    %s1345 = scalar_lea.vmem [#allocation7], 32
    %v1346 = vld [vmem:[%s1345] sm:$0xff]
    %v1347 = vpack.c.bf16 %v1313, %v1312
    %v1348 = vpack.c.bf16 %v1315, %v1314
    %v1349 = vpack.c.bf16 %v1317, %v1316
    %v1350 = vpack.c.bf16 %v1319, %v1318
    %v1351 = vpack.c.bf16 %v1321, %v1320
    %v1352 = vpack.c.bf16 %v1323, %v1322
    %v1353 = vpack.c.bf16 %v1325, %v1324
    %v1354 = vpack.c.bf16 %v1327, %v1326
    %v1371 = vunpack.c.l.b16 %v1329
    %v1372 = vunpack.c.l.b16 %v1330
    %v1373 = vunpack.c.l.b16 %v1331
    %v1374 = vunpack.c.l.b16 %v1332
    %v1375 = vunpack.c.l.b16 %v1333
    %v1376 = vunpack.c.l.b16 %v1334
    %v1377 = vunpack.c.l.b16 %v1335
    %v1378 = vunpack.c.l.b16 %v1336
    %v1379 = vunpack.c.l.b16 %v1337
    %v1380 = vunpack.c.l.b16 %v1338
    %v1381 = vunpack.c.l.b16 %v1339
    %v1382 = vunpack.c.l.b16 %v1340
    %v1383 = vunpack.c.l.b16 %v1341
    %v1384 = vunpack.c.l.b16 %v1342
    %v1385 = vunpack.c.l.b16 %v1343
    %v1386 = vunpack.c.l.b16 %v1344
    %v1387 = vpack.c.b16 %v1372, %v1371
    %v1388 = vpack.c.b16 %v1374, %v1373
    %v1389 = vpack.c.b16 %v1376, %v1375
    %v1390 = vpack.c.b16 %v1378, %v1377
    %v1391 = vpack.c.b16 %v1380, %v1379
    %v1392 = vpack.c.b16 %v1382, %v1381
    %v1393 = vpack.c.b16 %v1384, %v1383
    %v1394 = vpack.c.b16 %v1386, %v1385
    %1403 = vmatprep.subr.bf16.mxu0 0
    %1404 = vmatpush1.bf16.msra.mxu0 %v1387
    %1405 = vmatprep.subr.bf16.mxu0 0
    %1406 = vmatpush1.bf16.msra.mxu0 %v1388
    %1407 = vmatprep.subr.bf16.mxu0 0
    %1408 = vmatpush1.bf16.msra.mxu0 %v1389
    %1409 = vmatprep.subr.bf16.mxu0 0
    %1410 = vmatpush1.bf16.msra.mxu0 %v1390
    %1411 = vmatprep.subr.bf16.mxu0 0
    %1412 = vmatpush1.bf16.msra.mxu0 %v1391
    %1413 = vmatprep.subr.bf16.mxu0 0
    %1414 = vmatpush1.bf16.msra.mxu0 %v1392
    %1415 = vmatprep.subr.bf16.mxu0 0
    %1416 = vmatpush1.bf16.msra.mxu0 %v1393
    %1417 = vmatprep.subr.bf16.mxu0 0
    %1418 = vmatpush1.bf16.msra.mxu0 %v1394
    %1419 = vmatprep.subr.bf16.mxu0 0
    %1420 = vmatpush1.bf16.msra.mxu0 0
    %1421 = vmatprep.subr.bf16.mxu0 0
    %1422 = vmatpush1.bf16.msra.mxu0 0
    %1423 = vmatprep.subr.bf16.mxu0 0
    %1424 = vmatpush1.bf16.msra.mxu0 0
    %1425 = vmatprep.subr.bf16.mxu0 0
    %1426 = vmatpush1.bf16.msra.mxu0 0
    %1427 = vmatprep.subr.bf16.mxu0 0
    %1428 = vmatpush1.bf16.msra.mxu0 0
    %1429 = vmatprep.subr.bf16.mxu0 0
    %1430 = vmatpush1.bf16.msra.mxu0 0
    %1431 = vmatprep.subr.bf16.mxu0 0
    %1432 = vmatpush1.bf16.msra.mxu0 0
    %1433 = vmatprep.subr.bf16.mxu0 0
    %1434 = vmatpush1.bf16.msra.mxu0 0
    %1435 = vmatprep.mubr.bf16.mxu0 0
    %1436 = vmatmul.mubr.bf16.gmra.mrb[0].mxu0 %v1347
    %v1437 = vpop.f32.mrb[0].mxu0
    %v1438 = vadd.f32 0.0, %v1437
    %v1439 = vpop.f32.mrb[0].mxu0
    %v1440 = vpop.f32.mrb[0].mxu0
    %v1441 = vadd.f32 0.0, %v1440
    %v1442 = vpop.f32.mrb[0].mxu0
    %1443 = vmatprep.mubr.bf16.mxu0 0
    %1444 = vmatmul.mubr.bf16.gmra.mrb[0].mxu0 %v1348
    %v1445 = vpop.f32.mrb[0].mxu0
    %v1446 = vadd.f32 0.0, %v1445
    %v1447 = vpop.f32.mrb[0].mxu0
    %v1448 = vpop.f32.mrb[0].mxu0
    %v1449 = vadd.f32 0.0, %v1448
    %v1450 = vpop.f32.mrb[0].mxu0
    %1451 = vmatprep.mubr.bf16.mxu0 0
    %1452 = vmatmul.mubr.bf16.gmra.mrb[0].mxu0 %v1349
    %v1453 = vpop.f32.mrb[0].mxu0
    %v1454 = vadd.f32 0.0, %v1453
    %v1455 = vpop.f32.mrb[0].mxu0
    %v1456 = vpop.f32.mrb[0].mxu0
    %v1457 = vadd.f32 0.0, %v1456
    %v1458 = vpop.f32.mrb[0].mxu0
    %1459 = vmatprep.mubr.bf16.mxu0 0
    %1460 = vmatmul.mubr.bf16.gmra.mrb[0].mxu0 %v1350
    %v1461 = vpop.f32.mrb[0].mxu0
    %v1462 = vadd.f32 0.0, %v1461
    %v1463 = vpop.f32.mrb[0].mxu0
    %v1464 = vpop.f32.mrb[0].mxu0
    %v1465 = vadd.f32 0.0, %v1464
    %v1466 = vpop.f32.mrb[0].mxu0
    %1467 = vmatprep.mubr.bf16.mxu0 0
    %1468 = vmatmul.mubr.bf16.gmra.mrb[0].mxu0 %v1351
    %v1469 = vpop.f32.mrb[0].mxu0
    %v1470 = vadd.f32 0.0, %v1469
    %v1471 = vpop.f32.mrb[0].mxu0
    %v1472 = vpop.f32.mrb[0].mxu0
    %v1473 = vadd.f32 0.0, %v1472
    %v1474 = vpop.f32.mrb[0].mxu0
    %1475 = vmatprep.mubr.bf16.mxu0 0
    %1476 = vmatmul.mubr.bf16.gmra.mrb[0].mxu0 %v1352
    %v1477 = vpop.f32.mrb[0].mxu0
    %v1478 = vadd.f32 0.0, %v1477
    %v1479 = vpop.f32.mrb[0].mxu0
    %v1480 = vpop.f32.mrb[0].mxu0
    %v1481 = vadd.f32 0.0, %v1480
    %v1482 = vpop.f32.mrb[0].mxu0
    %1483 = vmatprep.mubr.bf16.mxu0 0
    %1484 = vmatmul.mubr.bf16.gmra.mrb[0].mxu0 %v1353
    %v1485 = vpop.f32.mrb[0].mxu0
    %v1486 = vadd.f32 0.0, %v1485
    %v1487 = vpop.f32.mrb[0].mxu0
    %v1488 = vpop.f32.mrb[0].mxu0
    %v1489 = vadd.f32 0.0, %v1488
    %v1490 = vpop.f32.mrb[0].mxu0
    %1491 = vmatprep.mubr.bf16.mxu0 0
    %1492 = vmatmul.mubr.bf16.gmra.mrb[0].mxu0 %v1354
    %v1493 = vpop.f32.mrb[0].mxu0
    %v1494 = vadd.f32 0.0, %v1493
    %v1495 = vpop.f32.mrb[0].mxu0
    %v1496 = vpop.f32.mrb[0].mxu0
    %v1497 = vadd.f32 0.0, %v1496
    %v1498 = vpop.f32.mrb[0].mxu0
    %1499 = vdwg.mxu0
    %v1500 = vadd.f32 %v1438, %v1441
    %v1501 = vadd.f32 %v1500, %v1446
    %v1502 = vadd.f32 %v1501, %v1449
    %v1503 = vadd.f32 %v1502, %v1454
    %v1504 = vadd.f32 %v1503, %v1457
    %v1505 = vadd.f32 %v1504, %v1462
    %v1506 = vadd.f32 %v1505, %v1465
    %v1507 = vadd.f32 %v1506, %v1470
    %v1508 = vadd.f32 %v1507, %v1473
    %v1509 = vadd.f32 %v1508, %v1478
    %v1510 = vadd.f32 %v1509, %v1481
    %v1511 = vadd.f32 %v1510, %v1486
    %v1512 = vadd.f32 %v1511, %v1489
    %v1513 = vadd.f32 %v1512, %v1494
    %v1514 = vadd.f32 %v1513, %v1497
    %v1515 = vrot.slane %v1514, 4
    %v1516 = vadd.f32 %v1514, %v1515
    %v1517 = vrot.slane %v1516, 2
    %v1518 = vadd.f32 %v1516, %v1517
    %v1519 = vrot.slane %v1518, 1
    %v1520 = vadd.f32 %v1518, %v1519
    %v1521 = vmul.f32 %v1520, %v264
    %v1522 = vmul.f32 %v1438, %v1438
    %v1523 = vmul.f32 %v1441, %v1441
    %v1524 = vmul.f32 %v1446, %v1446
    %v1525 = vmul.f32 %v1449, %v1449
    %v1526 = vmul.f32 %v1454, %v1454
    %v1527 = vmul.f32 %v1457, %v1457
    %v1528 = vmul.f32 %v1462, %v1462
    %v1529 = vmul.f32 %v1465, %v1465
    %v1530 = vmul.f32 %v1470, %v1470
    %v1531 = vmul.f32 %v1473, %v1473
    %v1532 = vmul.f32 %v1478, %v1478
    %v1533 = vmul.f32 %v1481, %v1481
    %v1534 = vmul.f32 %v1486, %v1486
    %v1535 = vmul.f32 %v1489, %v1489
    %v1536 = vmul.f32 %v1494, %v1494
    %v1537 = vmul.f32 %v1497, %v1497
    %v1538 = vadd.f32 %v1522, %v1523
    %v1539 = vadd.f32 %v1538, %v1524
    %v1540 = vadd.f32 %v1539, %v1525
    %v1541 = vadd.f32 %v1540, %v1526
    %v1542 = vadd.f32 %v1541, %v1527
    %v1543 = vadd.f32 %v1542, %v1528
    %v1544 = vadd.f32 %v1543, %v1529
    %v1545 = vadd.f32 %v1544, %v1530
    %v1546 = vadd.f32 %v1545, %v1531
    %v1547 = vadd.f32 %v1546, %v1532
    %v1548 = vadd.f32 %v1547, %v1533
    %v1549 = vadd.f32 %v1548, %v1534
    %v1550 = vadd.f32 %v1549, %v1535
    %v1551 = vadd.f32 %v1550, %v1536
    %v1552 = vadd.f32 %v1551, %v1537
    %v1553 = vrot.slane %v1552, 4
    %v1554 = vadd.f32 %v1552, %v1553
    %v1555 = vrot.slane %v1554, 2
    %v1556 = vadd.f32 %v1554, %v1555
    %v1557 = vrot.slane %v1556, 1
    %v1558 = vadd.f32 %v1556, %v1557
    %v1559 = vmul.f32 %v1558, %v264
    %v1560 = vmul.f32 %v1521, %v1521
    %v1561 = vsub.f32 %v1559, %v1560
    %v1562 = vadd.f32 %v1561, 1e-05
    %v1563 = vrsqrt.pop %v1562
    %v1564 = vmul.f32 %v1346, %v1563
    %v1565 = vmul.f32 %v1521, %v1564
    %v1567 = vrot.slane %v1565, 7
    %v1569 = vsub.f32 %v1346, %v1567
    %v1570 = vlaneseq
    %v1571 = vshrl.u32 %v1570, 7
    %v1572 = vsub.s32 0, %v1571
    %v1573 = vrot.slane %v1564, %v1572
    %v1574 = vmul.f32 %v1438, %v1573
    %v1575 = vmul.f32 %v1441, %v1573
    %v1576 = vmul.f32 %v1446, %v1573
    %v1577 = vmul.f32 %v1449, %v1573
    %v1578 = vmul.f32 %v1454, %v1573
    %v1579 = vmul.f32 %v1457, %v1573
    %v1580 = vmul.f32 %v1462, %v1573
    %v1581 = vmul.f32 %v1465, %v1573
    %v1582 = vmul.f32 %v1470, %v1573
    %v1583 = vmul.f32 %v1473, %v1573
    %v1584 = vmul.f32 %v1478, %v1573
    %v1585 = vmul.f32 %v1481, %v1573
    %v1586 = vmul.f32 %v1486, %v1573
    %v1587 = vmul.f32 %v1489, %v1573
    %v1588 = vmul.f32 %v1494, %v1573
    %v1589 = vmul.f32 %v1497, %v1573
    %v1590 = vlaneseq
    %v1591 = vshrl.u32 %v1590, 7
    %v1592 = vsub.s32 1, %v1591
    %v1593 = vrot.slane %v1569, %v1592
    %v1594 = vadd.f32 %v1574, %v1593
    %v1595 = vadd.f32 %v1575, %v1593
    %v1596 = vadd.f32 %v1576, %v1593
    %v1597 = vadd.f32 %v1577, %v1593
    %v1598 = vadd.f32 %v1578, %v1593
    %v1599 = vadd.f32 %v1579, %v1593
    %v1600 = vadd.f32 %v1580, %v1593
    %v1601 = vadd.f32 %v1581, %v1593
    %v1602 = vadd.f32 %v1582, %v1593
    %v1603 = vadd.f32 %v1583, %v1593
    %v1604 = vadd.f32 %v1584, %v1593
    %v1605 = vadd.f32 %v1585, %v1593
    %v1606 = vadd.f32 %v1586, %v1593
    %v1607 = vadd.f32 %v1587, %v1593
    %v1608 = vadd.f32 %v1588, %v1593
    %v1609 = vadd.f32 %v1589, %v1593
    %v1610 = vtanh.pop %v1594
    %v1611 = vtanh.pop %v1595
    %v1612 = vtanh.pop %v1596
    %v1613 = vtanh.pop %v1597
    %v1614 = vtanh.pop %v1598
    %v1615 = vtanh.pop %v1599
    %v1616 = vtanh.pop %v1600
    %v1617 = vtanh.pop %v1601
    %v1618 = vtanh.pop %v1602
    %v1619 = vtanh.pop %v1603
    %v1620 = vtanh.pop %v1604
    %v1621 = vtanh.pop %v1605
    %v1622 = vtanh.pop %v1606
    %v1623 = vtanh.pop %v1607
    %v1624 = vtanh.pop %v1608
    %v1625 = vtanh.pop %v1609
    %v1626 = vadd.f32 %v1610, 1.0
    %v1627 = vadd.f32 %v1611, 1.0
    %v1628 = vadd.f32 %v1612, 1.0
    %v1629 = vadd.f32 %v1613, 1.0
    %v1630 = vadd.f32 %v1614, 1.0
    %v1631 = vadd.f32 %v1615, 1.0
    %v1632 = vadd.f32 %v1616, 1.0
    %v1633 = vadd.f32 %v1617, 1.0
    %v1634 = vadd.f32 %v1618, 1.0
    %v1635 = vadd.f32 %v1619, 1.0
    %v1636 = vadd.f32 %v1620, 1.0
    %v1637 = vadd.f32 %v1621, 1.0
    %v1638 = vadd.f32 %v1622, 1.0
    %v1639 = vadd.f32 %v1623, 1.0
    %v1640 = vadd.f32 %v1624, 1.0
    %v1641 = vadd.f32 %v1625, 1.0
    %v1642 = vmul.f32 %v1626, 1.5
    %v1643 = vmul.f32 %v1627, 1.5
    %v1644 = vmul.f32 %v1628, 1.5
    %v1645 = vmul.f32 %v1629, 1.5
    %v1646 = vmul.f32 %v1630, 1.5
    %v1647 = vmul.f32 %v1631, 1.5
    %v1648 = vmul.f32 %v1632, 1.5
    %v1649 = vmul.f32 %v1633, 1.5
    %v1650 = vmul.f32 %v1634, 1.5
    %v1651 = vmul.f32 %v1635, 1.5
    %v1652 = vmul.f32 %v1636, 1.5
    %v1653 = vmul.f32 %v1637, 1.5
    %v1654 = vmul.f32 %v1638, 1.5
    %v1655 = vmul.f32 %v1639, 1.5
    %v1656 = vmul.f32 %v1640, 1.5
    %v1657 = vmul.f32 %v1641, 1.5
    %v1658 = vadd.f32 %v1642, 0.5
    %v1659 = vadd.f32 %v1643, 0.5
    %v1660 = vadd.f32 %v1644, 0.5
    %v1661 = vadd.f32 %v1645, 0.5
    %v1662 = vadd.f32 %v1646, 0.5
    %v1663 = vadd.f32 %v1647, 0.5
    %v1664 = vadd.f32 %v1648, 0.5
    %v1665 = vadd.f32 %v1649, 0.5
    %v1666 = vadd.f32 %v1650, 0.5
    %v1667 = vadd.f32 %v1651, 0.5
    %v1668 = vadd.f32 %v1652, 0.5
    %v1669 = vadd.f32 %v1653, 0.5
    %v1670 = vadd.f32 %v1654, 0.5
    %v1671 = vadd.f32 %v1655, 0.5
    %v1672 = vadd.f32 %v1656, 0.5
    %v1673 = vadd.f32 %v1657, 0.5
    %v1674 = vfloor.f32 %v1658
    %v1675 = vfloor.f32 %v1659
    %v1676 = vfloor.f32 %v1660
    %v1677 = vfloor.f32 %v1661
    %v1678 = vfloor.f32 %v1662
    %v1679 = vfloor.f32 %v1663
    %v1680 = vfloor.f32 %v1664
    %v1681 = vfloor.f32 %v1665
    %v1682 = vfloor.f32 %v1666
    %v1683 = vfloor.f32 %v1667
    %v1684 = vfloor.f32 %v1668
    %v1685 = vfloor.f32 %v1669
    %v1686 = vfloor.f32 %v1670
    %v1687 = vfloor.f32 %v1671
    %v1688 = vfloor.f32 %v1672
    %v1689 = vfloor.f32 %v1673
    %v1690 = vmul.f32 %v1674, 0.6666667
    %v1691 = vmul.f32 %v1675, 0.6666667
    %v1692 = vmul.f32 %v1676, 0.6666667
    %v1693 = vmul.f32 %v1677, 0.6666667
    %v1694 = vmul.f32 %v1678, 0.6666667
    %v1695 = vmul.f32 %v1679, 0.6666667
    %v1696 = vmul.f32 %v1680, 0.6666667
    %v1697 = vmul.f32 %v1681, 0.6666667
    %v1698 = vmul.f32 %v1682, 0.6666667
    %v1699 = vmul.f32 %v1683, 0.6666667
    %v1700 = vmul.f32 %v1684, 0.6666667
    %v1701 = vmul.f32 %v1685, 0.6666667
    %v1702 = vmul.f32 %v1686, 0.6666667
    %v1703 = vmul.f32 %v1687, 0.6666667
    %v1704 = vmul.f32 %v1688, 0.6666667
    %v1705 = vmul.f32 %v1689, 0.6666667
    %v1706 = vsub.f32 %v1690, 1.0
    %v1707 = vsub.f32 %v1691, 1.0
    %v1708 = vsub.f32 %v1692, 1.0
    %v1709 = vsub.f32 %v1693, 1.0
    %v1710 = vsub.f32 %v1694, 1.0
    %v1711 = vsub.f32 %v1695, 1.0
    %v1712 = vsub.f32 %v1696, 1.0
    %v1713 = vsub.f32 %v1697, 1.0
    %v1714 = vsub.f32 %v1698, 1.0
    %v1715 = vsub.f32 %v1699, 1.0
    %v1716 = vsub.f32 %v1700, 1.0
    %v1717 = vsub.f32 %v1701, 1.0
    %v1718 = vsub.f32 %v1702, 1.0
    %v1719 = vsub.f32 %v1703, 1.0
    %v1720 = vsub.f32 %v1704, 1.0
    %v1721 = vsub.f32 %v1705, 1.0
    %v1722 = vlaneseq
    %v1723 = vand.u32 %v1722, 127
    %vm1724 = vcmp.lt.s32.totalorder %v1723, 8
    %v1725 = vsel %vm1724, 1, 0
    %vm1726 = vcmp.eq.s32.totalorder %v1725, 1
    %v1727 = vsel %vm1726, %v1706, 0.0
    %v1728 = vsel %vm1726, %v1707, 0.0
    %v1729 = vsel %vm1726, %v1708, 0.0
    %v1730 = vsel %vm1726, %v1709, 0.0
    %v1731 = vsel %vm1726, %v1710, 0.0
    %v1732 = vsel %vm1726, %v1711, 0.0
    %v1733 = vsel %vm1726, %v1712, 0.0
    %v1734 = vsel %vm1726, %v1713, 0.0
    %v1735 = vsel %vm1726, %v1714, 0.0
    %v1736 = vsel %vm1726, %v1715, 0.0
    %v1737 = vsel %vm1726, %v1716, 0.0
    %v1738 = vsel %vm1726, %v1717, 0.0
    %v1739 = vsel %vm1726, %v1718, 0.0
    %v1740 = vsel %vm1726, %v1719, 0.0
    %v1741 = vsel %vm1726, %v1720, 0.0
    %v1742 = vsel %vm1726, %v1721, 0.0
    %s1743 = scalar_lea.vmem [#allocation5], 320
    %v1744 = vld [vmem:[%s1743] sm:$0xf]
    %v1745 = vld [vmem:[%s1743 + $0x4] sm:$0xf]
    %v1746 = vld [vmem:[%s1743 + $0x8] sm:$0xf]
    %v1747 = vld [vmem:[%s1743 + $0xc] sm:$0xf]
    %v1748 = vld [vmem:[%s1743 + $0x10] sm:$0xf]
    %v1749 = vld [vmem:[%s1743 + $0x14] sm:$0xf]
    %v1750 = vld [vmem:[%s1743 + $0x18] sm:$0xf]
    %v1751 = vld [vmem:[%s1743 + $0x1c] sm:$0xf]
    %v1752 = vld [vmem:[%s1743 + $0x20] sm:$0xf]
    %v1753 = vld [vmem:[%s1743 + $0x24] sm:$0xf]
    %v1754 = vld [vmem:[%s1743 + $0x28] sm:$0xf]
    %v1755 = vld [vmem:[%s1743 + $0x2c] sm:$0xf]
    %v1756 = vld [vmem:[%s1743 + $0x30] sm:$0xf]
    %v1757 = vld [vmem:[%s1743 + $0x34] sm:$0xf]
    %v1758 = vld [vmem:[%s1743 + $0x38] sm:$0xf]
    %v1759 = vld [vmem:[%s1743 + $0x3c] sm:$0xf]
    %s1760 = scalar_lea.vmem [#allocation7], 40
    %v1761 = vld [vmem:[%s1760] sm:$0xff]
    %v1762 = vpack.c.bf16 %v1728, %v1727
    %v1763 = vpack.c.bf16 %v1730, %v1729
    %v1764 = vpack.c.bf16 %v1732, %v1731
    %v1765 = vpack.c.bf16 %v1734, %v1733
    %v1766 = vpack.c.bf16 %v1736, %v1735
    %v1767 = vpack.c.bf16 %v1738, %v1737
    %v1768 = vpack.c.bf16 %v1740, %v1739
    %v1769 = vpack.c.bf16 %v1742, %v1741
    %v1786 = vunpack.c.l.b16 %v1744
    %v1787 = vunpack.c.l.b16 %v1745
    %v1788 = vunpack.c.l.b16 %v1746
    %v1789 = vunpack.c.l.b16 %v1747
    %v1790 = vunpack.c.l.b16 %v1748
    %v1791 = vunpack.c.l.b16 %v1749
    %v1792 = vunpack.c.l.b16 %v1750
    %v1793 = vunpack.c.l.b16 %v1751
    %v1794 = vunpack.c.l.b16 %v1752
    %v1795 = vunpack.c.l.b16 %v1753
    %v1796 = vunpack.c.l.b16 %v1754
    %v1797 = vunpack.c.l.b16 %v1755
    %v1798 = vunpack.c.l.b16 %v1756
    %v1799 = vunpack.c.l.b16 %v1757
    %v1800 = vunpack.c.l.b16 %v1758
    %v1801 = vunpack.c.l.b16 %v1759
    %v1802 = vpack.c.b16 %v1787, %v1786
    %v1803 = vpack.c.b16 %v1789, %v1788
    %v1804 = vpack.c.b16 %v1791, %v1790
    %v1805 = vpack.c.b16 %v1793, %v1792
    %v1806 = vpack.c.b16 %v1795, %v1794
    %v1807 = vpack.c.b16 %v1797, %v1796
    %v1808 = vpack.c.b16 %v1799, %v1798
    %v1809 = vpack.c.b16 %v1801, %v1800
    %1818 = vmatprep.subr.bf16.mxu0 0
    %1819 = vmatpush1.bf16.msra.mxu0 %v1802
    %1820 = vmatprep.subr.bf16.mxu0 0
    %1821 = vmatpush1.bf16.msra.mxu0 %v1803
    %1822 = vmatprep.subr.bf16.mxu0 0
    %1823 = vmatpush1.bf16.msra.mxu0 %v1804
    %1824 = vmatprep.subr.bf16.mxu0 0
    %1825 = vmatpush1.bf16.msra.mxu0 %v1805
    %1826 = vmatprep.subr.bf16.mxu0 0
    %1827 = vmatpush1.bf16.msra.mxu0 %v1806
    %1828 = vmatprep.subr.bf16.mxu0 0
    %1829 = vmatpush1.bf16.msra.mxu0 %v1807
    %1830 = vmatprep.subr.bf16.mxu0 0
    %1831 = vmatpush1.bf16.msra.mxu0 %v1808
    %1832 = vmatprep.subr.bf16.mxu0 0
    %1833 = vmatpush1.bf16.msra.mxu0 %v1809
    %1834 = vmatprep.subr.bf16.mxu0 0
    %1835 = vmatpush1.bf16.msra.mxu0 0
    %1836 = vmatprep.subr.bf16.mxu0 0
    %1837 = vmatpush1.bf16.msra.mxu0 0
    %1838 = vmatprep.subr.bf16.mxu0 0
    %1839 = vmatpush1.bf16.msra.mxu0 0
    %1840 = vmatprep.subr.bf16.mxu0 0
    %1841 = vmatpush1.bf16.msra.mxu0 0
    %1842 = vmatprep.subr.bf16.mxu0 0
    %1843 = vmatpush1.bf16.msra.mxu0 0
    %1844 = vmatprep.subr.bf16.mxu0 0
    %1845 = vmatpush1.bf16.msra.mxu0 0
    %1846 = vmatprep.subr.bf16.mxu0 0
    %1847 = vmatpush1.bf16.msra.mxu0 0
    %1848 = vmatprep.subr.bf16.mxu0 0
    %1849 = vmatpush1.bf16.msra.mxu0 0
    %1850 = vmatprep.mubr.bf16.mxu0 0
    %1851 = vmatmul.mubr.bf16.gmra.mrb[0].mxu0 %v1762
    %v1852 = vpop.f32.mrb[0].mxu0
    %v1853 = vadd.f32 0.0, %v1852
    %v1854 = vpop.f32.mrb[0].mxu0
    %v1855 = vpop.f32.mrb[0].mxu0
    %v1856 = vadd.f32 0.0, %v1855
    %v1857 = vpop.f32.mrb[0].mxu0
    %1858 = vmatprep.mubr.bf16.mxu0 0
    %1859 = vmatmul.mubr.bf16.gmra.mrb[0].mxu0 %v1763
    %v1860 = vpop.f32.mrb[0].mxu0
    %v1861 = vadd.f32 0.0, %v1860
    %v1862 = vpop.f32.mrb[0].mxu0
    %v1863 = vpop.f32.mrb[0].mxu0
    %v1864 = vadd.f32 0.0, %v1863
    %v1865 = vpop.f32.mrb[0].mxu0
    %1866 = vmatprep.mubr.bf16.mxu0 0
    %1867 = vmatmul.mubr.bf16.gmra.mrb[0].mxu0 %v1764
    %v1868 = vpop.f32.mrb[0].mxu0
    %v1869 = vadd.f32 0.0, %v1868
    %v1870 = vpop.f32.mrb[0].mxu0
    %v1871 = vpop.f32.mrb[0].mxu0
    %v1872 = vadd.f32 0.0, %v1871
    %v1873 = vpop.f32.mrb[0].mxu0
    %1874 = vmatprep.mubr.bf16.mxu0 0
    %1875 = vmatmul.mubr.bf16.gmra.mrb[0].mxu0 %v1765
    %v1876 = vpop.f32.mrb[0].mxu0
    %v1877 = vadd.f32 0.0, %v1876
    %v1878 = vpop.f32.mrb[0].mxu0
    %v1879 = vpop.f32.mrb[0].mxu0
    %v1880 = vadd.f32 0.0, %v1879
    %v1881 = vpop.f32.mrb[0].mxu0
    %1882 = vmatprep.mubr.bf16.mxu0 0
    %1883 = vmatmul.mubr.bf16.gmra.mrb[0].mxu0 %v1766
    %v1884 = vpop.f32.mrb[0].mxu0
    %v1885 = vadd.f32 0.0, %v1884
    %v1886 = vpop.f32.mrb[0].mxu0
    %v1887 = vpop.f32.mrb[0].mxu0
    %v1888 = vadd.f32 0.0, %v1887
    %v1889 = vpop.f32.mrb[0].mxu0
    %1890 = vmatprep.mubr.bf16.mxu0 0
    %1891 = vmatmul.mubr.bf16.gmra.mrb[0].mxu0 %v1767
    %v1892 = vpop.f32.mrb[0].mxu0
    %v1893 = vadd.f32 0.0, %v1892
    %v1894 = vpop.f32.mrb[0].mxu0
    %v1895 = vpop.f32.mrb[0].mxu0
    %v1896 = vadd.f32 0.0, %v1895
    %v1897 = vpop.f32.mrb[0].mxu0
    %1898 = vmatprep.mubr.bf16.mxu0 0
    %1899 = vmatmul.mubr.bf16.gmra.mrb[0].mxu0 %v1768
    %v1900 = vpop.f32.mrb[0].mxu0
    %v1901 = vadd.f32 0.0, %v1900
    %v1902 = vpop.f32.mrb[0].mxu0
    %v1903 = vpop.f32.mrb[0].mxu0
    %v1904 = vadd.f32 0.0, %v1903
    %v1905 = vpop.f32.mrb[0].mxu0
    %1906 = vmatprep.mubr.bf16.mxu0 0
    %1907 = vmatmul.mubr.bf16.gmra.mrb[0].mxu0 %v1769
    %v1908 = vpop.f32.mrb[0].mxu0
    %v1909 = vadd.f32 0.0, %v1908
    %v1910 = vpop.f32.mrb[0].mxu0
    %v1911 = vpop.f32.mrb[0].mxu0
    %v1912 = vadd.f32 0.0, %v1911
    %v1913 = vpop.f32.mrb[0].mxu0
    %1914 = vdwg.mxu0
    %v1915 = vadd.f32 %v1853, %v1856
    %v1916 = vadd.f32 %v1915, %v1861
    %v1917 = vadd.f32 %v1916, %v1864
    %v1918 = vadd.f32 %v1917, %v1869
    %v1919 = vadd.f32 %v1918, %v1872
    %v1920 = vadd.f32 %v1919, %v1877
    %v1921 = vadd.f32 %v1920, %v1880
    %v1922 = vadd.f32 %v1921, %v1885
    %v1923 = vadd.f32 %v1922, %v1888
    %v1924 = vadd.f32 %v1923, %v1893
    %v1925 = vadd.f32 %v1924, %v1896
    %v1926 = vadd.f32 %v1925, %v1901
    %v1927 = vadd.f32 %v1926, %v1904
    %v1928 = vadd.f32 %v1927, %v1909
    %v1929 = vadd.f32 %v1928, %v1912
    %v1930 = vrot.slane %v1929, 4
    %v1931 = vadd.f32 %v1929, %v1930
    %v1932 = vrot.slane %v1931, 2
    %v1933 = vadd.f32 %v1931, %v1932
    %v1934 = vrot.slane %v1933, 1
    %v1935 = vadd.f32 %v1933, %v1934
    %v1936 = vmul.f32 %v1935, %v264
    %v1937 = vmul.f32 %v1853, %v1853
    %v1938 = vmul.f32 %v1856, %v1856
    %v1939 = vmul.f32 %v1861, %v1861
    %v1940 = vmul.f32 %v1864, %v1864
    %v1941 = vmul.f32 %v1869, %v1869
    %v1942 = vmul.f32 %v1872, %v1872
    %v1943 = vmul.f32 %v1877, %v1877
    %v1944 = vmul.f32 %v1880, %v1880
    %v1945 = vmul.f32 %v1885, %v1885
    %v1946 = vmul.f32 %v1888, %v1888
    %v1947 = vmul.f32 %v1893, %v1893
    %v1948 = vmul.f32 %v1896, %v1896
    %v1949 = vmul.f32 %v1901, %v1901
    %v1950 = vmul.f32 %v1904, %v1904
    %v1951 = vmul.f32 %v1909, %v1909
    %v1952 = vmul.f32 %v1912, %v1912
    %v1953 = vadd.f32 %v1937, %v1938
    %v1954 = vadd.f32 %v1953, %v1939
    %v1955 = vadd.f32 %v1954, %v1940
    %v1956 = vadd.f32 %v1955, %v1941
    %v1957 = vadd.f32 %v1956, %v1942
    %v1958 = vadd.f32 %v1957, %v1943
    %v1959 = vadd.f32 %v1958, %v1944
    %v1960 = vadd.f32 %v1959, %v1945
    %v1961 = vadd.f32 %v1960, %v1946
    %v1962 = vadd.f32 %v1961, %v1947
    %v1963 = vadd.f32 %v1962, %v1948
    %v1964 = vadd.f32 %v1963, %v1949
    %v1965 = vadd.f32 %v1964, %v1950
    %v1966 = vadd.f32 %v1965, %v1951
    %v1967 = vadd.f32 %v1966, %v1952
    %v1968 = vrot.slane %v1967, 4
    %v1969 = vadd.f32 %v1967, %v1968
    %v1970 = vrot.slane %v1969, 2
    %v1971 = vadd.f32 %v1969, %v1970
    %v1972 = vrot.slane %v1971, 1
    %v1973 = vadd.f32 %v1971, %v1972
    %v1974 = vmul.f32 %v1973, %v264
    %v1975 = vmul.f32 %v1936, %v1936
    %v1976 = vsub.f32 %v1974, %v1975
    %v1977 = vadd.f32 %v1976, 1e-05
    %v1978 = vrsqrt.pop %v1977
    %v1979 = vmul.f32 %v1761, %v1978
    %v1980 = vmul.f32 %v1936, %v1979
    %v1982 = vrot.slane %v1980, 7
    %v1984 = vsub.f32 %v1761, %v1982
    %v1985 = vlaneseq
    %v1986 = vshrl.u32 %v1985, 7
    %v1987 = vsub.s32 0, %v1986
    %v1988 = vrot.slane %v1979, %v1987
    %v1989 = vmul.f32 %v1853, %v1988
    %v1990 = vmul.f32 %v1856, %v1988
    %v1991 = vmul.f32 %v1861, %v1988
    %v1992 = vmul.f32 %v1864, %v1988
    %v1993 = vmul.f32 %v1869, %v1988
    %v1994 = vmul.f32 %v1872, %v1988
    %v1995 = vmul.f32 %v1877, %v1988
    %v1996 = vmul.f32 %v1880, %v1988
    %v1997 = vmul.f32 %v1885, %v1988
    %v1998 = vmul.f32 %v1888, %v1988
    %v1999 = vmul.f32 %v1893, %v1988
    %v2000 = vmul.f32 %v1896, %v1988
    %v2001 = vmul.f32 %v1901, %v1988
    %v2002 = vmul.f32 %v1904, %v1988
    %v2003 = vmul.f32 %v1909, %v1988
    %v2004 = vmul.f32 %v1912, %v1988
    %v2005 = vlaneseq
    %v2006 = vshrl.u32 %v2005, 7
    %v2007 = vsub.s32 1, %v2006
    %v2008 = vrot.slane %v1984, %v2007
    %v2009 = vadd.f32 %v1989, %v2008
    %v2010 = vadd.f32 %v1990, %v2008
    %v2011 = vadd.f32 %v1991, %v2008
    %v2012 = vadd.f32 %v1992, %v2008
    %v2013 = vadd.f32 %v1993, %v2008
    %v2014 = vadd.f32 %v1994, %v2008
    %v2015 = vadd.f32 %v1995, %v2008
    %v2016 = vadd.f32 %v1996, %v2008
    %v2017 = vadd.f32 %v1997, %v2008
    %v2018 = vadd.f32 %v1998, %v2008
    %v2019 = vadd.f32 %v1999, %v2008
    %v2020 = vadd.f32 %v2000, %v2008
    %v2021 = vadd.f32 %v2001, %v2008
    %v2022 = vadd.f32 %v2002, %v2008
    %v2023 = vadd.f32 %v2003, %v2008
    %v2024 = vadd.f32 %v2004, %v2008
    %v2025 = vmul.f32 %v2009, 0.01
    %v2026 = vmul.f32 %v2010, 0.01
    %v2027 = vmul.f32 %v2011, 0.01
    %v2028 = vmul.f32 %v2012, 0.01
    %v2029 = vmul.f32 %v2013, 0.01
    %v2030 = vmul.f32 %v2014, 0.01
    %v2031 = vmul.f32 %v2015, 0.01
    %v2032 = vmul.f32 %v2016, 0.01
    %v2033 = vmul.f32 %v2017, 0.01
    %v2034 = vmul.f32 %v2018, 0.01
    %v2035 = vmul.f32 %v2019, 0.01
    %v2036 = vmul.f32 %v2020, 0.01
    %v2037 = vmul.f32 %v2021, 0.01
    %v2038 = vmul.f32 %v2022, 0.01
    %v2039 = vmul.f32 %v2023, 0.01
    %v2040 = vmul.f32 %v2024, 0.01
    %v2041 = vmax.f32 %v2009, %v2025
    %v2042 = vmax.f32 %v2010, %v2026
    %v2043 = vmax.f32 %v2011, %v2027
    %v2044 = vmax.f32 %v2012, %v2028
    %v2045 = vmax.f32 %v2013, %v2029
    %v2046 = vmax.f32 %v2014, %v2030
    %v2047 = vmax.f32 %v2015, %v2031
    %v2048 = vmax.f32 %v2016, %v2032
    %v2049 = vmax.f32 %v2017, %v2033
    %v2050 = vmax.f32 %v2018, %v2034
    %v2051 = vmax.f32 %v2019, %v2035
    %v2052 = vmax.f32 %v2020, %v2036
    %v2053 = vmax.f32 %v2021, %v2037
    %v2054 = vmax.f32 %v2022, %v2038
    %v2055 = vmax.f32 %v2023, %v2039
    %v2056 = vmax.f32 %v2024, %v2040
    %s2057 = scalar_lea.vmem [#allocation5], 384
    %v2058 = vld [vmem:[%s2057] sm:$0xf]
    %v2059 = vld [vmem:[%s2057 + $0x4] sm:$0xf]
    %v2060 = vld [vmem:[%s2057 + $0x8] sm:$0xf]
    %v2061 = vld [vmem:[%s2057 + $0xc] sm:$0xf]
    %v2062 = vld [vmem:[%s2057 + $0x10] sm:$0xf]
    %v2063 = vld [vmem:[%s2057 + $0x14] sm:$0xf]
    %v2064 = vld [vmem:[%s2057 + $0x18] sm:$0xf]
    %v2065 = vld [vmem:[%s2057 + $0x1c] sm:$0xf]
    %v2066 = vld [vmem:[%s2057 + $0x20] sm:$0xf]
    %v2067 = vld [vmem:[%s2057 + $0x24] sm:$0xf]
    %v2068 = vld [vmem:[%s2057 + $0x28] sm:$0xf]
    %v2069 = vld [vmem:[%s2057 + $0x2c] sm:$0xf]
    %v2070 = vld [vmem:[%s2057 + $0x30] sm:$0xf]
    %v2071 = vld [vmem:[%s2057 + $0x34] sm:$0xf]
    %v2072 = vld [vmem:[%s2057 + $0x38] sm:$0xf]
    %v2073 = vld [vmem:[%s2057 + $0x3c] sm:$0xf]
    %s2074 = scalar_lea.vmem [#allocation7], 48
    %v2075 = vld [vmem:[%s2074] sm:$0xff]
    %v2076 = vpack.c.bf16 %v2042, %v2041
    %v2077 = vpack.c.bf16 %v2044, %v2043
    %v2078 = vpack.c.bf16 %v2046, %v2045
    %v2079 = vpack.c.bf16 %v2048, %v2047
    %v2080 = vpack.c.bf16 %v2050, %v2049
    %v2081 = vpack.c.bf16 %v2052, %v2051
    %v2082 = vpack.c.bf16 %v2054, %v2053
    %v2083 = vpack.c.bf16 %v2056, %v2055
    %v2100 = vunpack.c.l.b16 %v2058
    %v2101 = vunpack.c.l.b16 %v2059
    %v2102 = vunpack.c.l.b16 %v2060
    %v2103 = vunpack.c.l.b16 %v2061
    %v2104 = vunpack.c.l.b16 %v2062
    %v2105 = vunpack.c.l.b16 %v2063
    %v2106 = vunpack.c.l.b16 %v2064
    %v2107 = vunpack.c.l.b16 %v2065
    %v2108 = vunpack.c.l.b16 %v2066
    %v2109 = vunpack.c.l.b16 %v2067
    %v2110 = vunpack.c.l.b16 %v2068
    %v2111 = vunpack.c.l.b16 %v2069
    %v2112 = vunpack.c.l.b16 %v2070
    %v2113 = vunpack.c.l.b16 %v2071
    %v2114 = vunpack.c.l.b16 %v2072
    %v2115 = vunpack.c.l.b16 %v2073
    %v2116 = vpack.c.b16 %v2101, %v2100
    %v2117 = vpack.c.b16 %v2103, %v2102
    %v2118 = vpack.c.b16 %v2105, %v2104
    %v2119 = vpack.c.b16 %v2107, %v2106
    %v2120 = vpack.c.b16 %v2109, %v2108
    %v2121 = vpack.c.b16 %v2111, %v2110
    %v2122 = vpack.c.b16 %v2113, %v2112
    %v2123 = vpack.c.b16 %v2115, %v2114
    %2132 = vmatprep.subr.bf16.mxu0 0
    %2133 = vmatpush1.bf16.msra.mxu0 %v2116
    %2134 = vmatprep.subr.bf16.mxu0 0
    %2135 = vmatpush1.bf16.msra.mxu0 %v2117
    %2136 = vmatprep.subr.bf16.mxu0 0
    %2137 = vmatpush1.bf16.msra.mxu0 %v2118
    %2138 = vmatprep.subr.bf16.mxu0 0
    %2139 = vmatpush1.bf16.msra.mxu0 %v2119
    %2140 = vmatprep.subr.bf16.mxu0 0
    %2141 = vmatpush1.bf16.msra.mxu0 %v2120
    %2142 = vmatprep.subr.bf16.mxu0 0
    %2143 = vmatpush1.bf16.msra.mxu0 %v2121
    %2144 = vmatprep.subr.bf16.mxu0 0
    %2145 = vmatpush1.bf16.msra.mxu0 %v2122
    %2146 = vmatprep.subr.bf16.mxu0 0
    %2147 = vmatpush1.bf16.msra.mxu0 %v2123
    %2148 = vmatprep.subr.bf16.mxu0 0
    %2149 = vmatpush1.bf16.msra.mxu0 0
    %2150 = vmatprep.subr.bf16.mxu0 0
    %2151 = vmatpush1.bf16.msra.mxu0 0
    %2152 = vmatprep.subr.bf16.mxu0 0
    %2153 = vmatpush1.bf16.msra.mxu0 0
    %2154 = vmatprep.subr.bf16.mxu0 0
    %2155 = vmatpush1.bf16.msra.mxu0 0
    %2156 = vmatprep.subr.bf16.mxu0 0
    %2157 = vmatpush1.bf16.msra.mxu0 0
    %2158 = vmatprep.subr.bf16.mxu0 0
    %2159 = vmatpush1.bf16.msra.mxu0 0
    %2160 = vmatprep.subr.bf16.mxu0 0
    %2161 = vmatpush1.bf16.msra.mxu0 0
    %2162 = vmatprep.subr.bf16.mxu0 0
    %2163 = vmatpush1.bf16.msra.mxu0 0
    %2164 = vmatprep.mubr.bf16.mxu0 0
    %2165 = vmatmul.mubr.bf16.gmra.mrb[0].mxu0 %v2076
    %v2166 = vpop.f32.mrb[0].mxu0
    %v2167 = vadd.f32 0.0, %v2166
    %v2168 = vpop.f32.mrb[0].mxu0
    %v2169 = vpop.f32.mrb[0].mxu0
    %v2170 = vadd.f32 0.0, %v2169
    %v2171 = vpop.f32.mrb[0].mxu0
    %2172 = vmatprep.mubr.bf16.mxu0 0
    %2173 = vmatmul.mubr.bf16.gmra.mrb[0].mxu0 %v2077
    %v2174 = vpop.f32.mrb[0].mxu0
    %v2175 = vadd.f32 0.0, %v2174
    %v2176 = vpop.f32.mrb[0].mxu0
    %v2177 = vpop.f32.mrb[0].mxu0
    %v2178 = vadd.f32 0.0, %v2177
    %v2179 = vpop.f32.mrb[0].mxu0
    %2180 = vmatprep.mubr.bf16.mxu0 0
    %2181 = vmatmul.mubr.bf16.gmra.mrb[0].mxu0 %v2078
    %v2182 = vpop.f32.mrb[0].mxu0
    %v2183 = vadd.f32 0.0, %v2182
    %v2184 = vpop.f32.mrb[0].mxu0
    %v2185 = vpop.f32.mrb[0].mxu0
    %v2186 = vadd.f32 0.0, %v2185
    %v2187 = vpop.f32.mrb[0].mxu0
    %2188 = vmatprep.mubr.bf16.mxu0 0
    %2189 = vmatmul.mubr.bf16.gmra.mrb[0].mxu0 %v2079
    %v2190 = vpop.f32.mrb[0].mxu0
    %v2191 = vadd.f32 0.0, %v2190
    %v2192 = vpop.f32.mrb[0].mxu0
    %v2193 = vpop.f32.mrb[0].mxu0
    %v2194 = vadd.f32 0.0, %v2193
    %v2195 = vpop.f32.mrb[0].mxu0
    %2196 = vmatprep.mubr.bf16.mxu0 0
    %2197 = vmatmul.mubr.bf16.gmra.mrb[0].mxu0 %v2080
    %v2198 = vpop.f32.mrb[0].mxu0
    %v2199 = vadd.f32 0.0, %v2198
    %v2200 = vpop.f32.mrb[0].mxu0
    %v2201 = vpop.f32.mrb[0].mxu0
    %v2202 = vadd.f32 0.0, %v2201
    %v2203 = vpop.f32.mrb[0].mxu0
    %2204 = vmatprep.mubr.bf16.mxu0 0
    %2205 = vmatmul.mubr.bf16.gmra.mrb[0].mxu0 %v2081
    %v2206 = vpop.f32.mrb[0].mxu0
    %v2207 = vadd.f32 0.0, %v2206
    %v2208 = vpop.f32.mrb[0].mxu0
    %v2209 = vpop.f32.mrb[0].mxu0
    %v2210 = vadd.f32 0.0, %v2209
    %v2211 = vpop.f32.mrb[0].mxu0
    %2212 = vmatprep.mubr.bf16.mxu0 0
    %2213 = vmatmul.mubr.bf16.gmra.mrb[0].mxu0 %v2082
    %v2214 = vpop.f32.mrb[0].mxu0
    %v2215 = vadd.f32 0.0, %v2214
    %v2216 = vpop.f32.mrb[0].mxu0
    %v2217 = vpop.f32.mrb[0].mxu0
    %v2218 = vadd.f32 0.0, %v2217
    %v2219 = vpop.f32.mrb[0].mxu0
    %2220 = vmatprep.mubr.bf16.mxu0 0
    %2221 = vmatmul.mubr.bf16.gmra.mrb[0].mxu0 %v2083
    %v2222 = vpop.f32.mrb[0].mxu0
    %v2223 = vadd.f32 0.0, %v2222
    %v2224 = vpop.f32.mrb[0].mxu0
    %v2225 = vpop.f32.mrb[0].mxu0
    %v2226 = vadd.f32 0.0, %v2225
    %v2227 = vpop.f32.mrb[0].mxu0
    %2228 = vdwg.mxu0
    %v2229 = vadd.f32 %v2167, %v2170
    %v2230 = vadd.f32 %v2229, %v2175
    %v2231 = vadd.f32 %v2230, %v2178
    %v2232 = vadd.f32 %v2231, %v2183
    %v2233 = vadd.f32 %v2232, %v2186
    %v2234 = vadd.f32 %v2233, %v2191
    %v2235 = vadd.f32 %v2234, %v2194
    %v2236 = vadd.f32 %v2235, %v2199
    %v2237 = vadd.f32 %v2236, %v2202
    %v2238 = vadd.f32 %v2237, %v2207
    %v2239 = vadd.f32 %v2238, %v2210
    %v2240 = vadd.f32 %v2239, %v2215
    %v2241 = vadd.f32 %v2240, %v2218
    %v2242 = vadd.f32 %v2241, %v2223
    %v2243 = vadd.f32 %v2242, %v2226
    %v2244 = vrot.slane %v2243, 4
    %v2245 = vadd.f32 %v2243, %v2244
    %v2246 = vrot.slane %v2245, 2
    %v2247 = vadd.f32 %v2245, %v2246
    %v2248 = vrot.slane %v2247, 1
    %v2249 = vadd.f32 %v2247, %v2248
    %v2250 = vmul.f32 %v2249, %v264
    %v2251 = vmul.f32 %v2167, %v2167
    %v2252 = vmul.f32 %v2170, %v2170
    %v2253 = vmul.f32 %v2175, %v2175
    %v2254 = vmul.f32 %v2178, %v2178
    %v2255 = vmul.f32 %v2183, %v2183
    %v2256 = vmul.f32 %v2186, %v2186
    %v2257 = vmul.f32 %v2191, %v2191
    %v2258 = vmul.f32 %v2194, %v2194
    %v2259 = vmul.f32 %v2199, %v2199
    %v2260 = vmul.f32 %v2202, %v2202
    %v2261 = vmul.f32 %v2207, %v2207
    %v2262 = vmul.f32 %v2210, %v2210
    %v2263 = vmul.f32 %v2215, %v2215
    %v2264 = vmul.f32 %v2218, %v2218
    %v2265 = vmul.f32 %v2223, %v2223
    %v2266 = vmul.f32 %v2226, %v2226
    %v2267 = vadd.f32 %v2251, %v2252
    %v2268 = vadd.f32 %v2267, %v2253
    %v2269 = vadd.f32 %v2268, %v2254
    %v2270 = vadd.f32 %v2269, %v2255
    %v2271 = vadd.f32 %v2270, %v2256
    %v2272 = vadd.f32 %v2271, %v2257
    %v2273 = vadd.f32 %v2272, %v2258
    %v2274 = vadd.f32 %v2273, %v2259
    %v2275 = vadd.f32 %v2274, %v2260
    %v2276 = vadd.f32 %v2275, %v2261
    %v2277 = vadd.f32 %v2276, %v2262
    %v2278 = vadd.f32 %v2277, %v2263
    %v2279 = vadd.f32 %v2278, %v2264
    %v2280 = vadd.f32 %v2279, %v2265
    %v2281 = vadd.f32 %v2280, %v2266
    %v2282 = vrot.slane %v2281, 4
    %v2283 = vadd.f32 %v2281, %v2282
    %v2284 = vrot.slane %v2283, 2
    %v2285 = vadd.f32 %v2283, %v2284
    %v2286 = vrot.slane %v2285, 1
    %v2287 = vadd.f32 %v2285, %v2286
    %v2288 = vmul.f32 %v2287, %v264
    %v2289 = vmul.f32 %v2250, %v2250
    %v2290 = vsub.f32 %v2288, %v2289
    %v2291 = vadd.f32 %v2290, 1e-05
    %v2292 = vrsqrt.pop %v2291
    %v2293 = vmul.f32 %v2075, %v2292
    %v2294 = vmul.f32 %v2250, %v2293
    %v2296 = vrot.slane %v2294, 7
    %v2298 = vsub.f32 %v2075, %v2296
    %v2299 = vlaneseq
    %v2300 = vshrl.u32 %v2299, 7
    %v2301 = vsub.s32 0, %v2300
    %v2302 = vrot.slane %v2293, %v2301
    %v2303 = vmul.f32 %v2167, %v2302
    %v2304 = vmul.f32 %v2170, %v2302
    %v2305 = vmul.f32 %v2175, %v2302
    %v2306 = vmul.f32 %v2178, %v2302
    %v2307 = vmul.f32 %v2183, %v2302
    %v2308 = vmul.f32 %v2186, %v2302
    %v2309 = vmul.f32 %v2191, %v2302
    %v2310 = vmul.f32 %v2194, %v2302
    %v2311 = vmul.f32 %v2199, %v2302
    %v2312 = vmul.f32 %v2202, %v2302
    %v2313 = vmul.f32 %v2207, %v2302
    %v2314 = vmul.f32 %v2210, %v2302
    %v2315 = vmul.f32 %v2215, %v2302
    %v2316 = vmul.f32 %v2218, %v2302
    %v2317 = vmul.f32 %v2223, %v2302
    %v2318 = vmul.f32 %v2226, %v2302
    %v2319 = vlaneseq
    %v2320 = vshrl.u32 %v2319, 7
    %v2321 = vsub.s32 1, %v2320
    %v2322 = vrot.slane %v2298, %v2321
    %v2323 = vadd.f32 %v2303, %v2322
    %v2324 = vadd.f32 %v2304, %v2322
    %v2325 = vadd.f32 %v2305, %v2322
    %v2326 = vadd.f32 %v2306, %v2322
    %v2327 = vadd.f32 %v2307, %v2322
    %v2328 = vadd.f32 %v2308, %v2322
    %v2329 = vadd.f32 %v2309, %v2322
    %v2330 = vadd.f32 %v2310, %v2322
    %v2331 = vadd.f32 %v2311, %v2322
    %v2332 = vadd.f32 %v2312, %v2322
    %v2333 = vadd.f32 %v2313, %v2322
    %v2334 = vadd.f32 %v2314, %v2322
    %v2335 = vadd.f32 %v2315, %v2322
    %v2336 = vadd.f32 %v2316, %v2322
    %v2337 = vadd.f32 %v2317, %v2322
    %v2338 = vadd.f32 %v2318, %v2322
    %v2339 = vmul.f32 %v2323, 0.01
    %v2340 = vmul.f32 %v2324, 0.01
    %v2341 = vmul.f32 %v2325, 0.01
    %v2342 = vmul.f32 %v2326, 0.01
    %v2343 = vmul.f32 %v2327, 0.01
    %v2344 = vmul.f32 %v2328, 0.01
    %v2345 = vmul.f32 %v2329, 0.01
    %v2346 = vmul.f32 %v2330, 0.01
    %v2347 = vmul.f32 %v2331, 0.01
    %v2348 = vmul.f32 %v2332, 0.01
    %v2349 = vmul.f32 %v2333, 0.01
    %v2350 = vmul.f32 %v2334, 0.01
    %v2351 = vmul.f32 %v2335, 0.01
    %v2352 = vmul.f32 %v2336, 0.01
    %v2353 = vmul.f32 %v2337, 0.01
    %v2354 = vmul.f32 %v2338, 0.01
    %v2355 = vmax.f32 %v2323, %v2339
    %v2356 = vmax.f32 %v2324, %v2340
    %v2357 = vmax.f32 %v2325, %v2341
    %v2358 = vmax.f32 %v2326, %v2342
    %v2359 = vmax.f32 %v2327, %v2343
    %v2360 = vmax.f32 %v2328, %v2344
    %v2361 = vmax.f32 %v2329, %v2345
    %v2362 = vmax.f32 %v2330, %v2346
    %v2363 = vmax.f32 %v2331, %v2347
    %v2364 = vmax.f32 %v2332, %v2348
    %v2365 = vmax.f32 %v2333, %v2349
    %v2366 = vmax.f32 %v2334, %v2350
    %v2367 = vmax.f32 %v2335, %v2351
    %v2368 = vmax.f32 %v2336, %v2352
    %v2369 = vmax.f32 %v2337, %v2353
    %v2370 = vmax.f32 %v2338, %v2354
    %s2371 = scalar_lea.vmem [#allocation5], 448
    %v2372 = vld [vmem:[%s2371] sm:$0xf]
    %v2373 = vld [vmem:[%s2371 + $0x4] sm:$0xf]
    %v2374 = vld [vmem:[%s2371 + $0x8] sm:$0xf]
    %v2375 = vld [vmem:[%s2371 + $0xc] sm:$0xf]
    %v2376 = vld [vmem:[%s2371 + $0x10] sm:$0xf]
    %v2377 = vld [vmem:[%s2371 + $0x14] sm:$0xf]
    %v2378 = vld [vmem:[%s2371 + $0x18] sm:$0xf]
    %v2379 = vld [vmem:[%s2371 + $0x1c] sm:$0xf]
    %v2380 = vld [vmem:[%s2371 + $0x20] sm:$0xf]
    %v2381 = vld [vmem:[%s2371 + $0x24] sm:$0xf]
    %v2382 = vld [vmem:[%s2371 + $0x28] sm:$0xf]
    %v2383 = vld [vmem:[%s2371 + $0x2c] sm:$0xf]
    %v2384 = vld [vmem:[%s2371 + $0x30] sm:$0xf]
    %v2385 = vld [vmem:[%s2371 + $0x34] sm:$0xf]
    %v2386 = vld [vmem:[%s2371 + $0x38] sm:$0xf]
    %v2387 = vld [vmem:[%s2371 + $0x3c] sm:$0xf]
    %s2388 = scalar_lea.vmem [#allocation7], 56
    %v2389 = vld [vmem:[%s2388] sm:$0xff]
    %v2390 = vpack.c.bf16 %v2356, %v2355
    %v2391 = vpack.c.bf16 %v2358, %v2357
    %v2392 = vpack.c.bf16 %v2360, %v2359
    %v2393 = vpack.c.bf16 %v2362, %v2361
    %v2394 = vpack.c.bf16 %v2364, %v2363
    %v2395 = vpack.c.bf16 %v2366, %v2365
    %v2396 = vpack.c.bf16 %v2368, %v2367
    %v2397 = vpack.c.bf16 %v2370, %v2369
    %v2414 = vunpack.c.l.b16 %v2372
    %v2415 = vunpack.c.l.b16 %v2373
    %v2416 = vunpack.c.l.b16 %v2374
    %v2417 = vunpack.c.l.b16 %v2375
    %v2418 = vunpack.c.l.b16 %v2376
    %v2419 = vunpack.c.l.b16 %v2377
    %v2420 = vunpack.c.l.b16 %v2378
    %v2421 = vunpack.c.l.b16 %v2379
    %v2422 = vunpack.c.l.b16 %v2380
    %v2423 = vunpack.c.l.b16 %v2381
    %v2424 = vunpack.c.l.b16 %v2382
    %v2425 = vunpack.c.l.b16 %v2383
    %v2426 = vunpack.c.l.b16 %v2384
    %v2427 = vunpack.c.l.b16 %v2385
    %v2428 = vunpack.c.l.b16 %v2386
    %v2429 = vunpack.c.l.b16 %v2387
    %v2430 = vpack.c.b16 %v2415, %v2414
    %v2431 = vpack.c.b16 %v2417, %v2416
    %v2432 = vpack.c.b16 %v2419, %v2418
    %v2433 = vpack.c.b16 %v2421, %v2420
    %v2434 = vpack.c.b16 %v2423, %v2422
    %v2435 = vpack.c.b16 %v2425, %v2424
    %v2436 = vpack.c.b16 %v2427, %v2426
    %v2437 = vpack.c.b16 %v2429, %v2428
    %2446 = vmatprep.subr.bf16.mxu0 0
    %2447 = vmatpush1.bf16.msra.mxu0 %v2430
    %2448 = vmatprep.subr.bf16.mxu0 0
    %2449 = vmatpush1.bf16.msra.mxu0 %v2431
    %2450 = vmatprep.subr.bf16.mxu0 0
    %2451 = vmatpush1.bf16.msra.mxu0 %v2432
    %2452 = vmatprep.subr.bf16.mxu0 0
    %2453 = vmatpush1.bf16.msra.mxu0 %v2433
    %2454 = vmatprep.subr.bf16.mxu0 0
    %2455 = vmatpush1.bf16.msra.mxu0 %v2434
    %2456 = vmatprep.subr.bf16.mxu0 0
    %2457 = vmatpush1.bf16.msra.mxu0 %v2435
    %2458 = vmatprep.subr.bf16.mxu0 0
    %2459 = vmatpush1.bf16.msra.mxu0 %v2436
    %2460 = vmatprep.subr.bf16.mxu0 0
    %2461 = vmatpush1.bf16.msra.mxu0 %v2437
    %2462 = vmatprep.subr.bf16.mxu0 0
    %2463 = vmatpush1.bf16.msra.mxu0 0
    %2464 = vmatprep.subr.bf16.mxu0 0
    %2465 = vmatpush1.bf16.msra.mxu0 0
    %2466 = vmatprep.subr.bf16.mxu0 0
    %2467 = vmatpush1.bf16.msra.mxu0 0
    %2468 = vmatprep.subr.bf16.mxu0 0
    %2469 = vmatpush1.bf16.msra.mxu0 0
    %2470 = vmatprep.subr.bf16.mxu0 0
    %2471 = vmatpush1.bf16.msra.mxu0 0
    %2472 = vmatprep.subr.bf16.mxu0 0
    %2473 = vmatpush1.bf16.msra.mxu0 0
    %2474 = vmatprep.subr.bf16.mxu0 0
    %2475 = vmatpush1.bf16.msra.mxu0 0
    %2476 = vmatprep.subr.bf16.mxu0 0
    %2477 = vmatpush1.bf16.msra.mxu0 0
    %2478 = vmatprep.mubr.bf16.mxu0 0
    %2479 = vmatmul.mubr.bf16.gmra.mrb[0].mxu0 %v2390
    %v2480 = vpop.f32.mrb[0].mxu0
    %v2481 = vadd.f32 0.0, %v2480
    %v2482 = vpop.f32.mrb[0].mxu0
    %v2483 = vpop.f32.mrb[0].mxu0
    %v2484 = vadd.f32 0.0, %v2483
    %v2485 = vpop.f32.mrb[0].mxu0
    %2486 = vmatprep.mubr.bf16.mxu0 0
    %2487 = vmatmul.mubr.bf16.gmra.mrb[0].mxu0 %v2391
    %v2488 = vpop.f32.mrb[0].mxu0
    %v2489 = vadd.f32 0.0, %v2488
    %v2490 = vpop.f32.mrb[0].mxu0
    %v2491 = vpop.f32.mrb[0].mxu0
    %v2492 = vadd.f32 0.0, %v2491
    %v2493 = vpop.f32.mrb[0].mxu0
    %2494 = vmatprep.mubr.bf16.mxu0 0
    %2495 = vmatmul.mubr.bf16.gmra.mrb[0].mxu0 %v2392
    %v2496 = vpop.f32.mrb[0].mxu0
    %v2497 = vadd.f32 0.0, %v2496
    %v2498 = vpop.f32.mrb[0].mxu0
    %v2499 = vpop.f32.mrb[0].mxu0
    %v2500 = vadd.f32 0.0, %v2499
    %v2501 = vpop.f32.mrb[0].mxu0
    %2502 = vmatprep.mubr.bf16.mxu0 0
    %2503 = vmatmul.mubr.bf16.gmra.mrb[0].mxu0 %v2393
    %v2504 = vpop.f32.mrb[0].mxu0
    %v2505 = vadd.f32 0.0, %v2504
    %v2506 = vpop.f32.mrb[0].mxu0
    %v2507 = vpop.f32.mrb[0].mxu0
    %v2508 = vadd.f32 0.0, %v2507
    %v2509 = vpop.f32.mrb[0].mxu0
    %2510 = vmatprep.mubr.bf16.mxu0 0
    %2511 = vmatmul.mubr.bf16.gmra.mrb[0].mxu0 %v2394
    %v2512 = vpop.f32.mrb[0].mxu0
    %v2513 = vadd.f32 0.0, %v2512
    %v2514 = vpop.f32.mrb[0].mxu0
    %v2515 = vpop.f32.mrb[0].mxu0
    %v2516 = vadd.f32 0.0, %v2515
    %v2517 = vpop.f32.mrb[0].mxu0
    %2518 = vmatprep.mubr.bf16.mxu0 0
    %2519 = vmatmul.mubr.bf16.gmra.mrb[0].mxu0 %v2395
    %v2520 = vpop.f32.mrb[0].mxu0
    %v2521 = vadd.f32 0.0, %v2520
    %v2522 = vpop.f32.mrb[0].mxu0
    %v2523 = vpop.f32.mrb[0].mxu0
    %v2524 = vadd.f32 0.0, %v2523
    %v2525 = vpop.f32.mrb[0].mxu0
    %2526 = vmatprep.mubr.bf16.mxu0 0
    %2527 = vmatmul.mubr.bf16.gmra.mrb[0].mxu0 %v2396
    %v2528 = vpop.f32.mrb[0].mxu0
    %v2529 = vadd.f32 0.0, %v2528
    %v2530 = vpop.f32.mrb[0].mxu0
    %v2531 = vpop.f32.mrb[0].mxu0
    %v2532 = vadd.f32 0.0, %v2531
    %v2533 = vpop.f32.mrb[0].mxu0
    %2534 = vmatprep.mubr.bf16.mxu0 0
    %2535 = vmatmul.mubr.bf16.gmra.mrb[0].mxu0 %v2397
    %v2536 = vpop.f32.mrb[0].mxu0
    %v2537 = vadd.f32 0.0, %v2536
    %v2538 = vpop.f32.mrb[0].mxu0
    %v2539 = vpop.f32.mrb[0].mxu0
    %v2540 = vadd.f32 0.0, %v2539
    %v2541 = vpop.f32.mrb[0].mxu0
    %2542 = vdwg.mxu0
    %v2543 = vadd.f32 %v2481, %v2484
    %v2544 = vadd.f32 %v2543, %v2489
    %v2545 = vadd.f32 %v2544, %v2492
    %v2546 = vadd.f32 %v2545, %v2497
    %v2547 = vadd.f32 %v2546, %v2500
    %v2548 = vadd.f32 %v2547, %v2505
    %v2549 = vadd.f32 %v2548, %v2508
    %v2550 = vadd.f32 %v2549, %v2513
    %v2551 = vadd.f32 %v2550, %v2516
    %v2552 = vadd.f32 %v2551, %v2521
    %v2553 = vadd.f32 %v2552, %v2524
    %v2554 = vadd.f32 %v2553, %v2529
    %v2555 = vadd.f32 %v2554, %v2532
    %v2556 = vadd.f32 %v2555, %v2537
    %v2557 = vadd.f32 %v2556, %v2540
    %v2558 = vrot.slane %v2557, 4
    %v2559 = vadd.f32 %v2557, %v2558
    %v2560 = vrot.slane %v2559, 2
    %v2561 = vadd.f32 %v2559, %v2560
    %v2562 = vrot.slane %v2561, 1
    %v2563 = vadd.f32 %v2561, %v2562
    %v2564 = vmul.f32 %v2563, %v264
    %v2565 = vmul.f32 %v2481, %v2481
    %v2566 = vmul.f32 %v2484, %v2484
    %v2567 = vmul.f32 %v2489, %v2489
    %v2568 = vmul.f32 %v2492, %v2492
    %v2569 = vmul.f32 %v2497, %v2497
    %v2570 = vmul.f32 %v2500, %v2500
    %v2571 = vmul.f32 %v2505, %v2505
    %v2572 = vmul.f32 %v2508, %v2508
    %v2573 = vmul.f32 %v2513, %v2513
    %v2574 = vmul.f32 %v2516, %v2516
    %v2575 = vmul.f32 %v2521, %v2521
    %v2576 = vmul.f32 %v2524, %v2524
    %v2577 = vmul.f32 %v2529, %v2529
    %v2578 = vmul.f32 %v2532, %v2532
    %v2579 = vmul.f32 %v2537, %v2537
    %v2580 = vmul.f32 %v2540, %v2540
    %v2581 = vadd.f32 %v2565, %v2566
    %v2582 = vadd.f32 %v2581, %v2567
    %v2583 = vadd.f32 %v2582, %v2568
    %v2584 = vadd.f32 %v2583, %v2569
    %v2585 = vadd.f32 %v2584, %v2570
    %v2586 = vadd.f32 %v2585, %v2571
    %v2587 = vadd.f32 %v2586, %v2572
    %v2588 = vadd.f32 %v2587, %v2573
    %v2589 = vadd.f32 %v2588, %v2574
    %v2590 = vadd.f32 %v2589, %v2575
    %v2591 = vadd.f32 %v2590, %v2576
    %v2592 = vadd.f32 %v2591, %v2577
    %v2593 = vadd.f32 %v2592, %v2578
    %v2594 = vadd.f32 %v2593, %v2579
    %v2595 = vadd.f32 %v2594, %v2580
    %v2596 = vrot.slane %v2595, 4
    %v2597 = vadd.f32 %v2595, %v2596
    %v2598 = vrot.slane %v2597, 2
    %v2599 = vadd.f32 %v2597, %v2598
    %v2600 = vrot.slane %v2599, 1
    %v2601 = vadd.f32 %v2599, %v2600
    %v2602 = vmul.f32 %v2601, %v264
    %v2603 = vmul.f32 %v2564, %v2564
    %v2604 = vsub.f32 %v2602, %v2603
    %v2605 = vadd.f32 %v2604, 1e-05
    %v2606 = vrsqrt.pop %v2605
    %v2607 = vmul.f32 %v2389, %v2606
    %v2608 = vmul.f32 %v2564, %v2607
    %v2610 = vrot.slane %v2608, 7
    %v2612 = vsub.f32 %v2389, %v2610
    %v2613 = vlaneseq
    %v2614 = vshrl.u32 %v2613, 7
    %v2615 = vsub.s32 0, %v2614
    %v2616 = vrot.slane %v2607, %v2615
    %v2617 = vmul.f32 %v2481, %v2616
    %v2618 = vmul.f32 %v2484, %v2616
    %v2619 = vmul.f32 %v2489, %v2616
    %v2620 = vmul.f32 %v2492, %v2616
    %v2621 = vmul.f32 %v2497, %v2616
    %v2622 = vmul.f32 %v2500, %v2616
    %v2623 = vmul.f32 %v2505, %v2616
    %v2624 = vmul.f32 %v2508, %v2616
    %v2625 = vmul.f32 %v2513, %v2616
    %v2626 = vmul.f32 %v2516, %v2616
    %v2627 = vmul.f32 %v2521, %v2616
    %v2628 = vmul.f32 %v2524, %v2616
    %v2629 = vmul.f32 %v2529, %v2616
    %v2630 = vmul.f32 %v2532, %v2616
    %v2631 = vmul.f32 %v2537, %v2616
    %v2632 = vmul.f32 %v2540, %v2616
    %v2633 = vlaneseq
    %v2634 = vshrl.u32 %v2633, 7
    %v2635 = vsub.s32 1, %v2634
    %v2636 = vrot.slane %v2612, %v2635
    %v2637 = vadd.f32 %v2617, %v2636
    %v2638 = vadd.f32 %v2618, %v2636
    %v2639 = vadd.f32 %v2619, %v2636
    %v2640 = vadd.f32 %v2620, %v2636
    %v2641 = vadd.f32 %v2621, %v2636
    %v2642 = vadd.f32 %v2622, %v2636
    %v2643 = vadd.f32 %v2623, %v2636
    %v2644 = vadd.f32 %v2624, %v2636
    %v2645 = vadd.f32 %v2625, %v2636
    %v2646 = vadd.f32 %v2626, %v2636
    %v2647 = vadd.f32 %v2627, %v2636
    %v2648 = vadd.f32 %v2628, %v2636
    %v2649 = vadd.f32 %v2629, %v2636
    %v2650 = vadd.f32 %v2630, %v2636
    %v2651 = vadd.f32 %v2631, %v2636
    %v2652 = vadd.f32 %v2632, %v2636
    %v2653 = vmul.f32 %v2637, 0.01
    %v2654 = vmul.f32 %v2638, 0.01
    %v2655 = vmul.f32 %v2639, 0.01
    %v2656 = vmul.f32 %v2640, 0.01
    %v2657 = vmul.f32 %v2641, 0.01
    %v2658 = vmul.f32 %v2642, 0.01
    %v2659 = vmul.f32 %v2643, 0.01
    %v2660 = vmul.f32 %v2644, 0.01
    %v2661 = vmul.f32 %v2645, 0.01
    %v2662 = vmul.f32 %v2646, 0.01
    %v2663 = vmul.f32 %v2647, 0.01
    %v2664 = vmul.f32 %v2648, 0.01
    %v2665 = vmul.f32 %v2649, 0.01
    %v2666 = vmul.f32 %v2650, 0.01
    %v2667 = vmul.f32 %v2651, 0.01
    %v2668 = vmul.f32 %v2652, 0.01
    %v2669 = vmax.f32 %v2637, %v2653
    %v2670 = vmax.f32 %v2638, %v2654
    %v2671 = vmax.f32 %v2639, %v2655
    %v2672 = vmax.f32 %v2640, %v2656
    %v2673 = vmax.f32 %v2641, %v2657
    %v2674 = vmax.f32 %v2642, %v2658
    %v2675 = vmax.f32 %v2643, %v2659
    %v2676 = vmax.f32 %v2644, %v2660
    %v2677 = vmax.f32 %v2645, %v2661
    %v2678 = vmax.f32 %v2646, %v2662
    %v2679 = vmax.f32 %v2647, %v2663
    %v2680 = vmax.f32 %v2648, %v2664
    %v2681 = vmax.f32 %v2649, %v2665
    %v2682 = vmax.f32 %v2650, %v2666
    %v2683 = vmax.f32 %v2651, %v2667
    %v2684 = vmax.f32 %v2652, %v2668
    %s2685 = scalar_lea.vmem [#allocation5], 512
    %v2686 = vld [vmem:[%s2685] sm:$0xf]
    %v2687 = vld [vmem:[%s2685 + $0x4] sm:$0xf]
    %v2688 = vld [vmem:[%s2685 + $0x8] sm:$0xf]
    %v2689 = vld [vmem:[%s2685 + $0xc] sm:$0xf]
    %v2690 = vld [vmem:[%s2685 + $0x10] sm:$0xf]
    %v2691 = vld [vmem:[%s2685 + $0x14] sm:$0xf]
    %v2692 = vld [vmem:[%s2685 + $0x18] sm:$0xf]
    %v2693 = vld [vmem:[%s2685 + $0x1c] sm:$0xf]
    %v2694 = vld [vmem:[%s2685 + $0x20] sm:$0xf]
    %v2695 = vld [vmem:[%s2685 + $0x24] sm:$0xf]
    %v2696 = vld [vmem:[%s2685 + $0x28] sm:$0xf]
    %v2697 = vld [vmem:[%s2685 + $0x2c] sm:$0xf]
    %v2698 = vld [vmem:[%s2685 + $0x30] sm:$0xf]
    %v2699 = vld [vmem:[%s2685 + $0x34] sm:$0xf]
    %v2700 = vld [vmem:[%s2685 + $0x38] sm:$0xf]
    %v2701 = vld [vmem:[%s2685 + $0x3c] sm:$0xf]
    %s2702 = scalar_lea.vmem [#allocation7], 64
    %v2703 = vld [vmem:[%s2702] sm:$0xff]
    %v2704 = vpack.c.bf16 %v2670, %v2669
    %v2705 = vpack.c.bf16 %v2672, %v2671
    %v2706 = vpack.c.bf16 %v2674, %v2673
    %v2707 = vpack.c.bf16 %v2676, %v2675
    %v2708 = vpack.c.bf16 %v2678, %v2677
    %v2709 = vpack.c.bf16 %v2680, %v2679
    %v2710 = vpack.c.bf16 %v2682, %v2681
    %v2711 = vpack.c.bf16 %v2684, %v2683
    %v2728 = vunpack.c.l.b16 %v2686
    %v2729 = vunpack.c.l.b16 %v2687
    %v2730 = vunpack.c.l.b16 %v2688
    %v2731 = vunpack.c.l.b16 %v2689
    %v2732 = vunpack.c.l.b16 %v2690
    %v2733 = vunpack.c.l.b16 %v2691
    %v2734 = vunpack.c.l.b16 %v2692
    %v2735 = vunpack.c.l.b16 %v2693
    %v2736 = vunpack.c.l.b16 %v2694
    %v2737 = vunpack.c.l.b16 %v2695
    %v2738 = vunpack.c.l.b16 %v2696
    %v2739 = vunpack.c.l.b16 %v2697
    %v2740 = vunpack.c.l.b16 %v2698
    %v2741 = vunpack.c.l.b16 %v2699
    %v2742 = vunpack.c.l.b16 %v2700
    %v2743 = vunpack.c.l.b16 %v2701
    %v2744 = vpack.c.b16 %v2729, %v2728
    %v2745 = vpack.c.b16 %v2731, %v2730
    %v2746 = vpack.c.b16 %v2733, %v2732
    %v2747 = vpack.c.b16 %v2735, %v2734
    %v2748 = vpack.c.b16 %v2737, %v2736
    %v2749 = vpack.c.b16 %v2739, %v2738
    %v2750 = vpack.c.b16 %v2741, %v2740
    %v2751 = vpack.c.b16 %v2743, %v2742
    %2760 = vmatprep.subr.bf16.mxu0 0
    %2761 = vmatpush1.bf16.msra.mxu0 %v2744
    %2762 = vmatprep.subr.bf16.mxu0 0
    %2763 = vmatpush1.bf16.msra.mxu0 %v2745
    %2764 = vmatprep.subr.bf16.mxu0 0
    %2765 = vmatpush1.bf16.msra.mxu0 %v2746
    %2766 = vmatprep.subr.bf16.mxu0 0
    %2767 = vmatpush1.bf16.msra.mxu0 %v2747
    %2768 = vmatprep.subr.bf16.mxu0 0
    %2769 = vmatpush1.bf16.msra.mxu0 %v2748
    %2770 = vmatprep.subr.bf16.mxu0 0
    %2771 = vmatpush1.bf16.msra.mxu0 %v2749
    %2772 = vmatprep.subr.bf16.mxu0 0
    %2773 = vmatpush1.bf16.msra.mxu0 %v2750
    %2774 = vmatprep.subr.bf16.mxu0 0
    %2775 = vmatpush1.bf16.msra.mxu0 %v2751
    %2776 = vmatprep.subr.bf16.mxu0 0
    %2777 = vmatpush1.bf16.msra.mxu0 0
    %2778 = vmatprep.subr.bf16.mxu0 0
    %2779 = vmatpush1.bf16.msra.mxu0 0
    %2780 = vmatprep.subr.bf16.mxu0 0
    %2781 = vmatpush1.bf16.msra.mxu0 0
    %2782 = vmatprep.subr.bf16.mxu0 0
    %2783 = vmatpush1.bf16.msra.mxu0 0
    %2784 = vmatprep.subr.bf16.mxu0 0
    %2785 = vmatpush1.bf16.msra.mxu0 0
    %2786 = vmatprep.subr.bf16.mxu0 0
    %2787 = vmatpush1.bf16.msra.mxu0 0
    %2788 = vmatprep.subr.bf16.mxu0 0
    %2789 = vmatpush1.bf16.msra.mxu0 0
    %2790 = vmatprep.subr.bf16.mxu0 0
    %2791 = vmatpush1.bf16.msra.mxu0 0
    %2792 = vmatprep.mubr.bf16.mxu0 0
    %2793 = vmatmul.mubr.bf16.gmra.mrb[0].mxu0 %v2704
    %v2794 = vpop.f32.mrb[0].mxu0
    %v2795 = vadd.f32 0.0, %v2794
    %v2796 = vpop.f32.mrb[0].mxu0
    %v2797 = vpop.f32.mrb[0].mxu0
    %v2798 = vadd.f32 0.0, %v2797
    %v2799 = vpop.f32.mrb[0].mxu0
    %2800 = vmatprep.mubr.bf16.mxu0 0
    %2801 = vmatmul.mubr.bf16.gmra.mrb[0].mxu0 %v2705
    %v2802 = vpop.f32.mrb[0].mxu0
    %v2803 = vadd.f32 0.0, %v2802
    %v2804 = vpop.f32.mrb[0].mxu0
    %v2805 = vpop.f32.mrb[0].mxu0
    %v2806 = vadd.f32 0.0, %v2805
    %v2807 = vpop.f32.mrb[0].mxu0
    %2808 = vmatprep.mubr.bf16.mxu0 0
    %2809 = vmatmul.mubr.bf16.gmra.mrb[0].mxu0 %v2706
    %v2810 = vpop.f32.mrb[0].mxu0
    %v2811 = vadd.f32 0.0, %v2810
    %v2812 = vpop.f32.mrb[0].mxu0
    %v2813 = vpop.f32.mrb[0].mxu0
    %v2814 = vadd.f32 0.0, %v2813
    %v2815 = vpop.f32.mrb[0].mxu0
    %2816 = vmatprep.mubr.bf16.mxu0 0
    %2817 = vmatmul.mubr.bf16.gmra.mrb[0].mxu0 %v2707
    %v2818 = vpop.f32.mrb[0].mxu0
    %v2819 = vadd.f32 0.0, %v2818
    %v2820 = vpop.f32.mrb[0].mxu0
    %v2821 = vpop.f32.mrb[0].mxu0
    %v2822 = vadd.f32 0.0, %v2821
    %v2823 = vpop.f32.mrb[0].mxu0
    %2824 = vmatprep.mubr.bf16.mxu0 0
    %2825 = vmatmul.mubr.bf16.gmra.mrb[0].mxu0 %v2708
    %v2826 = vpop.f32.mrb[0].mxu0
    %v2827 = vadd.f32 0.0, %v2826
    %v2828 = vpop.f32.mrb[0].mxu0
    %v2829 = vpop.f32.mrb[0].mxu0
    %v2830 = vadd.f32 0.0, %v2829
    %v2831 = vpop.f32.mrb[0].mxu0
    %2832 = vmatprep.mubr.bf16.mxu0 0
    %2833 = vmatmul.mubr.bf16.gmra.mrb[0].mxu0 %v2709
    %v2834 = vpop.f32.mrb[0].mxu0
    %v2835 = vadd.f32 0.0, %v2834
    %v2836 = vpop.f32.mrb[0].mxu0
    %v2837 = vpop.f32.mrb[0].mxu0
    %v2838 = vadd.f32 0.0, %v2837
    %v2839 = vpop.f32.mrb[0].mxu0
    %2840 = vmatprep.mubr.bf16.mxu0 0
    %2841 = vmatmul.mubr.bf16.gmra.mrb[0].mxu0 %v2710
    %v2842 = vpop.f32.mrb[0].mxu0
    %v2843 = vadd.f32 0.0, %v2842
    %v2844 = vpop.f32.mrb[0].mxu0
    %v2845 = vpop.f32.mrb[0].mxu0
    %v2846 = vadd.f32 0.0, %v2845
    %v2847 = vpop.f32.mrb[0].mxu0
    %2848 = vmatprep.mubr.bf16.mxu0 0
    %2849 = vmatmul.mubr.bf16.gmra.mrb[0].mxu0 %v2711
    %v2850 = vpop.f32.mrb[0].mxu0
    %v2851 = vadd.f32 0.0, %v2850
    %v2852 = vpop.f32.mrb[0].mxu0
    %v2853 = vpop.f32.mrb[0].mxu0
    %v2854 = vadd.f32 0.0, %v2853
    %v2855 = vpop.f32.mrb[0].mxu0
    %2856 = vdwg.mxu0
    %v2857 = vadd.f32 %v2795, %v2798
    %v2858 = vadd.f32 %v2857, %v2803
    %v2859 = vadd.f32 %v2858, %v2806
    %v2860 = vadd.f32 %v2859, %v2811
    %v2861 = vadd.f32 %v2860, %v2814
    %v2862 = vadd.f32 %v2861, %v2819
    %v2863 = vadd.f32 %v2862, %v2822
    %v2864 = vadd.f32 %v2863, %v2827
    %v2865 = vadd.f32 %v2864, %v2830
    %v2866 = vadd.f32 %v2865, %v2835
    %v2867 = vadd.f32 %v2866, %v2838
    %v2868 = vadd.f32 %v2867, %v2843
    %v2869 = vadd.f32 %v2868, %v2846
    %v2870 = vadd.f32 %v2869, %v2851
    %v2871 = vadd.f32 %v2870, %v2854
    %v2872 = vrot.slane %v2871, 4
    %v2873 = vadd.f32 %v2871, %v2872
    %v2874 = vrot.slane %v2873, 2
    %v2875 = vadd.f32 %v2873, %v2874
    %v2876 = vrot.slane %v2875, 1
    %v2877 = vadd.f32 %v2875, %v2876
    %v2878 = vmul.f32 %v2877, %v264
    %v2879 = vmul.f32 %v2795, %v2795
    %v2880 = vmul.f32 %v2798, %v2798
    %v2881 = vmul.f32 %v2803, %v2803
    %v2882 = vmul.f32 %v2806, %v2806
    %v2883 = vmul.f32 %v2811, %v2811
    %v2884 = vmul.f32 %v2814, %v2814
    %v2885 = vmul.f32 %v2819, %v2819
    %v2886 = vmul.f32 %v2822, %v2822
    %v2887 = vmul.f32 %v2827, %v2827
    %v2888 = vmul.f32 %v2830, %v2830
    %v2889 = vmul.f32 %v2835, %v2835
    %v2890 = vmul.f32 %v2838, %v2838
    %v2891 = vmul.f32 %v2843, %v2843
    %v2892 = vmul.f32 %v2846, %v2846
    %v2893 = vmul.f32 %v2851, %v2851
    %v2894 = vmul.f32 %v2854, %v2854
    %v2895 = vadd.f32 %v2879, %v2880
    %v2896 = vadd.f32 %v2895, %v2881
    %v2897 = vadd.f32 %v2896, %v2882
    %v2898 = vadd.f32 %v2897, %v2883
    %v2899 = vadd.f32 %v2898, %v2884
    %v2900 = vadd.f32 %v2899, %v2885
    %v2901 = vadd.f32 %v2900, %v2886
    %v2902 = vadd.f32 %v2901, %v2887
    %v2903 = vadd.f32 %v2902, %v2888
    %v2904 = vadd.f32 %v2903, %v2889
    %v2905 = vadd.f32 %v2904, %v2890
    %v2906 = vadd.f32 %v2905, %v2891
    %v2907 = vadd.f32 %v2906, %v2892
    %v2908 = vadd.f32 %v2907, %v2893
    %v2909 = vadd.f32 %v2908, %v2894
    %v2910 = vrot.slane %v2909, 4
    %v2911 = vadd.f32 %v2909, %v2910
    %v2912 = vrot.slane %v2911, 2
    %v2913 = vadd.f32 %v2911, %v2912
    %v2914 = vrot.slane %v2913, 1
    %v2915 = vadd.f32 %v2913, %v2914
    %v2916 = vmul.f32 %v2915, %v264
    %v2917 = vmul.f32 %v2878, %v2878
    %v2918 = vsub.f32 %v2916, %v2917
    %v2919 = vadd.f32 %v2918, 1e-05
    %v2920 = vrsqrt.pop %v2919
    %v2921 = vmul.f32 %v2703, %v2920
    %v2922 = vmul.f32 %v2878, %v2921
    %v2924 = vrot.slane %v2922, 7
    %v2926 = vsub.f32 %v2703, %v2924
    %v2927 = vlaneseq
    %v2928 = vshrl.u32 %v2927, 7
    %v2929 = vsub.s32 0, %v2928
    %v2930 = vrot.slane %v2921, %v2929
    %v2931 = vmul.f32 %v2795, %v2930
    %v2932 = vmul.f32 %v2798, %v2930
    %v2933 = vmul.f32 %v2803, %v2930
    %v2934 = vmul.f32 %v2806, %v2930
    %v2935 = vmul.f32 %v2811, %v2930
    %v2936 = vmul.f32 %v2814, %v2930
    %v2937 = vmul.f32 %v2819, %v2930
    %v2938 = vmul.f32 %v2822, %v2930
    %v2939 = vmul.f32 %v2827, %v2930
    %v2940 = vmul.f32 %v2830, %v2930
    %v2941 = vmul.f32 %v2835, %v2930
    %v2942 = vmul.f32 %v2838, %v2930
    %v2943 = vmul.f32 %v2843, %v2930
    %v2944 = vmul.f32 %v2846, %v2930
    %v2945 = vmul.f32 %v2851, %v2930
    %v2946 = vmul.f32 %v2854, %v2930
    %v2947 = vlaneseq
    %v2948 = vshrl.u32 %v2947, 7
    %v2949 = vsub.s32 1, %v2948
    %v2950 = vrot.slane %v2926, %v2949
    %v2951 = vadd.f32 %v2931, %v2950
    %v2952 = vadd.f32 %v2932, %v2950
    %v2953 = vadd.f32 %v2933, %v2950
    %v2954 = vadd.f32 %v2934, %v2950
    %v2955 = vadd.f32 %v2935, %v2950
    %v2956 = vadd.f32 %v2936, %v2950
    %v2957 = vadd.f32 %v2937, %v2950
    %v2958 = vadd.f32 %v2938, %v2950
    %v2959 = vadd.f32 %v2939, %v2950
    %v2960 = vadd.f32 %v2940, %v2950
    %v2961 = vadd.f32 %v2941, %v2950
    %v2962 = vadd.f32 %v2942, %v2950
    %v2963 = vadd.f32 %v2943, %v2950
    %v2964 = vadd.f32 %v2944, %v2950
    %v2965 = vadd.f32 %v2945, %v2950
    %v2966 = vadd.f32 %v2946, %v2950
    %v2967 = vmul.f32 %v2951, 0.01
    %v2968 = vmul.f32 %v2952, 0.01
    %v2969 = vmul.f32 %v2953, 0.01
    %v2970 = vmul.f32 %v2954, 0.01
    %v2971 = vmul.f32 %v2955, 0.01
    %v2972 = vmul.f32 %v2956, 0.01
    %v2973 = vmul.f32 %v2957, 0.01
    %v2974 = vmul.f32 %v2958, 0.01
    %v2975 = vmul.f32 %v2959, 0.01
    %v2976 = vmul.f32 %v2960, 0.01
    %v2977 = vmul.f32 %v2961, 0.01
    %v2978 = vmul.f32 %v2962, 0.01
    %v2979 = vmul.f32 %v2963, 0.01
    %v2980 = vmul.f32 %v2964, 0.01
    %v2981 = vmul.f32 %v2965, 0.01
    %v2982 = vmul.f32 %v2966, 0.01
    %v2983 = vmax.f32 %v2951, %v2967
    %v2984 = vmax.f32 %v2952, %v2968
    %v2985 = vmax.f32 %v2953, %v2969
    %v2986 = vmax.f32 %v2954, %v2970
    %v2987 = vmax.f32 %v2955, %v2971
    %v2988 = vmax.f32 %v2956, %v2972
    %v2989 = vmax.f32 %v2957, %v2973
    %v2990 = vmax.f32 %v2958, %v2974
    %v2991 = vmax.f32 %v2959, %v2975
    %v2992 = vmax.f32 %v2960, %v2976
    %v2993 = vmax.f32 %v2961, %v2977
    %v2994 = vmax.f32 %v2962, %v2978
    %v2995 = vmax.f32 %v2963, %v2979
    %v2996 = vmax.f32 %v2964, %v2980
    %v2997 = vmax.f32 %v2965, %v2981
    %v2998 = vmax.f32 %v2966, %v2982
    %s2999 = scalar_lea.vmem [#allocation5], 576
    %v3000 = vld [vmem:[%s2999] sm:$0xf]
    %v3001 = vld [vmem:[%s2999 + $0x4] sm:$0xf]
    %v3002 = vld [vmem:[%s2999 + $0x8] sm:$0xf]
    %v3003 = vld [vmem:[%s2999 + $0xc] sm:$0xf]
    %v3004 = vld [vmem:[%s2999 + $0x10] sm:$0xf]
    %v3005 = vld [vmem:[%s2999 + $0x14] sm:$0xf]
    %v3006 = vld [vmem:[%s2999 + $0x18] sm:$0xf]
    %v3007 = vld [vmem:[%s2999 + $0x1c] sm:$0xf]
    %v3008 = vld [vmem:[%s2999 + $0x20] sm:$0xf]
    %v3009 = vld [vmem:[%s2999 + $0x24] sm:$0xf]
    %v3010 = vld [vmem:[%s2999 + $0x28] sm:$0xf]
    %v3011 = vld [vmem:[%s2999 + $0x2c] sm:$0xf]
    %v3012 = vld [vmem:[%s2999 + $0x30] sm:$0xf]
    %v3013 = vld [vmem:[%s2999 + $0x34] sm:$0xf]
    %v3014 = vld [vmem:[%s2999 + $0x38] sm:$0xf]
    %v3015 = vld [vmem:[%s2999 + $0x3c] sm:$0xf]
    %s3016 = scalar_lea.vmem [#allocation7], 72
    %v3017 = vld [vmem:[%s3016] sm:$0xff]
    %v3018 = vpack.c.bf16 %v2984, %v2983
    %v3019 = vpack.c.bf16 %v2986, %v2985
    %v3020 = vpack.c.bf16 %v2988, %v2987
    %v3021 = vpack.c.bf16 %v2990, %v2989
    %v3022 = vpack.c.bf16 %v2992, %v2991
    %v3023 = vpack.c.bf16 %v2994, %v2993
    %v3024 = vpack.c.bf16 %v2996, %v2995
    %v3025 = vpack.c.bf16 %v2998, %v2997
    %v3042 = vunpack.c.l.b16 %v3000
    %v3043 = vunpack.c.l.b16 %v3001
    %v3044 = vunpack.c.l.b16 %v3002
    %v3045 = vunpack.c.l.b16 %v3003
    %v3046 = vunpack.c.l.b16 %v3004
    %v3047 = vunpack.c.l.b16 %v3005
    %v3048 = vunpack.c.l.b16 %v3006
    %v3049 = vunpack.c.l.b16 %v3007
    %v3050 = vunpack.c.l.b16 %v3008
    %v3051 = vunpack.c.l.b16 %v3009
    %v3052 = vunpack.c.l.b16 %v3010
    %v3053 = vunpack.c.l.b16 %v3011
    %v3054 = vunpack.c.l.b16 %v3012
    %v3055 = vunpack.c.l.b16 %v3013
    %v3056 = vunpack.c.l.b16 %v3014
    %v3057 = vunpack.c.l.b16 %v3015
    %v3058 = vpack.c.b16 %v3043, %v3042
    %v3059 = vpack.c.b16 %v3045, %v3044
    %v3060 = vpack.c.b16 %v3047, %v3046
    %v3061 = vpack.c.b16 %v3049, %v3048
    %v3062 = vpack.c.b16 %v3051, %v3050
    %v3063 = vpack.c.b16 %v3053, %v3052
    %v3064 = vpack.c.b16 %v3055, %v3054
    %v3065 = vpack.c.b16 %v3057, %v3056
    %3074 = vmatprep.subr.bf16.mxu0 0
    %3075 = vmatpush1.bf16.msra.mxu0 %v3058
    %3076 = vmatprep.subr.bf16.mxu0 0
    %3077 = vmatpush1.bf16.msra.mxu0 %v3059
    %3078 = vmatprep.subr.bf16.mxu0 0
    %3079 = vmatpush1.bf16.msra.mxu0 %v3060
    %3080 = vmatprep.subr.bf16.mxu0 0
    %3081 = vmatpush1.bf16.msra.mxu0 %v3061
    %3082 = vmatprep.subr.bf16.mxu0 0
    %3083 = vmatpush1.bf16.msra.mxu0 %v3062
    %3084 = vmatprep.subr.bf16.mxu0 0
    %3085 = vmatpush1.bf16.msra.mxu0 %v3063
    %3086 = vmatprep.subr.bf16.mxu0 0
    %3087 = vmatpush1.bf16.msra.mxu0 %v3064
    %3088 = vmatprep.subr.bf16.mxu0 0
    %3089 = vmatpush1.bf16.msra.mxu0 %v3065
    %3090 = vmatprep.subr.bf16.mxu0 0
    %3091 = vmatpush1.bf16.msra.mxu0 0
    %3092 = vmatprep.subr.bf16.mxu0 0
    %3093 = vmatpush1.bf16.msra.mxu0 0
    %3094 = vmatprep.subr.bf16.mxu0 0
    %3095 = vmatpush1.bf16.msra.mxu0 0
    %3096 = vmatprep.subr.bf16.mxu0 0
    %3097 = vmatpush1.bf16.msra.mxu0 0
    %3098 = vmatprep.subr.bf16.mxu0 0
    %3099 = vmatpush1.bf16.msra.mxu0 0
    %3100 = vmatprep.subr.bf16.mxu0 0
    %3101 = vmatpush1.bf16.msra.mxu0 0
    %3102 = vmatprep.subr.bf16.mxu0 0
    %3103 = vmatpush1.bf16.msra.mxu0 0
    %3104 = vmatprep.subr.bf16.mxu0 0
    %3105 = vmatpush1.bf16.msra.mxu0 0
    %3106 = vmatprep.mubr.bf16.mxu0 0
    %3107 = vmatmul.mubr.bf16.gmra.mrb[0].mxu0 %v3018
    %v3108 = vpop.f32.mrb[0].mxu0
    %v3109 = vadd.f32 0.0, %v3108
    %v3110 = vpop.f32.mrb[0].mxu0
    %v3111 = vpop.f32.mrb[0].mxu0
    %v3112 = vadd.f32 0.0, %v3111
    %v3113 = vpop.f32.mrb[0].mxu0
    %3114 = vmatprep.mubr.bf16.mxu0 0
    %3115 = vmatmul.mubr.bf16.gmra.mrb[0].mxu0 %v3019
    %v3116 = vpop.f32.mrb[0].mxu0
    %v3117 = vadd.f32 0.0, %v3116
    %v3118 = vpop.f32.mrb[0].mxu0
    %v3119 = vpop.f32.mrb[0].mxu0
    %v3120 = vadd.f32 0.0, %v3119
    %v3121 = vpop.f32.mrb[0].mxu0
    %3122 = vmatprep.mubr.bf16.mxu0 0
    %3123 = vmatmul.mubr.bf16.gmra.mrb[0].mxu0 %v3020
    %v3124 = vpop.f32.mrb[0].mxu0
    %v3125 = vadd.f32 0.0, %v3124
    %v3126 = vpop.f32.mrb[0].mxu0
    %v3127 = vpop.f32.mrb[0].mxu0
    %v3128 = vadd.f32 0.0, %v3127
    %v3129 = vpop.f32.mrb[0].mxu0
    %3130 = vmatprep.mubr.bf16.mxu0 0
    %3131 = vmatmul.mubr.bf16.gmra.mrb[0].mxu0 %v3021
    %v3132 = vpop.f32.mrb[0].mxu0
    %v3133 = vadd.f32 0.0, %v3132
    %v3134 = vpop.f32.mrb[0].mxu0
    %v3135 = vpop.f32.mrb[0].mxu0
    %v3136 = vadd.f32 0.0, %v3135
    %v3137 = vpop.f32.mrb[0].mxu0
    %3138 = vmatprep.mubr.bf16.mxu0 0
    %3139 = vmatmul.mubr.bf16.gmra.mrb[0].mxu0 %v3022
    %v3140 = vpop.f32.mrb[0].mxu0
    %v3141 = vadd.f32 0.0, %v3140
    %v3142 = vpop.f32.mrb[0].mxu0
    %v3143 = vpop.f32.mrb[0].mxu0
    %v3144 = vadd.f32 0.0, %v3143
    %v3145 = vpop.f32.mrb[0].mxu0
    %3146 = vmatprep.mubr.bf16.mxu0 0
    %3147 = vmatmul.mubr.bf16.gmra.mrb[0].mxu0 %v3023
    %v3148 = vpop.f32.mrb[0].mxu0
    %v3149 = vadd.f32 0.0, %v3148
    %v3150 = vpop.f32.mrb[0].mxu0
    %v3151 = vpop.f32.mrb[0].mxu0
    %v3152 = vadd.f32 0.0, %v3151
    %v3153 = vpop.f32.mrb[0].mxu0
    %3154 = vmatprep.mubr.bf16.mxu0 0
    %3155 = vmatmul.mubr.bf16.gmra.mrb[0].mxu0 %v3024
    %v3156 = vpop.f32.mrb[0].mxu0
    %v3157 = vadd.f32 0.0, %v3156
    %v3158 = vpop.f32.mrb[0].mxu0
    %v3159 = vpop.f32.mrb[0].mxu0
    %v3160 = vadd.f32 0.0, %v3159
    %v3161 = vpop.f32.mrb[0].mxu0
    %3162 = vmatprep.mubr.bf16.mxu0 0
    %3163 = vmatmul.mubr.bf16.gmra.mrb[0].mxu0 %v3025
    %v3164 = vpop.f32.mrb[0].mxu0
    %v3165 = vadd.f32 0.0, %v3164
    %v3166 = vpop.f32.mrb[0].mxu0
    %v3167 = vpop.f32.mrb[0].mxu0
    %v3168 = vadd.f32 0.0, %v3167
    %v3169 = vpop.f32.mrb[0].mxu0
    %3170 = vdwg.mxu0
    %v3171 = vadd.f32 %v3109, %v3112
    %v3172 = vadd.f32 %v3171, %v3117
    %v3173 = vadd.f32 %v3172, %v3120
    %v3174 = vadd.f32 %v3173, %v3125
    %v3175 = vadd.f32 %v3174, %v3128
    %v3176 = vadd.f32 %v3175, %v3133
    %v3177 = vadd.f32 %v3176, %v3136
    %v3178 = vadd.f32 %v3177, %v3141
    %v3179 = vadd.f32 %v3178, %v3144
    %v3180 = vadd.f32 %v3179, %v3149
    %v3181 = vadd.f32 %v3180, %v3152
    %v3182 = vadd.f32 %v3181, %v3157
    %v3183 = vadd.f32 %v3182, %v3160
    %v3184 = vadd.f32 %v3183, %v3165
    %v3185 = vadd.f32 %v3184, %v3168
    %v3186 = vrot.slane %v3185, 4
    %v3187 = vadd.f32 %v3185, %v3186
    %v3188 = vrot.slane %v3187, 2
    %v3189 = vadd.f32 %v3187, %v3188
    %v3190 = vrot.slane %v3189, 1
    %v3191 = vadd.f32 %v3189, %v3190
    %v3192 = vmul.f32 %v3191, %v264
    %v3193 = vmul.f32 %v3109, %v3109
    %v3194 = vmul.f32 %v3112, %v3112
    %v3195 = vmul.f32 %v3117, %v3117
    %v3196 = vmul.f32 %v3120, %v3120
    %v3197 = vmul.f32 %v3125, %v3125
    %v3198 = vmul.f32 %v3128, %v3128
    %v3199 = vmul.f32 %v3133, %v3133
    %v3200 = vmul.f32 %v3136, %v3136
    %v3201 = vmul.f32 %v3141, %v3141
    %v3202 = vmul.f32 %v3144, %v3144
    %v3203 = vmul.f32 %v3149, %v3149
    %v3204 = vmul.f32 %v3152, %v3152
    %v3205 = vmul.f32 %v3157, %v3157
    %v3206 = vmul.f32 %v3160, %v3160
    %v3207 = vmul.f32 %v3165, %v3165
    %v3208 = vmul.f32 %v3168, %v3168
    %v3209 = vadd.f32 %v3193, %v3194
    %v3210 = vadd.f32 %v3209, %v3195
    %v3211 = vadd.f32 %v3210, %v3196
    %v3212 = vadd.f32 %v3211, %v3197
    %v3213 = vadd.f32 %v3212, %v3198
    %v3214 = vadd.f32 %v3213, %v3199
    %v3215 = vadd.f32 %v3214, %v3200
    %v3216 = vadd.f32 %v3215, %v3201
    %v3217 = vadd.f32 %v3216, %v3202
    %v3218 = vadd.f32 %v3217, %v3203
    %v3219 = vadd.f32 %v3218, %v3204
    %v3220 = vadd.f32 %v3219, %v3205
    %v3221 = vadd.f32 %v3220, %v3206
    %v3222 = vadd.f32 %v3221, %v3207
    %v3223 = vadd.f32 %v3222, %v3208
    %v3224 = vrot.slane %v3223, 4
    %v3225 = vadd.f32 %v3223, %v3224
    %v3226 = vrot.slane %v3225, 2
    %v3227 = vadd.f32 %v3225, %v3226
    %v3228 = vrot.slane %v3227, 1
    %v3229 = vadd.f32 %v3227, %v3228
    %v3230 = vmul.f32 %v3229, %v264
    %v3231 = vmul.f32 %v3192, %v3192
    %v3232 = vsub.f32 %v3230, %v3231
    %v3233 = vadd.f32 %v3232, 1e-05
    %v3234 = vrsqrt.pop %v3233
    %v3235 = vmul.f32 %v3017, %v3234
    %v3236 = vmul.f32 %v3192, %v3235
    %v3238 = vrot.slane %v3236, 7
    %v3240 = vsub.f32 %v3017, %v3238
    %v3241 = vlaneseq
    %v3242 = vshrl.u32 %v3241, 7
    %v3243 = vsub.s32 0, %v3242
    %v3244 = vrot.slane %v3235, %v3243
    %v3245 = vmul.f32 %v3109, %v3244
    %v3246 = vmul.f32 %v3112, %v3244
    %v3247 = vmul.f32 %v3117, %v3244
    %v3248 = vmul.f32 %v3120, %v3244
    %v3249 = vmul.f32 %v3125, %v3244
    %v3250 = vmul.f32 %v3128, %v3244
    %v3251 = vmul.f32 %v3133, %v3244
    %v3252 = vmul.f32 %v3136, %v3244
    %v3253 = vmul.f32 %v3141, %v3244
    %v3254 = vmul.f32 %v3144, %v3244
    %v3255 = vmul.f32 %v3149, %v3244
    %v3256 = vmul.f32 %v3152, %v3244
    %v3257 = vmul.f32 %v3157, %v3244
    %v3258 = vmul.f32 %v3160, %v3244
    %v3259 = vmul.f32 %v3165, %v3244
    %v3260 = vmul.f32 %v3168, %v3244
    %v3261 = vlaneseq
    %v3262 = vshrl.u32 %v3261, 7
    %v3263 = vsub.s32 1, %v3262
    %v3264 = vrot.slane %v3240, %v3263
    %v3265 = vadd.f32 %v3245, %v3264
    %v3266 = vadd.f32 %v3246, %v3264
    %v3267 = vadd.f32 %v3247, %v3264
    %v3268 = vadd.f32 %v3248, %v3264
    %v3269 = vadd.f32 %v3249, %v3264
    %v3270 = vadd.f32 %v3250, %v3264
    %v3271 = vadd.f32 %v3251, %v3264
    %v3272 = vadd.f32 %v3252, %v3264
    %v3273 = vadd.f32 %v3253, %v3264
    %v3274 = vadd.f32 %v3254, %v3264
    %v3275 = vadd.f32 %v3255, %v3264
    %v3276 = vadd.f32 %v3256, %v3264
    %v3277 = vadd.f32 %v3257, %v3264
    %v3278 = vadd.f32 %v3258, %v3264
    %v3279 = vadd.f32 %v3259, %v3264
    %v3280 = vadd.f32 %v3260, %v3264
    %v3281 = vtanh.pop %v3265
    %v3282 = vtanh.pop %v3266
    %v3283 = vtanh.pop %v3267
    %v3284 = vtanh.pop %v3268
    %v3285 = vtanh.pop %v3269
    %v3286 = vtanh.pop %v3270
    %v3287 = vtanh.pop %v3271
    %v3288 = vtanh.pop %v3272
    %v3289 = vtanh.pop %v3273
    %v3290 = vtanh.pop %v3274
    %v3291 = vtanh.pop %v3275
    %v3292 = vtanh.pop %v3276
    %v3293 = vtanh.pop %v3277
    %v3294 = vtanh.pop %v3278
    %v3295 = vtanh.pop %v3279
    %v3296 = vtanh.pop %v3280
    %3297 = vst [vmem:[#allocation8] sm:$0xff] %v3281
    %3298 = vst [vmem:[#allocation8 + $0x8] sm:$0xff] %v3282
    %3299 = vst [vmem:[#allocation8 + $0x10] sm:$0xff] %v3283
    %3300 = vst [vmem:[#allocation8 + $0x18] sm:$0xff] %v3284
    %3301 = vst [vmem:[#allocation8 + $0x20] sm:$0xff] %v3285
    %3302 = vst [vmem:[#allocation8 + $0x28] sm:$0xff] %v3286
    %3303 = vst [vmem:[#allocation8 + $0x30] sm:$0xff] %v3287
    %3304 = vst [vmem:[#allocation8 + $0x38] sm:$0xff] %v3288
    %3305 = vst [vmem:[#allocation8 + $0x40] sm:$0xff] %v3289
    %3306 = vst [vmem:[#allocation8 + $0x48] sm:$0xff] %v3290
    %3307 = vst [vmem:[#allocation8 + $0x50] sm:$0xff] %v3291
    %3308 = vst [vmem:[#allocation8 + $0x58] sm:$0xff] %v3292
    %3309 = vst [vmem:[#allocation8 + $0x60] sm:$0xff] %v3293
    %3310 = vst [vmem:[#allocation8 + $0x68] sm:$0xff] %v3294
    %3311 = vst [vmem:[#allocation8 + $0x70] sm:$0xff] %v3295
    %3312 = vst [vmem:[#allocation8 + $0x78] sm:$0xff] %v3296
    // Predicated region
    $region26: #{tpu_custom_call.1} parent=1 // pred_check
      _
    $region27: #{tpu_custom_call.1} parent=1 // pred_check_branch
      %3314 = sbr.rel (0) target = $region29
    $region28: #{tpu_custom_call.1} parent=1 // pred_region
      %s3316 = ssub.s32 2048, 2048
      %3317 = vsyncadd [#allocation4], %s3316
      %s3318 = sshll.u32 [#allocation8], 4
      %s3319 = int_to_ptr.vmem [resolvable:$true] %s3318
      %3324 = dma.vmem_to_hbm [thread:$0]  %s3319, 2048, %s3, [#allocation4], 128, 128, 8
    $region29: #{tpu_custom_call.1} parent=1 // pred_fallthru
      _
    // Predicated region
    $region30: #{tpu_custom_call.1} parent=1 // pred_check
      _
    $region31: #{tpu_custom_call.1} parent=1 // pred_check_branch
      %3326 = sbr.rel (0) target = $region33
    $region32: #{tpu_custom_call.1} parent=1 // pred_region
      %3327 = dma.done [#allocation4], 2048
    $region33: #{tpu_custom_call.1} parent=1 // pred_fallthru
      _
    %3328 = vsyncpa [#allocation3], 1
    %3329 = vsyncpa [#allocation6], 1
    %3330 = vsyncpa [#allocation4], 1

</llo_original>
